<compile_context>
chip_gen: v6e
topology: v6e:2x2x1
jax: 0.10.0
libtpu: 0.0.40
codegen_flags: <defaults>
</compile_context>

<pallas_src>
import functools
import math

import jax
import jax.numpy as jnp
from jax.experimental import pallas as pl
from jax.experimental.pallas import tpu as pltpu


def _pick_q_tile(n):
    """Largest convenient q-tile that divides n (MXU-friendly when possible)."""
    for t in (256, 128, 64, 32, 16, 8):
        if n >= t and n % t == 0:
            return t
    return n


def _mha_kernel(x_ref, wqkv_ref, wc_ref, o_ref,
                q_sc, kt_sc, v_sc, oc_sc, *, H, k, d, tq):
    # x_ref:    (1, n, d)   full sequence for this batch element
    # wqkv_ref: (d, 3d)     fused [Wq^T*scale | Wk^T | Wv^T]
    # wc_ref:   (d, d)      Wc^T
    # o_ref:    (1, tq, d)  output tile
    # q_sc:     (H, n, k)   per-head Q (scale already folded in)
    # kt_sc:    (H, k, n)   per-head K^T (materialized once per batch)
    # v_sc:     (H, n, k)   per-head V
    # oc_sc:    (tq, d)     head-concat buffer for the output projection
    qi = pl.program_id(1)

    # ---- once per batch element: project QKV, lay out head-leading scratches.
    @pl.when(qi == 0)
    def _():
        x = x_ref[0]                                                    # (n, d)
        # Three output-width-d matmuls keep the live f32 intermediate at
        # (n, d) instead of (n, 3d).
        q = jnp.dot(x, wqkv_ref[:, 0:d], preferred_element_type=jnp.float32)
        kp = jnp.dot(x, wqkv_ref[:, d:2 * d], preferred_element_type=jnp.float32)
        v = jnp.dot(x, wqkv_ref[:, 2 * d:3 * d], preferred_element_type=jnp.float32)
        for h in range(H):
            lo = h * k
            q_sc[h] = q[:, lo:lo + k].astype(q_sc.dtype)
            # K^T once per batch -> per-q-tile scores are plain (M,K)@(K,N),
            # no repeated XLU transpose in the inner loop.
            kt_sc[h] = kp[:, lo:lo + k].T.astype(kt_sc.dtype)
            v_sc[h] = v[:, lo:lo + k].astype(v_sc.dtype)

    row = pl.multiple_of(qi * tq, tq)

    # ---- per-head attention; o_h goes to its lane offset in the concat
    # scratch (no carried accumulator -> flat vreg pressure in H).
    # TODO(synk): switch to lax.fori_loop over heads for H >= 8.
    for h in range(H):
        qh = q_sc[h, pl.ds(row, tq), :]                                 # (tq, k)
        s = jnp.dot(qh, kt_sc[h], preferred_element_type=jnp.float32)   # (tq, n)
        s = s - jnp.max(s, axis=-1, keepdims=True)
        # TODO(synk): on v6e/v7x with small head dims the EUP (exp) is the
        # binding unit; a bf16 exp roughly doubles its throughput. Kept f32
        # here for portability (v5e EUP has no bf16 path).
        p = jnp.exp(s)
        inv_l = pl.reciprocal(jnp.sum(p, axis=-1, keepdims=True), approx=True)
        o_h = jnp.dot(p.astype(v_sc.dtype), v_sc[h],
                      preferred_element_type=jnp.float32) * inv_l        # (tq, k)
        oc_sc[:, h * k:(h + 1) * k] = o_h.astype(oc_sc.dtype)

    # ---- single d-deep output projection: one full-depth MXU matmul and one
    # lane-dense (tq, d) store.
    o_ref[0] = jnp.dot(oc_sc[...], wc_ref[...],
                       preferred_element_type=jnp.float32).astype(o_ref.dtype)


def prepare_params(wq, wk, wv, wc, H):
    """One-time weight prep: transpose, fuse Q/K/V, fold 1/sqrt(k) into Q."""
    d = wq.shape[0]
    k = d // H
    scale = 1.0 / math.sqrt(k)
    wqkv = jnp.concatenate([wq.T * scale, wk.T, wv.T], axis=1)           # (d, 3d)
    return wqkv, wc.T


def multi_head_attention(x, wqkv, wc_t, H):
    """x: (N, n, d); wqkv: (d, 3d) fused pre-transposed; wc_t: (d, d)."""
    N, n, d = x.shape
    k = d // H
    assert k * H == d, "d must be divisible by H"
    assert wqkv.shape == (d, 3 * d) and wc_t.shape == (d, d)

    tq = _pick_q_tile(n)
    n_q = n // tq
    dt = x.dtype
    itemsize = jnp.dtype(dt).itemsize

    kernel = functools.partial(_mha_kernel, H=H, k=k, d=d, tq=tq)

    scratch_shapes = [
        pltpu.VMEM((H, n, k), dt),      # Q  (head-leading)
        pltpu.VMEM((H, k, n), dt),      # K^T (head-leading)
        pltpu.VMEM((H, n, k), dt),      # V  (head-leading)
        pltpu.VMEM((tq, d), dt),        # head-concat buffer
    ]

    # Explicit VMEM budget: single-buffered x + weights, scratches, the
    # double-buffered output tile, plus slack for f32 score intermediates.
    est_vmem = itemsize * (n * d + 4 * d * d + 3 * n * d + 3 * tq * d) \
        + 4 * (2 * tq * n + n * d)
    vmem_limit = int(min(64 * 1024 * 1024, max(4 * 1024 * 1024, 2 * est_vmem)))

    cost = pl.CostEstimate(
        flops=int(N * (8 * n * d * d + 4 * n * n * d)),
        transcendentals=int(N * H * n * n),
        bytes_accessed=int((2 * N * n * d + 4 * d * d) * itemsize),
    )

    out_shape = jax.ShapeDtypeStruct((N, n, d), dt)
    out_spec = pl.BlockSpec((1, tq, d), lambda b, qi: (b, qi, 0))
    cparams = pltpu.CompilerParams(
        dimension_semantics=("parallel", "arbitrary"),
        vmem_limit_bytes=vmem_limit,
    )

    def build(single_buffer):
        if single_buffer:
            # Constant-index operands: single-buffer them (they are fetched
            # once; default double-buffering just wastes VMEM).
            in_specs = [
                pl.BlockSpec((1, n, d), lambda b, qi: (b, 0, 0),
                             pipeline_mode=pl.Buffered(1)),
                pl.BlockSpec((d, 3 * d), lambda b, qi: (0, 0),
                             pipeline_mode=pl.Buffered(1)),
                pl.BlockSpec((d, d), lambda b, qi: (0, 0),
                             pipeline_mode=pl.Buffered(1)),
            ]
        else:
            in_specs = [
                pl.BlockSpec((1, n, d), lambda b, qi: (b, 0, 0)),
                pl.BlockSpec((d, 3 * d), lambda b, qi: (0, 0)),
                pl.BlockSpec((d, d), lambda b, qi: (0, 0)),
            ]
        return pl.pallas_call(
            kernel,
            out_shape=out_shape,
            grid_spec=pltpu.PrefetchScalarGridSpec(
                num_scalar_prefetch=0,
                grid=(N, n_q),
                in_specs=in_specs,
                out_specs=out_spec,
                scratch_shapes=scratch_shapes,
            ),
            compiler_params=cparams,
            cost_estimate=cost,
        )

    try:
        return build(True)(x, wqkv, wc_t)
    except Exception:
        # Fallback if this jax build rejects pipeline_mode=pl.Buffered(1);
        # identical semantics, default double-buffering.
        return build(False)(x, wqkv, wc_t)


def _reference(x, wq, wk, wv, wc, H):
    """Pure-JAX reference mirroring the PyTorch forward."""
    N, n, d = x.shape
    k = d // H
    Q = (x @ wq.T).reshape(N, n, H, k).transpose(0, 2, 1, 3)
    K = (x @ wk.T).reshape(N, n, H, k).transpose(0, 2, 1, 3)
    V = (x @ wv.T).reshape(N, n, H, k).transpose(0, 2, 1, 3)
    scores = jnp.einsum("nhql,nhkl->nhqk", Q, K) / math.sqrt(k)
    attn = jax.nn.softmax(scores, axis=-1)
    out = jnp.einsum("nhql,nhlv->nhqv", attn, V)
    out = out.transpose(0, 2, 1, 3).reshape(N, n, d)
    return out @ wc.T


if __name__ == "__main__":
    # Small shapes consistent with the module: batch=2, seq=8, d=32, H=4.
    N, n, d, H = 2, 8, 32, 4

    key = jax.random.PRNGKey(0)
    kx, kq, kk, kv, kc = jax.random.split(key, 5)
    x = jax.random.normal(kx, (N, n, d), dtype=jnp.float32)
    scale = 1.0 / math.sqrt(d)
    wq = jax.random.uniform(kq, (d, d), jnp.float32, -scale, scale)
    wk = jax.random.uniform(kk, (d, d), jnp.float32, -scale, scale)
    wv = jax.random.uniform(kv, (d, d), jnp.float32, -scale, scale)
    wc = jax.random.uniform(kc, (d, d), jnp.float32, -scale, scale)

    # One-time weight fusion/transposition (outside the per-call path).
    wqkv, wc_t = prepare_params(wq, wk, wv, wc, H)
    ref = _reference(x, wq, wk, wv, wc, H)

    # f32 path (correctness check; tolerance accounts for the EUP approximate
    # reciprocal in the softmax denominator).
    out = jax.block_until_ready(multi_head_attention(x, wqkv, wc_t, H))
    assert out.shape == (N, n, d)
    assert jnp.allclose(out, ref, atol=5e-3, rtol=5e-3), "f32 mismatch vs reference"

    # bf16 path (native MXU-input fast path on v6e/v7x; softmax stats stay f32).
    out_bf = jax.block_until_ready(
        multi_head_attention(x.astype(jnp.bfloat16),
                             wqkv.astype(jnp.bfloat16),
                             wc_t.astype(jnp.bfloat16), H))
    assert out_bf.shape == (N, n, d)
    assert bool(jnp.all(jnp.isfinite(out_bf.astype(jnp.float32))))
    assert jnp.allclose(out_bf.astype(jnp.float32), ref, atol=1e-1, rtol=1e-1), \
        "bf16 mismatch vs reference"

    print("KERNEL_OK")
</pallas_src>

<mosaic_0001>
module attributes {stable_mosaic.version = 11 : i64} {
  func.func @_mha_kernel(%arg0: i32, %arg1: i32, %arg2: memref<1x8x32xf32, #tpu.memory_space<vmem>>, %arg3: memref<32x96xf32, #tpu.memory_space<vmem>>, %arg4: memref<32x32xf32, #tpu.memory_space<vmem>>, %arg5: memref<1x8x32xf32, #tpu.memory_space<vmem>>, %arg6: memref<4x8x8xf32, #tpu.memory_space<vmem>>, %arg7: memref<4x8x8xf32, #tpu.memory_space<vmem>>, %arg8: memref<4x8x8xf32, #tpu.memory_space<vmem>>, %arg9: memref<8x32xf32, #tpu.memory_space<vmem>>) attributes {dimension_semantics = [#tpu.dimension_semantics<parallel>, #tpu.dimension_semantics<arbitrary>], iteration_bounds = array<i64: 2, 1>, scalar_prefetch = 0 : i64, scratch_operands = 4 : i64, tpu.core_type = #tpu.core_type<tc>, window_params = [{pipeline_mode = #tpu.pipeline_mode<synchronous>, transform_indices = @transform_0, window_bounds = array<i64: 1, 8, 32>}, {pipeline_mode = #tpu.pipeline_mode<synchronous>, transform_indices = @transform_1, window_bounds = array<i64: 32, 96>}, {pipeline_mode = #tpu.pipeline_mode<synchronous>, transform_indices = @transform_2, window_bounds = array<i64: 32, 32>}, {transform_indices = @transform_3, window_bounds = array<i64: 1, 8, 32>}]} {
    %c0_i32 = arith.constant 0 : i32
    %0 = arith.cmpi eq, %arg1, %c0_i32 : i32
    %1 = arith.extui %0 : i1 to i32
    %c0_i32_0 = arith.constant 0 : i32
    %2 = arith.cmpi ne, %1, %c0_i32_0 : i32
    scf.if %2 {
      %c0_57 = arith.constant 0 : index
      %c0_58 = arith.constant 0 : index
      %c0_59 = arith.constant 0 : index
      %91 = vector.load %arg2[%c0_57, %c0_58, %c0_59] : memref<1x8x32xf32, #tpu.memory_space<vmem>>, vector<1x8x32xf32>
      %92 = vector.shape_cast %91 : vector<1x8x32xf32> to vector<8x32xf32>
      %c0_60 = arith.constant 0 : index
      %c0_61 = arith.constant 0 : index
      %93 = vector.load %arg3[%c0_60, %c0_61] : memref<32x96xf32, #tpu.memory_space<vmem>>, vector<32x32xf32>
      %cst_62 = arith.constant dense<0.000000e+00> : vector<8x32xf32>
      %94 = tpu.matmul %92, %93, %cst_62 {dimension_numbers = #tpu.dot_dimension_numbers<[1], [0], [0], [1], [0, 0, 1, 1], [], []>} : vector<8x32xf32>, vector<32x32xf32>, vector<8x32xf32> -> vector<8x32xf32>
      %c0_63 = arith.constant 0 : index
      %c32 = arith.constant 32 : index
      %95 = vector.load %arg3[%c0_63, %c32] : memref<32x96xf32, #tpu.memory_space<vmem>>, vector<32x32xf32>
      %cst_64 = arith.constant dense<0.000000e+00> : vector<8x32xf32>
      %96 = tpu.matmul %92, %95, %cst_64 {dimension_numbers = #tpu.dot_dimension_numbers<[1], [0], [0], [1], [0, 0, 1, 1], [], []>} : vector<8x32xf32>, vector<32x32xf32>, vector<8x32xf32> -> vector<8x32xf32>
      %c0_65 = arith.constant 0 : index
      %c64 = arith.constant 64 : index
      %97 = vector.load %arg3[%c0_65, %c64] : memref<32x96xf32, #tpu.memory_space<vmem>>, vector<32x32xf32>
      %cst_66 = arith.constant dense<0.000000e+00> : vector<8x32xf32>
      %98 = tpu.matmul %92, %97, %cst_66 {dimension_numbers = #tpu.dot_dimension_numbers<[1], [0], [0], [1], [0, 0, 1, 1], [], []>} : vector<8x32xf32>, vector<32x32xf32>, vector<8x32xf32> -> vector<8x32xf32>
      %99 = vector.extract_strided_slice %94 {offsets = [0, 0], sizes = [8, 8], strides = [1, 1]} : vector<8x32xf32> to vector<8x8xf32>
      %c0_67 = arith.constant 0 : index
      %c0_68 = arith.constant 0 : index
      %c0_69 = arith.constant 0 : index
      %100 = vector.load %arg6[%c0_67, %c0_68, %c0_69] : memref<4x8x8xf32, #tpu.memory_space<vmem>>, vector<1x8x8xf32>
      %101 = vector.shape_cast %100 : vector<1x8x8xf32> to vector<8x8xf32>
      %102 = vector.shape_cast %99 : vector<8x8xf32> to vector<1x8x8xf32>
      tpu.vector_store %arg6[%c0_67, %c0_68, %c0_69], %102 {strides = array<i32>} : memref<4x8x8xf32, #tpu.memory_space<vmem>>, vector<1x8x8xf32>,
      %103 = vector.extract_strided_slice %96 {offsets = [0, 0], sizes = [8, 8], strides = [1, 1]} : vector<8x32xf32> to vector<8x8xf32>
      %104 = tpu.transpose %103, [1, 0] : vector<8x8xf32> -> vector<8x8xf32>
      %c0_70 = arith.constant 0 : index
      %c0_71 = arith.constant 0 : index
      %c0_72 = arith.constant 0 : index
      %105 = vector.load %arg7[%c0_70, %c0_71, %c0_72] : memref<4x8x8xf32, #tpu.memory_space<vmem>>, vector<1x8x8xf32>
      %106 = vector.shape_cast %105 : vector<1x8x8xf32> to vector<8x8xf32>
      %107 = vector.shape_cast %104 : vector<8x8xf32> to vector<1x8x8xf32>
      tpu.vector_store %arg7[%c0_70, %c0_71, %c0_72], %107 {strides = array<i32>} : memref<4x8x8xf32, #tpu.memory_space<vmem>>, vector<1x8x8xf32>,
      %108 = vector.extract_strided_slice %98 {offsets = [0, 0], sizes = [8, 8], strides = [1, 1]} : vector<8x32xf32> to vector<8x8xf32>
      %c0_73 = arith.constant 0 : index
      %c0_74 = arith.constant 0 : index
      %c0_75 = arith.constant 0 : index
      %109 = vector.load %arg8[%c0_73, %c0_74, %c0_75] : memref<4x8x8xf32, #tpu.memory_space<vmem>>, vector<1x8x8xf32>
      %110 = vector.shape_cast %109 : vector<1x8x8xf32> to vector<8x8xf32>
      %111 = vector.shape_cast %108 : vector<8x8xf32> to vector<1x8x8xf32>
      tpu.vector_store %arg8[%c0_73, %c0_74, %c0_75], %111 {strides = array<i32>} : memref<4x8x8xf32, #tpu.memory_space<vmem>>, vector<1x8x8xf32>,
      %112 = vector.extract_strided_slice %94 {offsets = [0, 8], sizes = [8, 8], strides = [1, 1]} : vector<8x32xf32> to vector<8x8xf32>
      %c1_76 = arith.constant 1 : index
      %c0_77 = arith.constant 0 : index
      %c0_78 = arith.constant 0 : index
      %113 = vector.load %arg6[%c1_76, %c0_77, %c0_78] : memref<4x8x8xf32, #tpu.memory_space<vmem>>, vector<1x8x8xf32>
      %114 = vector.shape_cast %113 : vector<1x8x8xf32> to vector<8x8xf32>
      %115 = vector.shape_cast %112 : vector<8x8xf32> to vector<1x8x8xf32>
      tpu.vector_store %arg6[%c1_76, %c0_77, %c0_78], %115 {strides = array<i32>} : memref<4x8x8xf32, #tpu.memory_space<vmem>>, vector<1x8x8xf32>,
      %116 = vector.extract_strided_slice %96 {offsets = [0, 8], sizes = [8, 8], strides = [1, 1]} : vector<8x32xf32> to vector<8x8xf32>
      %117 = tpu.transpose %116, [1, 0] : vector<8x8xf32> -> vector<8x8xf32>
      %c1_79 = arith.constant 1 : index
      %c0_80 = arith.constant 0 : index
      %c0_81 = arith.constant 0 : index
      %118 = vector.load %arg7[%c1_79, %c0_80, %c0_81] : memref<4x8x8xf32, #tpu.memory_space<vmem>>, vector<1x8x8xf32>
      %119 = vector.shape_cast %118 : vector<1x8x8xf32> to vector<8x8xf32>
      %120 = vector.shape_cast %117 : vector<8x8xf32> to vector<1x8x8xf32>
      tpu.vector_store %arg7[%c1_79, %c0_80, %c0_81], %120 {strides = array<i32>} : memref<4x8x8xf32, #tpu.memory_space<vmem>>, vector<1x8x8xf32>,
      %121 = vector.extract_strided_slice %98 {offsets = [0, 8], sizes = [8, 8], strides = [1, 1]} : vector<8x32xf32> to vector<8x8xf32>
      %c1_82 = arith.constant 1 : index
      %c0_83 = arith.constant 0 : index
      %c0_84 = arith.constant 0 : index
      %122 = vector.load %arg8[%c1_82, %c0_83, %c0_84] : memref<4x8x8xf32, #tpu.memory_space<vmem>>, vector<1x8x8xf32>
      %123 = vector.shape_cast %122 : vector<1x8x8xf32> to vector<8x8xf32>
      %124 = vector.shape_cast %121 : vector<8x8xf32> to vector<1x8x8xf32>
      tpu.vector_store %arg8[%c1_82, %c0_83, %c0_84], %124 {strides = array<i32>} : memref<4x8x8xf32, #tpu.memory_space<vmem>>, vector<1x8x8xf32>,
      %125 = vector.extract_strided_slice %94 {offsets = [0, 16], sizes = [8, 8], strides = [1, 1]} : vector<8x32xf32> to vector<8x8xf32>
      %c2_85 = arith.constant 2 : index
      %c0_86 = arith.constant 0 : index
      %c0_87 = arith.constant 0 : index
      %126 = vector.load %arg6[%c2_85, %c0_86, %c0_87] : memref<4x8x8xf32, #tpu.memory_space<vmem>>, vector<1x8x8xf32>
      %127 = vector.shape_cast %126 : vector<1x8x8xf32> to vector<8x8xf32>
      %128 = vector.shape_cast %125 : vector<8x8xf32> to vector<1x8x8xf32>
      tpu.vector_store %arg6[%c2_85, %c0_86, %c0_87], %128 {strides = array<i32>} : memref<4x8x8xf32, #tpu.memory_space<vmem>>, vector<1x8x8xf32>,
      %129 = vector.extract_strided_slice %96 {offsets = [0, 16], sizes = [8, 8], strides = [1, 1]} : vector<8x32xf32> to vector<8x8xf32>
      %130 = tpu.transpose %129, [1, 0] : vector<8x8xf32> -> vector<8x8xf32>
      %c2_88 = arith.constant 2 : index
      %c0_89 = arith.constant 0 : index
      %c0_90 = arith.constant 0 : index
      %131 = vector.load %arg7[%c2_88, %c0_89, %c0_90] : memref<4x8x8xf32, #tpu.memory_space<vmem>>, vector<1x8x8xf32>
      %132 = vector.shape_cast %131 : vector<1x8x8xf32> to vector<8x8xf32>
      %133 = vector.shape_cast %130 : vector<8x8xf32> to vector<1x8x8xf32>
      tpu.vector_store %arg7[%c2_88, %c0_89, %c0_90], %133 {strides = array<i32>} : memref<4x8x8xf32, #tpu.memory_space<vmem>>, vector<1x8x8xf32>,
      %134 = vector.extract_strided_slice %98 {offsets = [0, 16], sizes = [8, 8], strides = [1, 1]} : vector<8x32xf32> to vector<8x8xf32>
      %c2_91 = arith.constant 2 : index
      %c0_92 = arith.constant 0 : index
      %c0_93 = arith.constant 0 : index
      %135 = vector.load %arg8[%c2_91, %c0_92, %c0_93] : memref<4x8x8xf32, #tpu.memory_space<vmem>>, vector<1x8x8xf32>
      %136 = vector.shape_cast %135 : vector<1x8x8xf32> to vector<8x8xf32>
      %137 = vector.shape_cast %134 : vector<8x8xf32> to vector<1x8x8xf32>
      tpu.vector_store %arg8[%c2_91, %c0_92, %c0_93], %137 {strides = array<i32>} : memref<4x8x8xf32, #tpu.memory_space<vmem>>, vector<1x8x8xf32>,
      %138 = vector.extract_strided_slice %94 {offsets = [0, 24], sizes = [8, 8], strides = [1, 1]} : vector<8x32xf32> to vector<8x8xf32>
      %c3_94 = arith.constant 3 : index
      %c0_95 = arith.constant 0 : index
      %c0_96 = arith.constant 0 : index
      %139 = vector.load %arg6[%c3_94, %c0_95, %c0_96] : memref<4x8x8xf32, #tpu.memory_space<vmem>>, vector<1x8x8xf32>
      %140 = vector.shape_cast %139 : vector<1x8x8xf32> to vector<8x8xf32>
      %141 = vector.shape_cast %138 : vector<8x8xf32> to vector<1x8x8xf32>
      tpu.vector_store %arg6[%c3_94, %c0_95, %c0_96], %141 {strides = array<i32>} : memref<4x8x8xf32, #tpu.memory_space<vmem>>, vector<1x8x8xf32>,
      %142 = vector.extract_strided_slice %96 {offsets = [0, 24], sizes = [8, 8], strides = [1, 1]} : vector<8x32xf32> to vector<8x8xf32>
      %143 = tpu.transpose %142, [1, 0] : vector<8x8xf32> -> vector<8x8xf32>
      %c3_97 = arith.constant 3 : index
      %c0_98 = arith.constant 0 : index
      %c0_99 = arith.constant 0 : index
      %144 = vector.load %arg7[%c3_97, %c0_98, %c0_99] : memref<4x8x8xf32, #tpu.memory_space<vmem>>, vector<1x8x8xf32>
      %145 = vector.shape_cast %144 : vector<1x8x8xf32> to vector<8x8xf32>
      %146 = vector.shape_cast %143 : vector<8x8xf32> to vector<1x8x8xf32>
      tpu.vector_store %arg7[%c3_97, %c0_98, %c0_99], %146 {strides = array<i32>} : memref<4x8x8xf32, #tpu.memory_space<vmem>>, vector<1x8x8xf32>,
      %147 = vector.extract_strided_slice %98 {offsets = [0, 24], sizes = [8, 8], strides = [1, 1]} : vector<8x32xf32> to vector<8x8xf32>
      %c3_100 = arith.constant 3 : index
      %c0_101 = arith.constant 0 : index
      %c0_102 = arith.constant 0 : index
      %148 = vector.load %arg8[%c3_100, %c0_101, %c0_102] : memref<4x8x8xf32, #tpu.memory_space<vmem>>, vector<1x8x8xf32>
      %149 = vector.shape_cast %148 : vector<1x8x8xf32> to vector<8x8xf32>
      %150 = vector.shape_cast %147 : vector<8x8xf32> to vector<1x8x8xf32>
      tpu.vector_store %arg8[%c3_100, %c0_101, %c0_102], %150 {strides = array<i32>} : memref<4x8x8xf32, #tpu.memory_space<vmem>>, vector<1x8x8xf32>,
    } else {
    }
    %c8_i32 = arith.constant 8 : i32
    %3 = arith.muli %arg1, %c8_i32 : i32
    %4 = tpu.assume_multiple %3, 8 : i32
    %c0 = arith.constant 0 : index
    %5 = arith.index_cast %4 : i32 to index
    %c0_1 = arith.constant 0 : index
    %6 = vector.load %arg6[%c0, %5, %c0_1] : memref<4x8x8xf32, #tpu.memory_space<vmem>>, vector<1x8x8xf32>
    %7 = vector.shape_cast %6 : vector<1x8x8xf32> to vector<8x8xf32>
    %c0_2 = arith.constant 0 : index
    %c0_3 = arith.constant 0 : index
    %c0_4 = arith.constant 0 : index
    %8 = vector.load %arg7[%c0_2, %c0_3, %c0_4] : memref<4x8x8xf32, #tpu.memory_space<vmem>>, vector<1x8x8xf32>
    %9 = vector.shape_cast %8 : vector<1x8x8xf32> to vector<8x8xf32>
    %cst = arith.constant dense<0.000000e+00> : vector<8x8xf32>
    %10 = tpu.matmul %7, %9, %cst {dimension_numbers = #tpu.dot_dimension_numbers<[1], [0], [0], [1], [0, 0, 1, 1], [], []>} : vector<8x8xf32>, vector<8x8xf32>, vector<8x8xf32> -> vector<8x8xf32>
    %cst_5 = arith.constant dense<0xFF800000> : vector<8xf32>
    %11 = vector.multi_reduction <maximumf>, %10, %cst_5 [1] : vector<8x8xf32> to vector<8xf32>
    %12 = vector.shape_cast %11 : vector<8xf32> to vector<8x1xf32>
    %13 = vector.broadcast %12 : vector<8x1xf32> to vector<8x8xf32>
    %14 = arith.subf %10, %13 : vector<8x8xf32>
    %15 = math.exp %14 : vector<8x8xf32>
    %cst_6 = arith.constant dense<0.000000e+00> : vector<8xf32>
    %16 = vector.multi_reduction <add>, %15, %cst_6 [1] : vector<8x8xf32> to vector<8xf32>
    %17 = vector.shape_cast %16 : vector<8xf32> to vector<8x1xf32>
    %18 = tpu.reciprocal %17 {approx = true} : vector<8x1xf32> -> vector<8x1xf32>
    %c0_7 = arith.constant 0 : index
    %c0_8 = arith.constant 0 : index
    %c0_9 = arith.constant 0 : index
    %19 = vector.load %arg8[%c0_7, %c0_8, %c0_9] : memref<4x8x8xf32, #tpu.memory_space<vmem>>, vector<1x8x8xf32>
    %20 = vector.shape_cast %19 : vector<1x8x8xf32> to vector<8x8xf32>
    %cst_10 = arith.constant dense<0.000000e+00> : vector<8x8xf32>
    %21 = tpu.matmul %15, %20, %cst_10 {dimension_numbers = #tpu.dot_dimension_numbers<[1], [0], [0], [1], [0, 0, 1, 1], [], []>} : vector<8x8xf32>, vector<8x8xf32>, vector<8x8xf32> -> vector<8x8xf32>
    %22 = vector.broadcast %18 : vector<8x1xf32> to vector<8x8xf32>
    %23 = arith.mulf %21, %22 : vector<8x8xf32>
    %c0_11 = arith.constant 0 : index
    %c0_12 = arith.constant 0 : index
    %24 = vector.load %arg9[%c0_11, %c0_12] : memref<8x32xf32, #tpu.memory_space<vmem>>, vector<8x8xf32>
    tpu.vector_store %arg9[%c0_11, %c0_12], %23 {strides = array<i32>} : memref<8x32xf32, #tpu.memory_space<vmem>>, vector<8x8xf32>,
    %c1 = arith.constant 1 : index
    %25 = arith.index_cast %4 : i32 to index
    %c0_13 = arith.constant 0 : index
    %26 = vector.load %arg6[%c1, %25, %c0_13] : memref<4x8x8xf32, #tpu.memory_space<vmem>>, vector<1x8x8xf32>
    %27 = vector.shape_cast %26 : vector<1x8x8xf32> to vector<8x8xf32>
    %c1_14 = arith.constant 1 : index
    %c0_15 = arith.constant 0 : index
    %c0_16 = arith.constant 0 : index
    %28 = vector.load %arg7[%c1_14, %c0_15, %c0_16] : memref<4x8x8xf32, #tpu.memory_space<vmem>>, vector<1x8x8xf32>
    %29 = vector.shape_cast %28 : vector<1x8x8xf32> to vector<8x8xf32>
    %cst_17 = arith.constant dense<0.000000e+00> : vector<8x8xf32>
    %30 = tpu.matmul %27, %29, %cst_17 {dimension_numbers = #tpu.dot_dimension_numbers<[1], [0], [0], [1], [0, 0, 1, 1], [], []>} : vector<8x8xf32>, vector<8x8xf32>, vector<8x8xf32> -> vector<8x8xf32>
    %cst_18 = arith.constant dense<0xFF800000> : vector<8xf32>
    %31 = vector.multi_reduction <maximumf>, %30, %cst_18 [1] : vector<8x8xf32> to vector<8xf32>
    %32 = vector.shape_cast %31 : vector<8xf32> to vector<8x1xf32>
    %33 = vector.broadcast %32 : vector<8x1xf32> to vector<8x8xf32>
    %34 = arith.subf %30, %33 : vector<8x8xf32>
    %35 = math.exp %34 : vector<8x8xf32>
    %cst_19 = arith.constant dense<0.000000e+00> : vector<8xf32>
    %36 = vector.multi_reduction <add>, %35, %cst_19 [1] : vector<8x8xf32> to vector<8xf32>
    %37 = vector.shape_cast %36 : vector<8xf32> to vector<8x1xf32>
    %38 = tpu.reciprocal %37 {approx = true} : vector<8x1xf32> -> vector<8x1xf32>
    %c1_20 = arith.constant 1 : index
    %c0_21 = arith.constant 0 : index
    %c0_22 = arith.constant 0 : index
    %39 = vector.load %arg8[%c1_20, %c0_21, %c0_22] : memref<4x8x8xf32, #tpu.memory_space<vmem>>, vector<1x8x8xf32>
    %40 = vector.shape_cast %39 : vector<1x8x8xf32> to vector<8x8xf32>
    %cst_23 = arith.constant dense<0.000000e+00> : vector<8x8xf32>
    %41 = tpu.matmul %35, %40, %cst_23 {dimension_numbers = #tpu.dot_dimension_numbers<[1], [0], [0], [1], [0, 0, 1, 1], [], []>} : vector<8x8xf32>, vector<8x8xf32>, vector<8x8xf32> -> vector<8x8xf32>
    %42 = vector.broadcast %38 : vector<8x1xf32> to vector<8x8xf32>
    %43 = arith.mulf %41, %42 : vector<8x8xf32>
    %c0_24 = arith.constant 0 : index
    %c8 = arith.constant 8 : index
    %44 = vector.load %arg9[%c0_24, %c8] : memref<8x32xf32, #tpu.memory_space<vmem>>, vector<8x8xf32>
    tpu.vector_store %arg9[%c0_24, %c8], %43 {strides = array<i32>} : memref<8x32xf32, #tpu.memory_space<vmem>>, vector<8x8xf32>,
    %c2 = arith.constant 2 : index
    %45 = arith.index_cast %4 : i32 to index
    %c0_25 = arith.constant 0 : index
    %46 = vector.load %arg6[%c2, %45, %c0_25] : memref<4x8x8xf32, #tpu.memory_space<vmem>>, vector<1x8x8xf32>
    %47 = vector.shape_cast %46 : vector<1x8x8xf32> to vector<8x8xf32>
    %c2_26 = arith.constant 2 : index
    %c0_27 = arith.constant 0 : index
    %c0_28 = arith.constant 0 : index
    %48 = vector.load %arg7[%c2_26, %c0_27, %c0_28] : memref<4x8x8xf32, #tpu.memory_space<vmem>>, vector<1x8x8xf32>
    %49 = vector.shape_cast %48 : vector<1x8x8xf32> to vector<8x8xf32>
    %cst_29 = arith.constant dense<0.000000e+00> : vector<8x8xf32>
    %50 = tpu.matmul %47, %49, %cst_29 {dimension_numbers = #tpu.dot_dimension_numbers<[1], [0], [0], [1], [0, 0, 1, 1], [], []>} : vector<8x8xf32>, vector<8x8xf32>, vector<8x8xf32> -> vector<8x8xf32>
    %cst_30 = arith.constant dense<0xFF800000> : vector<8xf32>
    %51 = vector.multi_reduction <maximumf>, %50, %cst_30 [1] : vector<8x8xf32> to vector<8xf32>
    %52 = vector.shape_cast %51 : vector<8xf32> to vector<8x1xf32>
    %53 = vector.broadcast %52 : vector<8x1xf32> to vector<8x8xf32>
    %54 = arith.subf %50, %53 : vector<8x8xf32>
    %55 = math.exp %54 : vector<8x8xf32>
    %cst_31 = arith.constant dense<0.000000e+00> : vector<8xf32>
    %56 = vector.multi_reduction <add>, %55, %cst_31 [1] : vector<8x8xf32> to vector<8xf32>
    %57 = vector.shape_cast %56 : vector<8xf32> to vector<8x1xf32>
    %58 = tpu.reciprocal %57 {approx = true} : vector<8x1xf32> -> vector<8x1xf32>
    %c2_32 = arith.constant 2 : index
    %c0_33 = arith.constant 0 : index
    %c0_34 = arith.constant 0 : index
    %59 = vector.load %arg8[%c2_32, %c0_33, %c0_34] : memref<4x8x8xf32, #tpu.memory_space<vmem>>, vector<1x8x8xf32>
    %60 = vector.shape_cast %59 : vector<1x8x8xf32> to vector<8x8xf32>
    %cst_35 = arith.constant dense<0.000000e+00> : vector<8x8xf32>
    %61 = tpu.matmul %55, %60, %cst_35 {dimension_numbers = #tpu.dot_dimension_numbers<[1], [0], [0], [1], [0, 0, 1, 1], [], []>} : vector<8x8xf32>, vector<8x8xf32>, vector<8x8xf32> -> vector<8x8xf32>
    %62 = vector.broadcast %58 : vector<8x1xf32> to vector<8x8xf32>
    %63 = arith.mulf %61, %62 : vector<8x8xf32>
    %c0_36 = arith.constant 0 : index
    %c16 = arith.constant 16 : index
    %64 = vector.load %arg9[%c0_36, %c16] : memref<8x32xf32, #tpu.memory_space<vmem>>, vector<8x8xf32>
    tpu.vector_store %arg9[%c0_36, %c16], %63 {strides = array<i32>} : memref<8x32xf32, #tpu.memory_space<vmem>>, vector<8x8xf32>,
    %c3 = arith.constant 3 : index
    %65 = arith.index_cast %4 : i32 to index
    %c0_37 = arith.constant 0 : index
    %66 = vector.load %arg6[%c3, %65, %c0_37] : memref<4x8x8xf32, #tpu.memory_space<vmem>>, vector<1x8x8xf32>
    %67 = vector.shape_cast %66 : vector<1x8x8xf32> to vector<8x8xf32>
    %c3_38 = arith.constant 3 : index
    %c0_39 = arith.constant 0 : index
    %c0_40 = arith.constant 0 : index
    %68 = vector.load %arg7[%c3_38, %c0_39, %c0_40] : memref<4x8x8xf32, #tpu.memory_space<vmem>>, vector<1x8x8xf32>
    %69 = vector.shape_cast %68 : vector<1x8x8xf32> to vector<8x8xf32>
    %cst_41 = arith.constant dense<0.000000e+00> : vector<8x8xf32>
    %70 = tpu.matmul %67, %69, %cst_41 {dimension_numbers = #tpu.dot_dimension_numbers<[1], [0], [0], [1], [0, 0, 1, 1], [], []>} : vector<8x8xf32>, vector<8x8xf32>, vector<8x8xf32> -> vector<8x8xf32>
    %cst_42 = arith.constant dense<0xFF800000> : vector<8xf32>
    %71 = vector.multi_reduction <maximumf>, %70, %cst_42 [1] : vector<8x8xf32> to vector<8xf32>
    %72 = vector.shape_cast %71 : vector<8xf32> to vector<8x1xf32>
    %73 = vector.broadcast %72 : vector<8x1xf32> to vector<8x8xf32>
    %74 = arith.subf %70, %73 : vector<8x8xf32>
    %75 = math.exp %74 : vector<8x8xf32>
    %cst_43 = arith.constant dense<0.000000e+00> : vector<8xf32>
    %76 = vector.multi_reduction <add>, %75, %cst_43 [1] : vector<8x8xf32> to vector<8xf32>
    %77 = vector.shape_cast %76 : vector<8xf32> to vector<8x1xf32>
    %78 = tpu.reciprocal %77 {approx = true} : vector<8x1xf32> -> vector<8x1xf32>
    %c3_44 = arith.constant 3 : index
    %c0_45 = arith.constant 0 : index
    %c0_46 = arith.constant 0 : index
    %79 = vector.load %arg8[%c3_44, %c0_45, %c0_46] : memref<4x8x8xf32, #tpu.memory_space<vmem>>, vector<1x8x8xf32>
    %80 = vector.shape_cast %79 : vector<1x8x8xf32> to vector<8x8xf32>
    %cst_47 = arith.constant dense<0.000000e+00> : vector<8x8xf32>
    %81 = tpu.matmul %75, %80, %cst_47 {dimension_numbers = #tpu.dot_dimension_numbers<[1], [0], [0], [1], [0, 0, 1, 1], [], []>} : vector<8x8xf32>, vector<8x8xf32>, vector<8x8xf32> -> vector<8x8xf32>
    %82 = vector.broadcast %78 : vector<8x1xf32> to vector<8x8xf32>
    %83 = arith.mulf %81, %82 : vector<8x8xf32>
    %c0_48 = arith.constant 0 : index
    %c24 = arith.constant 24 : index
    %84 = vector.load %arg9[%c0_48, %c24] : memref<8x32xf32, #tpu.memory_space<vmem>>, vector<8x8xf32>
    tpu.vector_store %arg9[%c0_48, %c24], %83 {strides = array<i32>} : memref<8x32xf32, #tpu.memory_space<vmem>>, vector<8x8xf32>,
    %c0_49 = arith.constant 0 : index
    %c0_50 = arith.constant 0 : index
    %85 = vector.load %arg9[%c0_49, %c0_50] : memref<8x32xf32, #tpu.memory_space<vmem>>, vector<8x32xf32>
    %c0_51 = arith.constant 0 : index
    %c0_52 = arith.constant 0 : index
    %86 = vector.load %arg4[%c0_51, %c0_52] : memref<32x32xf32, #tpu.memory_space<vmem>>, vector<32x32xf32>
    %cst_53 = arith.constant dense<0.000000e+00> : vector<8x32xf32>
    %87 = tpu.matmul %85, %86, %cst_53 {dimension_numbers = #tpu.dot_dimension_numbers<[1], [0], [0], [1], [0, 0, 1, 1], [], []>} : vector<8x32xf32>, vector<32x32xf32>, vector<8x32xf32> -> vector<8x32xf32>
    %c0_54 = arith.constant 0 : index
    %c0_55 = arith.constant 0 : index
    %c0_56 = arith.constant 0 : index
    %88 = vector.load %arg5[%c0_54, %c0_55, %c0_56] : memref<1x8x32xf32, #tpu.memory_space<vmem>>, vector<1x8x32xf32>
    %89 = vector.shape_cast %88 : vector<1x8x32xf32> to vector<8x32xf32>
    %90 = vector.shape_cast %87 : vector<8x32xf32> to vector<1x8x32xf32>
    tpu.vector_store %arg5[%c0_54, %c0_55, %c0_56], %90 {strides = array<i32>} : memref<1x8x32xf32, #tpu.memory_space<vmem>>, vector<1x8x32xf32>,
    return
  }
  func.func @transform_0(%arg0: i32, %arg1: i32) -> (i32, i32, i32) {
    %c0_i32 = arith.constant 0 : i32
    %c0_i32_0 = arith.constant 0 : i32
    %c0_i32_1 = arith.constant 0 : i32
    return %arg0, %c0_i32, %c0_i32_0 : i32, i32, i32
  }
  func.func @transform_1(%arg0: i32, %arg1: i32) -> (i32, i32) {
    %c0_i32 = arith.constant 0 : i32
    %c0_i32_0 = arith.constant 0 : i32
    %c0_i32_1 = arith.constant 0 : i32
    return %c0_i32, %c0_i32_0 : i32, i32
  }
  func.func @transform_2(%arg0: i32, %arg1: i32) -> (i32, i32) {
    %c0_i32 = arith.constant 0 : i32
    %c0_i32_0 = arith.constant 0 : i32
    %c0_i32_1 = arith.constant 0 : i32
    return %c0_i32, %c0_i32_0 : i32, i32
  }
  func.func @transform_3(%arg0: i32, %arg1: i32) -> (i32, i32, i32) {
    %c0_i32 = arith.constant 0 : i32
    %c0_i32_0 = arith.constant 0 : i32
    return %arg0, %arg1, %c0_i32 : i32, i32, i32
  }
}

module attributes {stable_mosaic.version = 11 : i64} {
  func.func @_mha_kernel(%arg0: i32, %arg1: i32, %arg2: memref<1x8x32xf32, #tpu.memory_space<vmem>>, %arg3: memref<32x96xf32, #tpu.memory_space<vmem>>, %arg4: memref<32x32xf32, #tpu.memory_space<vmem>>, %arg5: memref<1x8x32xf32, #tpu.memory_space<vmem>>, %arg6: memref<4x8x8xf32, #tpu.memory_space<vmem>>, %arg7: memref<4x8x8xf32, #tpu.memory_space<vmem>>, %arg8: memref<4x8x8xf32, #tpu.memory_space<vmem>>, %arg9: memref<8x32xf32, #tpu.memory_space<vmem>>) attributes {dimension_semantics = [#tpu.dimension_semantics<parallel>, #tpu.dimension_semantics<arbitrary>], iteration_bounds = array<i64: 2, 1>, scalar_prefetch = 0 : i64, scratch_operands = 4 : i64, tpu.core_type = #tpu.core_type<tc>, window_params = [{transform_indices = @transform_0, window_bounds = array<i64: 1, 8, 32>}, {pipeline_mode = #tpu.pipeline_mode<synchronous>, transform_indices = @transform_1, window_bounds = array<i64: 32, 96>}, {pipeline_mode = #tpu.pipeline_mode<synchronous>, transform_indices = @transform_2, window_bounds = array<i64: 32, 32>}, {transform_indices = @transform_3, window_bounds = array<i64: 1, 8, 32>}]} {
    %c0_i32 = arith.constant 0 : i32
    %0 = arith.cmpi eq, %arg1, %c0_i32 : i32
    %1 = arith.extui %0 : i1 to i32
    %c0_i32_0 = arith.constant 0 : i32
    %2 = arith.cmpi ne, %1, %c0_i32_0 : i32
    scf.if %2 {
      %c0_57 = arith.constant 0 : index
      %c0_58 = arith.constant 0 : index
      %c0_59 = arith.constant 0 : index
      %91 = vector.load %arg2[%c0_57, %c0_58, %c0_59] : memref<1x8x32xf32, #tpu.memory_space<vmem>>, vector<1x8x32xf32>
      %92 = vector.shape_cast %91 : vector<1x8x32xf32> to vector<8x32xf32>
      %c0_60 = arith.constant 0 : index
      %c0_61 = arith.constant 0 : index
      %93 = vector.load %arg3[%c0_60, %c0_61] : memref<32x96xf32, #tpu.memory_space<vmem>>, vector<32x32xf32>
      %cst_62 = arith.constant dense<0.000000e+00> : vector<8x32xf32>
      %94 = tpu.matmul %92, %93, %cst_62 {dimension_numbers = #tpu.dot_dimension_numbers<[1], [0], [0], [1], [0, 0, 1, 1], [], []>} : vector<8x32xf32>, vector<32x32xf32>, vector<8x32xf32> -> vector<8x32xf32>
      %c0_63 = arith.constant 0 : index
      %c32 = arith.constant 32 : index
      %95 = vector.load %arg3[%c0_63, %c32] : memref<32x96xf32, #tpu.memory_space<vmem>>, vector<32x32xf32>
      %cst_64 = arith.constant dense<0.000000e+00> : vector<8x32xf32>
      %96 = tpu.matmul %92, %95, %cst_64 {dimension_numbers = #tpu.dot_dimension_numbers<[1], [0], [0], [1], [0, 0, 1, 1], [], []>} : vector<8x32xf32>, vector<32x32xf32>, vector<8x32xf32> -> vector<8x32xf32>
      %c0_65 = arith.constant 0 : index
      %c64 = arith.constant 64 : index
      %97 = vector.load %arg3[%c0_65, %c64] : memref<32x96xf32, #tpu.memory_space<vmem>>, vector<32x32xf32>
      %cst_66 = arith.constant dense<0.000000e+00> : vector<8x32xf32>
      %98 = tpu.matmul %92, %97, %cst_66 {dimension_numbers = #tpu.dot_dimension_numbers<[1], [0], [0], [1], [0, 0, 1, 1], [], []>} : vector<8x32xf32>, vector<32x32xf32>, vector<8x32xf32> -> vector<8x32xf32>
      %99 = vector.extract_strided_slice %94 {offsets = [0, 0], sizes = [8, 8], strides = [1, 1]} : vector<8x32xf32> to vector<8x8xf32>
      %c0_67 = arith.constant 0 : index
      %c0_68 = arith.constant 0 : index
      %c0_69 = arith.constant 0 : index
      %100 = vector.load %arg6[%c0_67, %c0_68, %c0_69] : memref<4x8x8xf32, #tpu.memory_space<vmem>>, vector<1x8x8xf32>
      %101 = vector.shape_cast %100 : vector<1x8x8xf32> to vector<8x8xf32>
      %102 = vector.shape_cast %99 : vector<8x8xf32> to vector<1x8x8xf32>
      tpu.vector_store %arg6[%c0_67, %c0_68, %c0_69], %102 {strides = array<i32>} : memref<4x8x8xf32, #tpu.memory_space<vmem>>, vector<1x8x8xf32>,
      %103 = vector.extract_strided_slice %96 {offsets = [0, 0], sizes = [8, 8], strides = [1, 1]} : vector<8x32xf32> to vector<8x8xf32>
      %104 = tpu.transpose %103, [1, 0] : vector<8x8xf32> -> vector<8x8xf32>
      %c0_70 = arith.constant 0 : index
      %c0_71 = arith.constant 0 : index
      %c0_72 = arith.constant 0 : index
      %105 = vector.load %arg7[%c0_70, %c0_71, %c0_72] : memref<4x8x8xf32, #tpu.memory_space<vmem>>, vector<1x8x8xf32>
      %106 = vector.shape_cast %105 : vector<1x8x8xf32> to vector<8x8xf32>
      %107 = vector.shape_cast %104 : vector<8x8xf32> to vector<1x8x8xf32>
      tpu.vector_store %arg7[%c0_70, %c0_71, %c0_72], %107 {strides = array<i32>} : memref<4x8x8xf32, #tpu.memory_space<vmem>>, vector<1x8x8xf32>,
      %108 = vector.extract_strided_slice %98 {offsets = [0, 0], sizes = [8, 8], strides = [1, 1]} : vector<8x32xf32> to vector<8x8xf32>
      %c0_73 = arith.constant 0 : index
      %c0_74 = arith.constant 0 : index
      %c0_75 = arith.constant 0 : index
      %109 = vector.load %arg8[%c0_73, %c0_74, %c0_75] : memref<4x8x8xf32, #tpu.memory_space<vmem>>, vector<1x8x8xf32>
      %110 = vector.shape_cast %109 : vector<1x8x8xf32> to vector<8x8xf32>
      %111 = vector.shape_cast %108 : vector<8x8xf32> to vector<1x8x8xf32>
      tpu.vector_store %arg8[%c0_73, %c0_74, %c0_75], %111 {strides = array<i32>} : memref<4x8x8xf32, #tpu.memory_space<vmem>>, vector<1x8x8xf32>,
      %112 = vector.extract_strided_slice %94 {offsets = [0, 8], sizes = [8, 8], strides = [1, 1]} : vector<8x32xf32> to vector<8x8xf32>
      %c1_76 = arith.constant 1 : index
      %c0_77 = arith.constant 0 : index
      %c0_78 = arith.constant 0 : index
      %113 = vector.load %arg6[%c1_76, %c0_77, %c0_78] : memref<4x8x8xf32, #tpu.memory_space<vmem>>, vector<1x8x8xf32>
      %114 = vector.shape_cast %113 : vector<1x8x8xf32> to vector<8x8xf32>
      %115 = vector.shape_cast %112 : vector<8x8xf32> to vector<1x8x8xf32>
      tpu.vector_store %arg6[%c1_76, %c0_77, %c0_78], %115 {strides = array<i32>} : memref<4x8x8xf32, #tpu.memory_space<vmem>>, vector<1x8x8xf32>,
      %116 = vector.extract_strided_slice %96 {offsets = [0, 8], sizes = [8, 8], strides = [1, 1]} : vector<8x32xf32> to vector<8x8xf32>
      %117 = tpu.transpose %116, [1, 0] : vector<8x8xf32> -> vector<8x8xf32>
      %c1_79 = arith.constant 1 : index
      %c0_80 = arith.constant 0 : index
      %c0_81 = arith.constant 0 : index
      %118 = vector.load %arg7[%c1_79, %c0_80, %c0_81] : memref<4x8x8xf32, #tpu.memory_space<vmem>>, vector<1x8x8xf32>
      %119 = vector.shape_cast %118 : vector<1x8x8xf32> to vector<8x8xf32>
      %120 = vector.shape_cast %117 : vector<8x8xf32> to vector<1x8x8xf32>
      tpu.vector_store %arg7[%c1_79, %c0_80, %c0_81], %120 {strides = array<i32>} : memref<4x8x8xf32, #tpu.memory_space<vmem>>, vector<1x8x8xf32>,
      %121 = vector.extract_strided_slice %98 {offsets = [0, 8], sizes = [8, 8], strides = [1, 1]} : vector<8x32xf32> to vector<8x8xf32>
      %c1_82 = arith.constant 1 : index
      %c0_83 = arith.constant 0 : index
      %c0_84 = arith.constant 0 : index
      %122 = vector.load %arg8[%c1_82, %c0_83, %c0_84] : memref<4x8x8xf32, #tpu.memory_space<vmem>>, vector<1x8x8xf32>
      %123 = vector.shape_cast %122 : vector<1x8x8xf32> to vector<8x8xf32>
      %124 = vector.shape_cast %121 : vector<8x8xf32> to vector<1x8x8xf32>
      tpu.vector_store %arg8[%c1_82, %c0_83, %c0_84], %124 {strides = array<i32>} : memref<4x8x8xf32, #tpu.memory_space<vmem>>, vector<1x8x8xf32>,
      %125 = vector.extract_strided_slice %94 {offsets = [0, 16], sizes = [8, 8], strides = [1, 1]} : vector<8x32xf32> to vector<8x8xf32>
      %c2_85 = arith.constant 2 : index
      %c0_86 = arith.constant 0 : index
      %c0_87 = arith.constant 0 : index
      %126 = vector.load %arg6[%c2_85, %c0_86, %c0_87] : memref<4x8x8xf32, #tpu.memory_space<vmem>>, vector<1x8x8xf32>
      %127 = vector.shape_cast %126 : vector<1x8x8xf32> to vector<8x8xf32>
      %128 = vector.shape_cast %125 : vector<8x8xf32> to vector<1x8x8xf32>
      tpu.vector_store %arg6[%c2_85, %c0_86, %c0_87], %128 {strides = array<i32>} : memref<4x8x8xf32, #tpu.memory_space<vmem>>, vector<1x8x8xf32>,
      %129 = vector.extract_strided_slice %96 {offsets = [0, 16], sizes = [8, 8], strides = [1, 1]} : vector<8x32xf32> to vector<8x8xf32>
      %130 = tpu.transpose %129, [1, 0] : vector<8x8xf32> -> vector<8x8xf32>
      %c2_88 = arith.constant 2 : index
      %c0_89 = arith.constant 0 : index
      %c0_90 = arith.constant 0 : index
      %131 = vector.load %arg7[%c2_88, %c0_89, %c0_90] : memref<4x8x8xf32, #tpu.memory_space<vmem>>, vector<1x8x8xf32>
      %132 = vector.shape_cast %131 : vector<1x8x8xf32> to vector<8x8xf32>
      %133 = vector.shape_cast %130 : vector<8x8xf32> to vector<1x8x8xf32>
      tpu.vector_store %arg7[%c2_88, %c0_89, %c0_90], %133 {strides = array<i32>} : memref<4x8x8xf32, #tpu.memory_space<vmem>>, vector<1x8x8xf32>,
      %134 = vector.extract_strided_slice %98 {offsets = [0, 16], sizes = [8, 8], strides = [1, 1]} : vector<8x32xf32> to vector<8x8xf32>
      %c2_91 = arith.constant 2 : index
      %c0_92 = arith.constant 0 : index
      %c0_93 = arith.constant 0 : index
      %135 = vector.load %arg8[%c2_91, %c0_92, %c0_93] : memref<4x8x8xf32, #tpu.memory_space<vmem>>, vector<1x8x8xf32>
      %136 = vector.shape_cast %135 : vector<1x8x8xf32> to vector<8x8xf32>
      %137 = vector.shape_cast %134 : vector<8x8xf32> to vector<1x8x8xf32>
      tpu.vector_store %arg8[%c2_91, %c0_92, %c0_93], %137 {strides = array<i32>} : memref<4x8x8xf32, #tpu.memory_space<vmem>>, vector<1x8x8xf32>,
      %138 = vector.extract_strided_slice %94 {offsets = [0, 24], sizes = [8, 8], strides = [1, 1]} : vector<8x32xf32> to vector<8x8xf32>
      %c3_94 = arith.constant 3 : index
      %c0_95 = arith.constant 0 : index
      %c0_96 = arith.constant 0 : index
      %139 = vector.load %arg6[%c3_94, %c0_95, %c0_96] : memref<4x8x8xf32, #tpu.memory_space<vmem>>, vector<1x8x8xf32>
      %140 = vector.shape_cast %139 : vector<1x8x8xf32> to vector<8x8xf32>
      %141 = vector.shape_cast %138 : vector<8x8xf32> to vector<1x8x8xf32>
      tpu.vector_store %arg6[%c3_94, %c0_95, %c0_96], %141 {strides = array<i32>} : memref<4x8x8xf32, #tpu.memory_space<vmem>>, vector<1x8x8xf32>,
      %142 = vector.extract_strided_slice %96 {offsets = [0, 24], sizes = [8, 8], strides = [1, 1]} : vector<8x32xf32> to vector<8x8xf32>
      %143 = tpu.transpose %142, [1, 0] : vector<8x8xf32> -> vector<8x8xf32>
      %c3_97 = arith.constant 3 : index
      %c0_98 = arith.constant 0 : index
      %c0_99 = arith.constant 0 : index
      %144 = vector.load %arg7[%c3_97, %c0_98, %c0_99] : memref<4x8x8xf32, #tpu.memory_space<vmem>>, vector<1x8x8xf32>
      %145 = vector.shape_cast %144 : vector<1x8x8xf32> to vector<8x8xf32>
      %146 = vector.shape_cast %143 : vector<8x8xf32> to vector<1x8x8xf32>
      tpu.vector_store %arg7[%c3_97, %c0_98, %c0_99], %146 {strides = array<i32>} : memref<4x8x8xf32, #tpu.memory_space<vmem>>, vector<1x8x8xf32>,
      %147 = vector.extract_strided_slice %98 {offsets = [0, 24], sizes = [8, 8], strides = [1, 1]} : vector<8x32xf32> to vector<8x8xf32>
      %c3_100 = arith.constant 3 : index
      %c0_101 = arith.constant 0 : index
      %c0_102 = arith.constant 0 : index
      %148 = vector.load %arg8[%c3_100, %c0_101, %c0_102] : memref<4x8x8xf32, #tpu.memory_space<vmem>>, vector<1x8x8xf32>
      %149 = vector.shape_cast %148 : vector<1x8x8xf32> to vector<8x8xf32>
      %150 = vector.shape_cast %147 : vector<8x8xf32> to vector<1x8x8xf32>
      tpu.vector_store %arg8[%c3_100, %c0_101, %c0_102], %150 {strides = array<i32>} : memref<4x8x8xf32, #tpu.memory_space<vmem>>, vector<1x8x8xf32>,
    } else {
    }
    %c8_i32 = arith.constant 8 : i32
    %3 = arith.muli %arg1, %c8_i32 : i32
    %4 = tpu.assume_multiple %3, 8 : i32
    %c0 = arith.constant 0 : index
    %5 = arith.index_cast %4 : i32 to index
    %c0_1 = arith.constant 0 : index
    %6 = vector.load %arg6[%c0, %5, %c0_1] : memref<4x8x8xf32, #tpu.memory_space<vmem>>, vector<1x8x8xf32>
    %7 = vector.shape_cast %6 : vector<1x8x8xf32> to vector<8x8xf32>
    %c0_2 = arith.constant 0 : index
    %c0_3 = arith.constant 0 : index
    %c0_4 = arith.constant 0 : index
    %8 = vector.load %arg7[%c0_2, %c0_3, %c0_4] : memref<4x8x8xf32, #tpu.memory_space<vmem>>, vector<1x8x8xf32>
    %9 = vector.shape_cast %8 : vector<1x8x8xf32> to vector<8x8xf32>
    %cst = arith.constant dense<0.000000e+00> : vector<8x8xf32>
    %10 = tpu.matmul %7, %9, %cst {dimension_numbers = #tpu.dot_dimension_numbers<[1], [0], [0], [1], [0, 0, 1, 1], [], []>} : vector<8x8xf32>, vector<8x8xf32>, vector<8x8xf32> -> vector<8x8xf32>
    %cst_5 = arith.constant dense<0xFF800000> : vector<8xf32>
    %11 = vector.multi_reduction <maximumf>, %10, %cst_5 [1] : vector<8x8xf32> to vector<8xf32>
    %12 = vector.shape_cast %11 : vector<8xf32> to vector<8x1xf32>
    %13 = vector.broadcast %12 : vector<8x1xf32> to vector<8x8xf32>
    %14 = arith.subf %10, %13 : vector<8x8xf32>
    %15 = math.exp %14 : vector<8x8xf32>
    %cst_6 = arith.constant dense<0.000000e+00> : vector<8xf32>
    %16 = vector.multi_reduction <add>, %15, %cst_6 [1] : vector<8x8xf32> to vector<8xf32>
    %17 = vector.shape_cast %16 : vector<8xf32> to vector<8x1xf32>
    %18 = tpu.reciprocal %17 {approx = true} : vector<8x1xf32> -> vector<8x1xf32>
    %c0_7 = arith.constant 0 : index
    %c0_8 = arith.constant 0 : index
    %c0_9 = arith.constant 0 : index
    %19 = vector.load %arg8[%c0_7, %c0_8, %c0_9] : memref<4x8x8xf32, #tpu.memory_space<vmem>>, vector<1x8x8xf32>
    %20 = vector.shape_cast %19 : vector<1x8x8xf32> to vector<8x8xf32>
    %cst_10 = arith.constant dense<0.000000e+00> : vector<8x8xf32>
    %21 = tpu.matmul %15, %20, %cst_10 {dimension_numbers = #tpu.dot_dimension_numbers<[1], [0], [0], [1], [0, 0, 1, 1], [], []>} : vector<8x8xf32>, vector<8x8xf32>, vector<8x8xf32> -> vector<8x8xf32>
    %22 = vector.broadcast %18 : vector<8x1xf32> to vector<8x8xf32>
    %23 = arith.mulf %21, %22 : vector<8x8xf32>
    %c0_11 = arith.constant 0 : index
    %c0_12 = arith.constant 0 : index
    %24 = vector.load %arg9[%c0_11, %c0_12] : memref<8x32xf32, #tpu.memory_space<vmem>>, vector<8x8xf32>
    tpu.vector_store %arg9[%c0_11, %c0_12], %23 {strides = array<i32>} : memref<8x32xf32, #tpu.memory_space<vmem>>, vector<8x8xf32>,
    %c1 = arith.constant 1 : index
    %25 = arith.index_cast %4 : i32 to index
    %c0_13 = arith.constant 0 : index
    %26 = vector.load %arg6[%c1, %25, %c0_13] : memref<4x8x8xf32, #tpu.memory_space<vmem>>, vector<1x8x8xf32>
    %27 = vector.shape_cast %26 : vector<1x8x8xf32> to vector<8x8xf32>
    %c1_14 = arith.constant 1 : index
    %c0_15 = arith.constant 0 : index
    %c0_16 = arith.constant 0 : index
    %28 = vector.load %arg7[%c1_14, %c0_15, %c0_16] : memref<4x8x8xf32, #tpu.memory_space<vmem>>, vector<1x8x8xf32>
    %29 = vector.shape_cast %28 : vector<1x8x8xf32> to vector<8x8xf32>
    %cst_17 = arith.constant dense<0.000000e+00> : vector<8x8xf32>
    %30 = tpu.matmul %27, %29, %cst_17 {dimension_numbers = #tpu.dot_dimension_numbers<[1], [0], [0], [1], [0, 0, 1, 1], [], []>} : vector<8x8xf32>, vector<8x8xf32>, vector<8x8xf32> -> vector<8x8xf32>
    %cst_18 = arith.constant dense<0xFF800000> : vector<8xf32>
    %31 = vector.multi_reduction <maximumf>, %30, %cst_18 [1] : vector<8x8xf32> to vector<8xf32>
    %32 = vector.shape_cast %31 : vector<8xf32> to vector<8x1xf32>
    %33 = vector.broadcast %32 : vector<8x1xf32> to vector<8x8xf32>
    %34 = arith.subf %30, %33 : vector<8x8xf32>
    %35 = math.exp %34 : vector<8x8xf32>
    %cst_19 = arith.constant dense<0.000000e+00> : vector<8xf32>
    %36 = vector.multi_reduction <add>, %35, %cst_19 [1] : vector<8x8xf32> to vector<8xf32>
    %37 = vector.shape_cast %36 : vector<8xf32> to vector<8x1xf32>
    %38 = tpu.reciprocal %37 {approx = true} : vector<8x1xf32> -> vector<8x1xf32>
    %c1_20 = arith.constant 1 : index
    %c0_21 = arith.constant 0 : index
    %c0_22 = arith.constant 0 : index
    %39 = vector.load %arg8[%c1_20, %c0_21, %c0_22] : memref<4x8x8xf32, #tpu.memory_space<vmem>>, vector<1x8x8xf32>
    %40 = vector.shape_cast %39 : vector<1x8x8xf32> to vector<8x8xf32>
    %cst_23 = arith.constant dense<0.000000e+00> : vector<8x8xf32>
    %41 = tpu.matmul %35, %40, %cst_23 {dimension_numbers = #tpu.dot_dimension_numbers<[1], [0], [0], [1], [0, 0, 1, 1], [], []>} : vector<8x8xf32>, vector<8x8xf32>, vector<8x8xf32> -> vector<8x8xf32>
    %42 = vector.broadcast %38 : vector<8x1xf32> to vector<8x8xf32>
    %43 = arith.mulf %41, %42 : vector<8x8xf32>
    %c0_24 = arith.constant 0 : index
    %c8 = arith.constant 8 : index
    %44 = vector.load %arg9[%c0_24, %c8] : memref<8x32xf32, #tpu.memory_space<vmem>>, vector<8x8xf32>
    tpu.vector_store %arg9[%c0_24, %c8], %43 {strides = array<i32>} : memref<8x32xf32, #tpu.memory_space<vmem>>, vector<8x8xf32>,
    %c2 = arith.constant 2 : index
    %45 = arith.index_cast %4 : i32 to index
    %c0_25 = arith.constant 0 : index
    %46 = vector.load %arg6[%c2, %45, %c0_25] : memref<4x8x8xf32, #tpu.memory_space<vmem>>, vector<1x8x8xf32>
    %47 = vector.shape_cast %46 : vector<1x8x8xf32> to vector<8x8xf32>
    %c2_26 = arith.constant 2 : index
    %c0_27 = arith.constant 0 : index
    %c0_28 = arith.constant 0 : index
    %48 = vector.load %arg7[%c2_26, %c0_27, %c0_28] : memref<4x8x8xf32, #tpu.memory_space<vmem>>, vector<1x8x8xf32>
    %49 = vector.shape_cast %48 : vector<1x8x8xf32> to vector<8x8xf32>
    %cst_29 = arith.constant dense<0.000000e+00> : vector<8x8xf32>
    %50 = tpu.matmul %47, %49, %cst_29 {dimension_numbers = #tpu.dot_dimension_numbers<[1], [0], [0], [1], [0, 0, 1, 1], [], []>} : vector<8x8xf32>, vector<8x8xf32>, vector<8x8xf32> -> vector<8x8xf32>
    %cst_30 = arith.constant dense<0xFF800000> : vector<8xf32>
    %51 = vector.multi_reduction <maximumf>, %50, %cst_30 [1] : vector<8x8xf32> to vector<8xf32>
    %52 = vector.shape_cast %51 : vector<8xf32> to vector<8x1xf32>
    %53 = vector.broadcast %52 : vector<8x1xf32> to vector<8x8xf32>
    %54 = arith.subf %50, %53 : vector<8x8xf32>
    %55 = math.exp %54 : vector<8x8xf32>
    %cst_31 = arith.constant dense<0.000000e+00> : vector<8xf32>
    %56 = vector.multi_reduction <add>, %55, %cst_31 [1] : vector<8x8xf32> to vector<8xf32>
    %57 = vector.shape_cast %56 : vector<8xf32> to vector<8x1xf32>
    %58 = tpu.reciprocal %57 {approx = true} : vector<8x1xf32> -> vector<8x1xf32>
    %c2_32 = arith.constant 2 : index
    %c0_33 = arith.constant 0 : index
    %c0_34 = arith.constant 0 : index
    %59 = vector.load %arg8[%c2_32, %c0_33, %c0_34] : memref<4x8x8xf32, #tpu.memory_space<vmem>>, vector<1x8x8xf32>
    %60 = vector.shape_cast %59 : vector<1x8x8xf32> to vector<8x8xf32>
    %cst_35 = arith.constant dense<0.000000e+00> : vector<8x8xf32>
    %61 = tpu.matmul %55, %60, %cst_35 {dimension_numbers = #tpu.dot_dimension_numbers<[1], [0], [0], [1], [0, 0, 1, 1], [], []>} : vector<8x8xf32>, vector<8x8xf32>, vector<8x8xf32> -> vector<8x8xf32>
    %62 = vector.broadcast %58 : vector<8x1xf32> to vector<8x8xf32>
    %63 = arith.mulf %61, %62 : vector<8x8xf32>
    %c0_36 = arith.constant 0 : index
    %c16 = arith.constant 16 : index
    %64 = vector.load %arg9[%c0_36, %c16] : memref<8x32xf32, #tpu.memory_space<vmem>>, vector<8x8xf32>
    tpu.vector_store %arg9[%c0_36, %c16], %63 {strides = array<i32>} : memref<8x32xf32, #tpu.memory_space<vmem>>, vector<8x8xf32>,
    %c3 = arith.constant 3 : index
    %65 = arith.index_cast %4 : i32 to index
    %c0_37 = arith.constant 0 : index
    %66 = vector.load %arg6[%c3, %65, %c0_37] : memref<4x8x8xf32, #tpu.memory_space<vmem>>, vector<1x8x8xf32>
    %67 = vector.shape_cast %66 : vector<1x8x8xf32> to vector<8x8xf32>
    %c3_38 = arith.constant 3 : index
    %c0_39 = arith.constant 0 : index
    %c0_40 = arith.constant 0 : index
    %68 = vector.load %arg7[%c3_38, %c0_39, %c0_40] : memref<4x8x8xf32, #tpu.memory_space<vmem>>, vector<1x8x8xf32>
    %69 = vector.shape_cast %68 : vector<1x8x8xf32> to vector<8x8xf32>
    %cst_41 = arith.constant dense<0.000000e+00> : vector<8x8xf32>
    %70 = tpu.matmul %67, %69, %cst_41 {dimension_numbers = #tpu.dot_dimension_numbers<[1], [0], [0], [1], [0, 0, 1, 1], [], []>} : vector<8x8xf32>, vector<8x8xf32>, vector<8x8xf32> -> vector<8x8xf32>
    %cst_42 = arith.constant dense<0xFF800000> : vector<8xf32>
    %71 = vector.multi_reduction <maximumf>, %70, %cst_42 [1] : vector<8x8xf32> to vector<8xf32>
    %72 = vector.shape_cast %71 : vector<8xf32> to vector<8x1xf32>
    %73 = vector.broadcast %72 : vector<8x1xf32> to vector<8x8xf32>
    %74 = arith.subf %70, %73 : vector<8x8xf32>
    %75 = math.exp %74 : vector<8x8xf32>
    %cst_43 = arith.constant dense<0.000000e+00> : vector<8xf32>
    %76 = vector.multi_reduction <add>, %75, %cst_43 [1] : vector<8x8xf32> to vector<8xf32>
    %77 = vector.shape_cast %76 : vector<8xf32> to vector<8x1xf32>
    %78 = tpu.reciprocal %77 {approx = true} : vector<8x1xf32> -> vector<8x1xf32>
    %c3_44 = arith.constant 3 : index
    %c0_45 = arith.constant 0 : index
    %c0_46 = arith.constant 0 : index
    %79 = vector.load %arg8[%c3_44, %c0_45, %c0_46] : memref<4x8x8xf32, #tpu.memory_space<vmem>>, vector<1x8x8xf32>
    %80 = vector.shape_cast %79 : vector<1x8x8xf32> to vector<8x8xf32>
    %cst_47 = arith.constant dense<0.000000e+00> : vector<8x8xf32>
    %81 = tpu.matmul %75, %80, %cst_47 {dimension_numbers = #tpu.dot_dimension_numbers<[1], [0], [0], [1], [0, 0, 1, 1], [], []>} : vector<8x8xf32>, vector<8x8xf32>, vector<8x8xf32> -> vector<8x8xf32>
    %82 = vector.broadcast %78 : vector<8x1xf32> to vector<8x8xf32>
    %83 = arith.mulf %81, %82 : vector<8x8xf32>
    %c0_48 = arith.constant 0 : index
    %c24 = arith.constant 24 : index
    %84 = vector.load %arg9[%c0_48, %c24] : memref<8x32xf32, #tpu.memory_space<vmem>>, vector<8x8xf32>
    tpu.vector_store %arg9[%c0_48, %c24], %83 {strides = array<i32>} : memref<8x32xf32, #tpu.memory_space<vmem>>, vector<8x8xf32>,
    %c0_49 = arith.constant 0 : index
    %c0_50 = arith.constant 0 : index
    %85 = vector.load %arg9[%c0_49, %c0_50] : memref<8x32xf32, #tpu.memory_space<vmem>>, vector<8x32xf32>
    %c0_51 = arith.constant 0 : index
    %c0_52 = arith.constant 0 : index
    %86 = vector.load %arg4[%c0_51, %c0_52] : memref<32x32xf32, #tpu.memory_space<vmem>>, vector<32x32xf32>
    %cst_53 = arith.constant dense<0.000000e+00> : vector<8x32xf32>
    %87 = tpu.matmul %85, %86, %cst_53 {dimension_numbers = #tpu.dot_dimension_numbers<[1], [0], [0], [1], [0, 0, 1, 1], [], []>} : vector<8x32xf32>, vector<32x32xf32>, vector<8x32xf32> -> vector<8x32xf32>
    %c0_54 = arith.constant 0 : index
    %c0_55 = arith.constant 0 : index
    %c0_56 = arith.constant 0 : index
    %88 = vector.load %arg5[%c0_54, %c0_55, %c0_56] : memref<1x8x32xf32, #tpu.memory_space<vmem>>, vector<1x8x32xf32>
    %89 = vector.shape_cast %88 : vector<1x8x32xf32> to vector<8x32xf32>
    %90 = vector.shape_cast %87 : vector<8x32xf32> to vector<1x8x32xf32>
    tpu.vector_store %arg5[%c0_54, %c0_55, %c0_56], %90 {strides = array<i32>} : memref<1x8x32xf32, #tpu.memory_space<vmem>>, vector<1x8x32xf32>,
    return
  }
  func.func @transform_0(%arg0: i32, %arg1: i32) -> (i32, i32, i32) {
    %c0_i32 = arith.constant 0 : i32
    %c0_i32_0 = arith.constant 0 : i32
    %c0_i32_1 = arith.constant 0 : i32
    return %arg0, %c0_i32, %c0_i32_0 : i32, i32, i32
  }
  func.func @transform_1(%arg0: i32, %arg1: i32) -> (i32, i32) {
    %c0_i32 = arith.constant 0 : i32
    %c0_i32_0 = arith.constant 0 : i32
    %c0_i32_1 = arith.constant 0 : i32
    return %c0_i32, %c0_i32_0 : i32, i32
  }
  func.func @transform_2(%arg0: i32, %arg1: i32) -> (i32, i32) {
    %c0_i32 = arith.constant 0 : i32
    %c0_i32_0 = arith.constant 0 : i32
    %c0_i32_1 = arith.constant 0 : i32
    return %c0_i32, %c0_i32_0 : i32, i32
  }
  func.func @transform_3(%arg0: i32, %arg1: i32) -> (i32, i32, i32) {
    %c0_i32 = arith.constant 0 : i32
    %c0_i32_0 = arith.constant 0 : i32
    return %arg0, %arg1, %c0_i32 : i32, i32, i32
  }
}

</mosaic_0001>

<llo_original>
// kernel: tpu_custom_call.1
$region0: #{tpu_custom_call.1}
  #allocation0 [shape = 'u32[]', space=smem, size = 0x4, offset = 0x4, fixed_abs, tag = 'smem constant byte address 0x4 - core index']
  #allocation1 [shape = 'u32[144,128]{1,0:T(1,128)}', space=vmem, size = 0x12000, scoped, tag = 'internal scratch']
  #allocation2 [shape = 'f32[4,8,8]{2,1,0:T(8,128)}', space=vmem, size = 0x4000, scoped, tag = 'scratch operand']
  #allocation3 [shape = 'f32[4,8,8]{2,1,0:T(8,128)}', space=vmem, size = 0x4000, scoped, tag = 'scratch operand']
  #allocation4 [shape = 'f32[4,8,8]{2,1,0:T(8,128)}', space=vmem, size = 0x4000, scoped, tag = 'scratch operand']
  #allocation5 [shape = 'f32[8,32]{1,0:T(8,128)}', space=vmem, size = 0x1000, scoped, tag = 'scratch operand']
  %s0 = inlined_call_operand.hbm [shape: f32[2,8,32], index: 0, kind: input, shape index: {}]
  %s1 = inlined_call_operand.hbm [shape: f32[32,96], index: 1, kind: input, shape index: {}]
  %s2 = inlined_call_operand.hbm [shape: f32[32,32], index: 2, kind: input, shape index: {}]
  %s3 = inlined_call_operand.hbm [shape: f32[2,8,32], index: 3, kind: output, shape index: {}]
  %s4 = sld [smem:[#allocation0]]
  $region61: #{tpu_custom_call.1} parent=0
    _
  %s6 = ssub.s32 1, %s4
  %s7 = scalar_select 0, %s6, %s4
  $region1: #{tpu_custom_call.1} parent=0
    #allocation6 [shape = 'u8[4096]{0}', space=vmem, size = 0x1000, scoped, tag = 'input window, operand 0, single buffered']
    #allocation7 [shape = 's32[2]{0}', space=sflag, size = 0x8, scoped, tag = 'scoped memory for tpu_custom_call.1']
    #allocation8 [shape = 's32[2]{0}', space=sflag, size = 0x8, scoped, tag = 'scoped memory for tpu_custom_call.1']
    #allocation9 [shape = 'u8[16384]{0}', space=vmem, size = 0x4000, scoped, tag = 'input window, operand 1, single buffered']
    #allocation10 [shape = 's32[1]{0}', space=sflag, size = 0x4, scoped, tag = 'scoped memory for tpu_custom_call.1']
    #allocation11 [shape = 'u8[16384]{0}', space=vmem, size = 0x4000, scoped, tag = 'input window, operand 2, single buffered']
    #allocation12 [shape = 'u8[8192]{0}', space=vmem, size = 0x2000, scoped, tag = 'output window, operand 0']
    %8 = vsyncpa [#allocation7], 0
    %9 = vsyncpa [#allocation10], 0
    %10 = vsyncpa [#allocation8], 0
    %s11 = scalar_lea.sflag [#allocation8], 1
    %12 = vsyncpa %s11, 0
    loop: start=0, step=1, limit=4
    $region2: #{tpu_custom_call.1} parent=1 // loop_pre_header
      _
    $region3: #{tpu_custom_call.1} parent=1 // loop_header
      %s14 = sphi 0, %s18
      %p15 = scmp.ge.s32.totalorder %s14, 4
      %s21 = sphi 0, %s33
      %s22 = sphi 0, %s29
      %s23 = sphi 0, %s21
      %s24 = sphi 0, %s22
      %s25 = sphi 0, %s23
      %s26 = sphi 0, %s24
      %s36 = sphi 0, %s38
      %s39 = sphi 0, %s36
      %s40 = sphi 0, %s39
      %s56 = sphi 0, %s40
      %s60 = sphi 0, %s60
      %s62 = sphi 0, %s60
      %s63 = sphi 0, %s62
      %s77 = sphi 0, %s63
      %s81 = sphi 0, %s81
      %s83 = sphi 0, %s81
      %s84 = sphi 0, %s83
      %s98 = sphi 0, %s84
      %s106 = sphi 0, %s108
      %s109 = sphi 0, %s106
      %s110 = sphi 0, %s109
      %s126 = sphi 0, %s110
    $region4: #{tpu_custom_call.1} parent=1 // loop_header_branch
      %17 = sbr.rel (%p15) target = $region8
    $region5: #{tpu_custom_call.1} parent=1 // loop_body
      %s19 = ssub.s32 %s14, 1
      %s20 = ssub.s32 %s14, 2
      %s27 = sadd.s32 1, %s22
      %p28 = scmp.ge.s32.totalorder %s27, 1
      %s29 = scalar_select %p28, 0, %s27
      %s30 = sadd.s32 1, %s21
      %s31 = scalar_select %p28, %s30, %s21
      %p32 = scmp.ge.s32.totalorder %s31, 2
      %s33 = scalar_select %p32, 0, %s31
      %s34 = ssub.s32 %s21, %s33
      %p35 = scmp.eq.s32.totalorder %s34, 0
      %s37 = sadd.s32 %s36, 1
      %s38 = scalar_select %p35, %s36, %s37
      %p41 = pneg %p35
      %p42 = scmp.eq.s32.totalorder %s14, 1
      %p43 = por %p41, %p42
      %p44 = scmp.ne.s32.totalorder %s36, %s39
      %p45 = scmp.eq.s32.totalorder %s14, 0
      %p46 = por %p44, %p45
      %p47 = scmp.ne.s32.totalorder %s36, %s39
      %p48 = scmp.eq.s32.totalorder %s19, 1
      %p49 = por %p47, %p48
      %p50 = scmp.ne.s32.totalorder %s39, %s40
      %p51 = scmp.eq.s32.totalorder %s19, 0
      %p52 = por %p50, %p51
      %p53 = scmp.ne.s32.totalorder %s39, %s40
      %p54 = scmp.eq.s32.totalorder %s20, 1
      %p55 = por %p53, %p54
      %p57 = scmp.ne.s32.totalorder %s40, %s56
      %p58 = scmp.eq.s32.totalorder %s20, 0
      %p59 = por %p57, %p58
      %s61 = sadd.s32 %s60, 1
      %p64 = scmp.eq.s32.totalorder %s14, 1
      %p65 = scmp.ne.s32.totalorder %s60, %s62
      %p66 = scmp.eq.s32.totalorder %s14, 0
      %p67 = por %p65, %p66
      %p68 = scmp.ne.s32.totalorder %s60, %s62
      %p69 = scmp.eq.s32.totalorder %s19, 1
      %p70 = por %p68, %p69
      %p71 = scmp.ne.s32.totalorder %s62, %s63
      %p72 = scmp.eq.s32.totalorder %s19, 0
      %p73 = por %p71, %p72
      %p74 = scmp.ne.s32.totalorder %s62, %s63
      %p75 = scmp.eq.s32.totalorder %s20, 1
      %p76 = por %p74, %p75
      %p78 = scmp.ne.s32.totalorder %s63, %s77
      %p79 = scmp.eq.s32.totalorder %s20, 0
      %p80 = por %p78, %p79
      %s82 = sadd.s32 %s81, 1
      %p85 = scmp.eq.s32.totalorder %s14, 1
      %p86 = scmp.ne.s32.totalorder %s81, %s83
      %p87 = scmp.eq.s32.totalorder %s14, 0
      %p88 = por %p86, %p87
      %p89 = scmp.ne.s32.totalorder %s81, %s83
      %p90 = scmp.eq.s32.totalorder %s19, 1
      %p91 = por %p89, %p90
      %p92 = scmp.ne.s32.totalorder %s83, %s84
      %p93 = scmp.eq.s32.totalorder %s19, 0
      %p94 = por %p92, %p93
      %p95 = scmp.ne.s32.totalorder %s83, %s84
      %p96 = scmp.eq.s32.totalorder %s20, 1
      %p97 = por %p95, %p96
      %p99 = scmp.ne.s32.totalorder %s84, %s98
      %p100 = scmp.eq.s32.totalorder %s20, 0
      %p101 = por %p99, %p100
      %s102 = ssub.s32 %s21, %s33
      %s103 = ssub.s32 %s22, %s29
      %s104 = sor.u32 %s102, %s103
      %p105 = scmp.eq.s32.totalorder %s104, 0
      %s107 = sadd.s32 %s106, 1
      %s108 = scalar_select %p105, %s106, %s107
      %p111 = pneg %p105
      %p112 = scmp.eq.s32.totalorder %s14, 1
      %p113 = por %p111, %p112
      %p114 = scmp.ne.s32.totalorder %s106, %s109
      %p115 = scmp.eq.s32.totalorder %s14, 0
      %p116 = por %p114, %p115
      %p117 = scmp.ne.s32.totalorder %s106, %s109
      %p118 = scmp.eq.s32.totalorder %s19, 1
      %p119 = por %p117, %p118
      %p120 = scmp.ne.s32.totalorder %s109, %s110
      %p121 = scmp.eq.s32.totalorder %s19, 0
      %p122 = por %p120, %p121
      %p123 = scmp.ne.s32.totalorder %s109, %s110
      %p124 = scmp.eq.s32.totalorder %s20, 1
      %p125 = por %p123, %p124
      %p127 = scmp.ne.s32.totalorder %s110, %s126
      %p128 = scmp.eq.s32.totalorder %s20, 0
      %p129 = por %p127, %p128
      %p130 = scmp.le.s32.totalorder 1, %s14
      %p131 = scmp.lt.s32.totalorder %s14, 3
      %p132 = pnand %p130, %p131
      %p133 = pneg %p132
      // Predicated region
      $region9: #{tpu_custom_call.1} parent=5 // pred_check
        _
      $region10: #{tpu_custom_call.1} parent=5 // pred_check_branch
        %135 = sbr.rel (%p132) target = $region12
      $region11: #{tpu_custom_call.1} parent=5 // pred_region
        %s136 = ssub.s32 %s14, 1
        // Predicated region
        $region13: #{tpu_custom_call.1} parent=11 // pred_check
          %p137 = pneg %p52
        $region14: #{tpu_custom_call.1} parent=11 // pred_check_branch
          %139 = sbr.rel (%p137) target = $region16
        $region15: #{tpu_custom_call.1} parent=11 // pred_region
          %s141 = ssub.s32 128, 128
          %142 = vsyncadd [#allocation7], %s141
          %s143 = smul.addr %s23, 128
          %s144 = scalar_lea.hbm %s0, %s143
          %s146 = sshll.u32 [#allocation6], 4
          %s147 = int_to_ptr.vmem [resolvable:$true] %s146
          %149 = dma.hbm_to_vmem [thread:$0]  %s144, 128, %s147, [#allocation7]
        $region16: #{tpu_custom_call.1} parent=11 // pred_fallthru
          _
        // Predicated region
        $region17: #{tpu_custom_call.1} parent=11 // pred_check
          %p150 = pneg %p73
        $region18: #{tpu_custom_call.1} parent=11 // pred_check_branch
          %152 = sbr.rel (%p150) target = $region20
        $region19: #{tpu_custom_call.1} parent=11 // pred_region
          %s154 = ssub.s32 512, 512
          %155 = vsyncadd [#allocation10], %s154
          %s156 = sshll.u32 [#allocation9], 4
          %s157 = int_to_ptr.vmem [resolvable:$true] %s156
          %162 = dma.hbm_to_vmem [thread:$0]  %s1, 512, %s157, [#allocation10], 128, 128, 8
        $region20: #{tpu_custom_call.1} parent=11 // pred_fallthru
          _
        // Predicated region
        $region21: #{tpu_custom_call.1} parent=11 // pred_check
          %p163 = pneg %p94
        $region22: #{tpu_custom_call.1} parent=11 // pred_check_branch
          %165 = sbr.rel (%p163) target = $region24
        $region23: #{tpu_custom_call.1} parent=11 // pred_region
          %s167 = ssub.s32 512, 512
          %168 = vsyncadd [#allocation10], %s167
          %s169 = sshll.u32 [#allocation11], 4
          %s170 = int_to_ptr.vmem [resolvable:$true] %s169
          %175 = dma.hbm_to_vmem [thread:$0]  %s2, 512, %s170, [#allocation10], 128, 128, 8
        $region24: #{tpu_custom_call.1} parent=11 // pred_fallthru
          _
      $region12: #{tpu_custom_call.1} parent=5 // pred_fallthru
        _
      %p176 = scmp.lt.s32.totalorder %s14, 2
      // Predicated region
      $region25: #{tpu_custom_call.1} parent=5 // pred_check
        %p177 = pneg %p176
      $region26: #{tpu_custom_call.1} parent=5 // pred_check_branch
        %179 = sbr.rel (%p177) target = $region28
      $region27: #{tpu_custom_call.1} parent=5 // pred_region
        _
      $region28: #{tpu_custom_call.1} parent=5 // pred_fallthru
        _
      %p180 = scmp.le.s32.totalorder 1, %s14
      %p181 = scmp.lt.s32.totalorder %s14, 3
      %p182 = pnand %p180, %p181
      %p183 = pneg %p182
      // Predicated region
      $region29: #{tpu_custom_call.1} parent=5 // pred_check
        _
      $region30: #{tpu_custom_call.1} parent=5 // pred_check_branch
        %185 = sbr.rel (%p182) target = $region32
      $region31: #{tpu_custom_call.1} parent=5 // pred_region
        %s186 = ssub.s32 %s14, 1
        // Predicated region
        $region33: #{tpu_custom_call.1} parent=31 // pred_check
          %p187 = pneg %p52
        $region34: #{tpu_custom_call.1} parent=31 // pred_check_branch
          %189 = sbr.rel (%p187) target = $region36
        $region35: #{tpu_custom_call.1} parent=31 // pred_region
          %190 = dma.done [#allocation7], 128
        $region36: #{tpu_custom_call.1} parent=31 // pred_fallthru
          _
        // Predicated region
        $region37: #{tpu_custom_call.1} parent=31 // pred_check
          %p191 = pneg %p73
        $region38: #{tpu_custom_call.1} parent=31 // pred_check_branch
          %193 = sbr.rel (%p191) target = $region40
        $region39: #{tpu_custom_call.1} parent=31 // pred_region
          %194 = dma.done [#allocation10], 512
        $region40: #{tpu_custom_call.1} parent=31 // pred_fallthru
          _
        // Predicated region
        $region41: #{tpu_custom_call.1} parent=31 // pred_check
          %p195 = pneg %p94
        $region42: #{tpu_custom_call.1} parent=31 // pred_check_branch
          %197 = sbr.rel (%p195) target = $region44
        $region43: #{tpu_custom_call.1} parent=31 // pred_region
          %198 = dma.done [#allocation10], 512
        $region44: #{tpu_custom_call.1} parent=31 // pred_fallthru
          _
        %p199 = pneg %p52
        %p200 = pneg %p49
        %p201 = pneg %p73
        %p202 = pneg %p70
        %p203 = pneg %p94
        %p204 = pneg %p91
        %p205 = pneg %p122
        %p206 = pneg %p119
        %s207 = sand.u32 %s109, 1
        %s208 = scalar_lea.sflag [#allocation8], %s207
        %s209 = sand.u32 %s109, 1
        %s210 = smul.addr %s209, 8
        %s211 = scalar_lea.vmem [#allocation12], %s210
        %p212 = scmp.eq.s32.totalorder %s24, 0
        // Predicated region
        $region45: #{tpu_custom_call.1} parent=31 // pred_check
          %p213 = pneg %p212
        $region46: #{tpu_custom_call.1} parent=31 // pred_check_branch
          %215 = sbr.rel (%p213) target = $region48
        $region47: #{tpu_custom_call.1} parent=31 // pred_region
          %v216 = vld [vmem:[#allocation6] sm:$0xff]
          %v217 = vld [vmem:[#allocation9] sm:$0xff]
          %v218 = vld [vmem:[#allocation9 + $0x8] sm:$0xff]
          %v219 = vld [vmem:[#allocation9 + $0x10] sm:$0xff]
          %v220 = vld [vmem:[#allocation9 + $0x18] sm:$0xff]
          %vm221 = vcmask 261120
          %v223 = vsel %vm221, %v216, 0
          %225 = vmatprep.subr.mxu0 0.0
          %226 = vmatpush1.msra.mxu0 0.0
          %227 = vmatprep.subr.mxu0 0.0
          %228 = vmatpush1.msra.mxu0 0.0
          %229 = vmatprep.subr.mxu0 0.0
          %230 = vmatpush1.msra.mxu0 0.0
          %231 = vmatprep.subr.mxu0 0.0
          %232 = vmatpush1.msra.mxu0 0.0
          %233 = vmatprep.subr.mxu0 0.0
          %234 = vmatpush1.msra.mxu0 0.0
          %235 = vmatprep.subr.mxu0 0.0
          %236 = vmatpush1.msra.mxu0 0.0
          %237 = vmatprep.subr.mxu0 0.0
          %238 = vmatpush1.msra.mxu0 0.0
          %239 = vmatprep.subr.mxu0 0.0
          %240 = vmatpush1.msra.mxu0 0.0
          %241 = vmatprep.subr.mxu0 0.0
          %242 = vmatpush1.msra.mxu0 0.0
          %243 = vmatprep.subr.mxu0 0.0
          %244 = vmatpush1.msra.mxu0 0.0
          %245 = vmatprep.subr.mxu0 0.0
          %246 = vmatpush1.msra.mxu0 0.0
          %247 = vmatprep.subr.mxu0 0.0
          %248 = vmatpush1.msra.mxu0 0.0
          %249 = vmatprep.subr.mxu0 0.0
          %250 = vmatpush1.msra.mxu0 %v220
          %251 = vmatprep.subr.mxu0 0.0
          %252 = vmatpush1.msra.mxu0 %v219
          %253 = vmatprep.subr.mxu0 0.0
          %254 = vmatpush1.msra.mxu0 %v218
          %255 = vmatprep.subr.mxu0 0.0
          %256 = vmatpush1.msra.mxu0 %v217
          %257 = vmatprep.subr.mxu0 0.0
          %258 = vmatpush2.msra.mxu0 0.0
          %259 = vmatprep.subr.mxu0 0.0
          %260 = vmatpush2.msra.mxu0 0.0
          %261 = vmatprep.subr.mxu0 0.0
          %262 = vmatpush2.msra.mxu0 0.0
          %263 = vmatprep.subr.mxu0 0.0
          %264 = vmatpush2.msra.mxu0 0.0
          %265 = vmatprep.subr.mxu0 0.0
          %266 = vmatpush2.msra.mxu0 0.0
          %267 = vmatprep.subr.mxu0 0.0
          %268 = vmatpush2.msra.mxu0 0.0
          %269 = vmatprep.subr.mxu0 0.0
          %270 = vmatpush2.msra.mxu0 0.0
          %271 = vmatprep.subr.mxu0 0.0
          %272 = vmatpush2.msra.mxu0 0.0
          %273 = vmatprep.subr.mxu0 0.0
          %274 = vmatpush2.msra.mxu0 0.0
          %275 = vmatprep.subr.mxu0 0.0
          %276 = vmatpush2.msra.mxu0 0.0
          %277 = vmatprep.subr.mxu0 0.0
          %278 = vmatpush2.msra.mxu0 0.0
          %279 = vmatprep.subr.mxu0 0.0
          %280 = vmatpush2.msra.mxu0 0.0
          %281 = vmatprep.subr.mxu0 0.0
          %282 = vmatpush2.msra.mxu0 0.0
          %283 = vmatprep.subr.mxu0 0.0
          %284 = vmatpush2.msra.mxu0 0.0
          %285 = vmatprep.subr.mxu0 0.0
          %286 = vmatpush2.msra.mxu0 0.0
          %287 = vmatprep.subr.mxu0 0.0
          %288 = vmatpush2.msra.mxu0 0.0
          %289 = vmatprep.mubr.f32.mxu0 0.0
          %290 = vmatmul.mubr.f32.gmra.mxu0 %v223
          %v291 = vpop.f32.mrf.mxu0
          %v292 = vadd.f32 0.0, %v291
          %v293 = vpop.f32.mrf.mxu0
          %294 = vdwg.mxu0
          %299 = vrot.lane.b32.xlu0 %v217, 96
          %v300 = vpop.permute.xlu0 %299
          %301 = vrot.lane.b32.xlu0 %v218, 96
          %v302 = vpop.permute.xlu0 %301
          %303 = vrot.lane.b32.xlu0 %v219, 96
          %v304 = vpop.permute.xlu0 %303
          %305 = vrot.lane.b32.xlu0 %v220, 96
          %v306 = vpop.permute.xlu0 %305
          %311 = vmatprep.subr.mxu0 0.0
          %312 = vmatpush1.msra.mxu0 0.0
          %313 = vmatprep.subr.mxu0 0.0
          %314 = vmatpush1.msra.mxu0 0.0
          %315 = vmatprep.subr.mxu0 0.0
          %316 = vmatpush1.msra.mxu0 0.0
          %317 = vmatprep.subr.mxu0 0.0
          %318 = vmatpush1.msra.mxu0 0.0
          %319 = vmatprep.subr.mxu0 0.0
          %320 = vmatpush1.msra.mxu0 0.0
          %321 = vmatprep.subr.mxu0 0.0
          %322 = vmatpush1.msra.mxu0 0.0
          %323 = vmatprep.subr.mxu0 0.0
          %324 = vmatpush1.msra.mxu0 0.0
          %325 = vmatprep.subr.mxu0 0.0
          %326 = vmatpush1.msra.mxu0 0.0
          %327 = vmatprep.subr.mxu0 0.0
          %328 = vmatpush1.msra.mxu0 0.0
          %329 = vmatprep.subr.mxu0 0.0
          %330 = vmatpush1.msra.mxu0 0.0
          %331 = vmatprep.subr.mxu0 0.0
          %332 = vmatpush1.msra.mxu0 0.0
          %333 = vmatprep.subr.mxu0 0.0
          %334 = vmatpush1.msra.mxu0 0.0
          %335 = vmatprep.subr.mxu0 0.0
          %336 = vmatpush1.msra.mxu0 %v306
          %337 = vmatprep.subr.mxu0 0.0
          %338 = vmatpush1.msra.mxu0 %v304
          %339 = vmatprep.subr.mxu0 0.0
          %340 = vmatpush1.msra.mxu0 %v302
          %341 = vmatprep.subr.mxu0 0.0
          %342 = vmatpush1.msra.mxu0 %v300
          %343 = vmatprep.subr.mxu0 0.0
          %344 = vmatpush2.msra.mxu0 0.0
          %345 = vmatprep.subr.mxu0 0.0
          %346 = vmatpush2.msra.mxu0 0.0
          %347 = vmatprep.subr.mxu0 0.0
          %348 = vmatpush2.msra.mxu0 0.0
          %349 = vmatprep.subr.mxu0 0.0
          %350 = vmatpush2.msra.mxu0 0.0
          %351 = vmatprep.subr.mxu0 0.0
          %352 = vmatpush2.msra.mxu0 0.0
          %353 = vmatprep.subr.mxu0 0.0
          %354 = vmatpush2.msra.mxu0 0.0
          %355 = vmatprep.subr.mxu0 0.0
          %356 = vmatpush2.msra.mxu0 0.0
          %357 = vmatprep.subr.mxu0 0.0
          %358 = vmatpush2.msra.mxu0 0.0
          %359 = vmatprep.subr.mxu0 0.0
          %360 = vmatpush2.msra.mxu0 0.0
          %361 = vmatprep.subr.mxu0 0.0
          %362 = vmatpush2.msra.mxu0 0.0
          %363 = vmatprep.subr.mxu0 0.0
          %364 = vmatpush2.msra.mxu0 0.0
          %365 = vmatprep.subr.mxu0 0.0
          %366 = vmatpush2.msra.mxu0 0.0
          %367 = vmatprep.subr.mxu0 0.0
          %368 = vmatpush2.msra.mxu0 0.0
          %369 = vmatprep.subr.mxu0 0.0
          %370 = vmatpush2.msra.mxu0 0.0
          %371 = vmatprep.subr.mxu0 0.0
          %372 = vmatpush2.msra.mxu0 0.0
          %373 = vmatprep.subr.mxu0 0.0
          %374 = vmatpush2.msra.mxu0 0.0
          %375 = vmatprep.mubr.f32.mxu0 0.0
          %376 = vmatmul.mubr.f32.gmra.mxu0 %v223
          %v377 = vpop.f32.mrf.mxu0
          %v378 = vadd.f32 0.0, %v377
          %v379 = vpop.f32.mrf.mxu0
          %380 = vdwg.mxu0
          %381 = vrot.lane.b32.xlu0 %v217, 64
          %v382 = vpop.permute.xlu0 %381
          %383 = vrot.lane.b32.xlu0 %v218, 64
          %v384 = vpop.permute.xlu0 %383
          %385 = vrot.lane.b32.xlu0 %v219, 64
          %v386 = vpop.permute.xlu0 %385
          %387 = vrot.lane.b32.xlu0 %v220, 64
          %v388 = vpop.permute.xlu0 %387
          %393 = vmatprep.subr.mxu0 0.0
          %394 = vmatpush1.msra.mxu0 0.0
          %395 = vmatprep.subr.mxu0 0.0
          %396 = vmatpush1.msra.mxu0 0.0
          %397 = vmatprep.subr.mxu0 0.0
          %398 = vmatpush1.msra.mxu0 0.0
          %399 = vmatprep.subr.mxu0 0.0
          %400 = vmatpush1.msra.mxu0 0.0
          %401 = vmatprep.subr.mxu0 0.0
          %402 = vmatpush1.msra.mxu0 0.0
          %403 = vmatprep.subr.mxu0 0.0
          %404 = vmatpush1.msra.mxu0 0.0
          %405 = vmatprep.subr.mxu0 0.0
          %406 = vmatpush1.msra.mxu0 0.0
          %407 = vmatprep.subr.mxu0 0.0
          %408 = vmatpush1.msra.mxu0 0.0
          %409 = vmatprep.subr.mxu0 0.0
          %410 = vmatpush1.msra.mxu0 0.0
          %411 = vmatprep.subr.mxu0 0.0
          %412 = vmatpush1.msra.mxu0 0.0
          %413 = vmatprep.subr.mxu0 0.0
          %414 = vmatpush1.msra.mxu0 0.0
          %415 = vmatprep.subr.mxu0 0.0
          %416 = vmatpush1.msra.mxu0 0.0
          %417 = vmatprep.subr.mxu0 0.0
          %418 = vmatpush1.msra.mxu0 %v388
          %419 = vmatprep.subr.mxu0 0.0
          %420 = vmatpush1.msra.mxu0 %v386
          %421 = vmatprep.subr.mxu0 0.0
          %422 = vmatpush1.msra.mxu0 %v384
          %423 = vmatprep.subr.mxu0 0.0
          %424 = vmatpush1.msra.mxu0 %v382
          %425 = vmatprep.subr.mxu0 0.0
          %426 = vmatpush2.msra.mxu0 0.0
          %427 = vmatprep.subr.mxu0 0.0
          %428 = vmatpush2.msra.mxu0 0.0
          %429 = vmatprep.subr.mxu0 0.0
          %430 = vmatpush2.msra.mxu0 0.0
          %431 = vmatprep.subr.mxu0 0.0
          %432 = vmatpush2.msra.mxu0 0.0
          %433 = vmatprep.subr.mxu0 0.0
          %434 = vmatpush2.msra.mxu0 0.0
          %435 = vmatprep.subr.mxu0 0.0
          %436 = vmatpush2.msra.mxu0 0.0
          %437 = vmatprep.subr.mxu0 0.0
          %438 = vmatpush2.msra.mxu0 0.0
          %439 = vmatprep.subr.mxu0 0.0
          %440 = vmatpush2.msra.mxu0 0.0
          %441 = vmatprep.subr.mxu0 0.0
          %442 = vmatpush2.msra.mxu0 0.0
          %443 = vmatprep.subr.mxu0 0.0
          %444 = vmatpush2.msra.mxu0 0.0
          %445 = vmatprep.subr.mxu0 0.0
          %446 = vmatpush2.msra.mxu0 0.0
          %447 = vmatprep.subr.mxu0 0.0
          %448 = vmatpush2.msra.mxu0 0.0
          %449 = vmatprep.subr.mxu0 0.0
          %450 = vmatpush2.msra.mxu0 0.0
          %451 = vmatprep.subr.mxu0 0.0
          %452 = vmatpush2.msra.mxu0 0.0
          %453 = vmatprep.subr.mxu0 0.0
          %454 = vmatpush2.msra.mxu0 0.0
          %455 = vmatprep.subr.mxu0 0.0
          %456 = vmatpush2.msra.mxu0 0.0
          %457 = vmatprep.mubr.f32.mxu0 0.0
          %458 = vmatmul.mubr.f32.gmra.mxu0 %v223
          %v459 = vpop.f32.mrf.mxu0
          %v460 = vadd.f32 0.0, %v459
          %v461 = vpop.f32.mrf.mxu0
          %462 = vdwg.mxu0
          %vm463 = vcmask 64512
          %464 = vst.msk [vmem:[#allocation2] sm:$0xff] %vm463, %v292
          %465 = vxpose.xlu0.b32.start [1/16] %v378, 128
          %466 = vxpose.xlu0.b32.cont [2/16] 0.0, 128
          %467 = vxpose.xlu0.b32.cont [3/16] 0.0, 128
          %468 = vxpose.xlu0.b32.cont [4/16] 0.0, 128
          %469 = vxpose.xlu0.b32.cont [5/16] 0.0, 128
          %470 = vxpose.xlu0.b32.cont [6/16] 0.0, 128
          %471 = vxpose.xlu0.b32.cont [7/16] 0.0, 128
          %472 = vxpose.xlu0.b32.cont [8/16] 0.0, 128
          %473 = vxpose.xlu0.b32.cont [9/16] 0.0, 128
          %474 = vxpose.xlu0.b32.cont [10/16] 0.0, 128
          %475 = vxpose.xlu0.b32.cont [11/16] 0.0, 128
          %476 = vxpose.xlu0.b32.cont [12/16] 0.0, 128
          %477 = vxpose.xlu0.b32.cont [13/16] 0.0, 128
          %478 = vxpose.xlu0.b32.cont [14/16] 0.0, 128
          %479 = vxpose.xlu0.b32.cont [15/16] 0.0, 128
          %480 = vxpose.xlu0.b32.end [16/16] 0.0, 128
          %v481 = vpop.trf.xlu0
          %v482 = vpop.trf.xlu0
          %v483 = vpop.trf.xlu0
          %v484 = vpop.trf.xlu0
          %v485 = vpop.trf.xlu0
          %v486 = vpop.trf.xlu0
          %v487 = vpop.trf.xlu0
          %v488 = vpop.trf.xlu0
          %v489 = vpop.trf.xlu0
          %v490 = vpop.trf.xlu0
          %v491 = vpop.trf.xlu0
          %v492 = vpop.trf.xlu0
          %v493 = vpop.trf.xlu0
          %v494 = vpop.trf.xlu0
          %v495 = vpop.trf.xlu0
          %v496 = vpop.trf.xlu0
          %497 = vst.msk [vmem:[#allocation3] sm:$0xff] %vm463, %v481
          %498 = vst.msk [vmem:[#allocation4] sm:$0xff] %vm463, %v460
          %500 = vrot.lane.b32.xlu0 %v292, 120
          %v501 = vpop.permute.xlu0 %500
          %s503 = scalar_lea.vmem [#allocation2], 8
          %504 = vst.msk [vmem:[%s503] sm:$0xff] %vm463, %v501
          %506 = vrot.lane.b32.xlu0 %v378, 120
          %v507 = vpop.permute.xlu0 %506
          %509 = vxpose.xlu0.b32.start [1/16] %v507, 128
          %510 = vxpose.xlu0.b32.cont [2/16] 0.0, 128
          %511 = vxpose.xlu0.b32.cont [3/16] 0.0, 128
          %512 = vxpose.xlu0.b32.cont [4/16] 0.0, 128
          %513 = vxpose.xlu0.b32.cont [5/16] 0.0, 128
          %514 = vxpose.xlu0.b32.cont [6/16] 0.0, 128
          %515 = vxpose.xlu0.b32.cont [7/16] 0.0, 128
          %516 = vxpose.xlu0.b32.cont [8/16] 0.0, 128
          %517 = vxpose.xlu0.b32.cont [9/16] 0.0, 128
          %518 = vxpose.xlu0.b32.cont [10/16] 0.0, 128
          %519 = vxpose.xlu0.b32.cont [11/16] 0.0, 128
          %520 = vxpose.xlu0.b32.cont [12/16] 0.0, 128
          %521 = vxpose.xlu0.b32.cont [13/16] 0.0, 128
          %522 = vxpose.xlu0.b32.cont [14/16] 0.0, 128
          %523 = vxpose.xlu0.b32.cont [15/16] 0.0, 128
          %524 = vxpose.xlu0.b32.end [16/16] 0.0, 128
          %v525 = vpop.trf.xlu0
          %v526 = vpop.trf.xlu0
          %v527 = vpop.trf.xlu0
          %v528 = vpop.trf.xlu0
          %v529 = vpop.trf.xlu0
          %v530 = vpop.trf.xlu0
          %v531 = vpop.trf.xlu0
          %v532 = vpop.trf.xlu0
          %v533 = vpop.trf.xlu0
          %v534 = vpop.trf.xlu0
          %v535 = vpop.trf.xlu0
          %v536 = vpop.trf.xlu0
          %v537 = vpop.trf.xlu0
          %v538 = vpop.trf.xlu0
          %v539 = vpop.trf.xlu0
          %v540 = vpop.trf.xlu0
          %s541 = scalar_lea.vmem [#allocation3], 8
          %542 = vst.msk [vmem:[%s541] sm:$0xff] %vm463, %v525
          %544 = vrot.lane.b32.xlu0 %v460, 120
          %v545 = vpop.permute.xlu0 %544
          %s547 = scalar_lea.vmem [#allocation4], 8
          %548 = vst.msk [vmem:[%s547] sm:$0xff] %vm463, %v545
          %549 = vrot.lane.b32.xlu0 %v292, 112
          %v550 = vpop.permute.xlu0 %549
          %s552 = scalar_lea.vmem [#allocation2], 16
          %553 = vst.msk [vmem:[%s552] sm:$0xff] %vm463, %v550
          %554 = vrot.lane.b32.xlu0 %v378, 112
          %v555 = vpop.permute.xlu0 %554
          %557 = vxpose.xlu0.b32.start [1/16] %v555, 128
          %558 = vxpose.xlu0.b32.cont [2/16] 0.0, 128
          %559 = vxpose.xlu0.b32.cont [3/16] 0.0, 128
          %560 = vxpose.xlu0.b32.cont [4/16] 0.0, 128
          %561 = vxpose.xlu0.b32.cont [5/16] 0.0, 128
          %562 = vxpose.xlu0.b32.cont [6/16] 0.0, 128
          %563 = vxpose.xlu0.b32.cont [7/16] 0.0, 128
          %564 = vxpose.xlu0.b32.cont [8/16] 0.0, 128
          %565 = vxpose.xlu0.b32.cont [9/16] 0.0, 128
          %566 = vxpose.xlu0.b32.cont [10/16] 0.0, 128
          %567 = vxpose.xlu0.b32.cont [11/16] 0.0, 128
          %568 = vxpose.xlu0.b32.cont [12/16] 0.0, 128
          %569 = vxpose.xlu0.b32.cont [13/16] 0.0, 128
          %570 = vxpose.xlu0.b32.cont [14/16] 0.0, 128
          %571 = vxpose.xlu0.b32.cont [15/16] 0.0, 128
          %572 = vxpose.xlu0.b32.end [16/16] 0.0, 128
          %v573 = vpop.trf.xlu0
          %v574 = vpop.trf.xlu0
          %v575 = vpop.trf.xlu0
          %v576 = vpop.trf.xlu0
          %v577 = vpop.trf.xlu0
          %v578 = vpop.trf.xlu0
          %v579 = vpop.trf.xlu0
          %v580 = vpop.trf.xlu0
          %v581 = vpop.trf.xlu0
          %v582 = vpop.trf.xlu0
          %v583 = vpop.trf.xlu0
          %v584 = vpop.trf.xlu0
          %v585 = vpop.trf.xlu0
          %v586 = vpop.trf.xlu0
          %v587 = vpop.trf.xlu0
          %v588 = vpop.trf.xlu0
          %s589 = scalar_lea.vmem [#allocation3], 16
          %590 = vst.msk [vmem:[%s589] sm:$0xff] %vm463, %v573
          %591 = vrot.lane.b32.xlu0 %v460, 112
          %v592 = vpop.permute.xlu0 %591
          %s594 = scalar_lea.vmem [#allocation4], 16
          %595 = vst.msk [vmem:[%s594] sm:$0xff] %vm463, %v592
          %596 = vrot.lane.b32.xlu0 %v292, 104
          %v597 = vpop.permute.xlu0 %596
          %s599 = scalar_lea.vmem [#allocation2], 24
          %600 = vst.msk [vmem:[%s599] sm:$0xff] %vm463, %v597
          %601 = vrot.lane.b32.xlu0 %v378, 104
          %v602 = vpop.permute.xlu0 %601
          %604 = vxpose.xlu0.b32.start [1/16] %v602, 128
          %605 = vxpose.xlu0.b32.cont [2/16] 0.0, 128
          %606 = vxpose.xlu0.b32.cont [3/16] 0.0, 128
          %607 = vxpose.xlu0.b32.cont [4/16] 0.0, 128
          %608 = vxpose.xlu0.b32.cont [5/16] 0.0, 128
          %609 = vxpose.xlu0.b32.cont [6/16] 0.0, 128
          %610 = vxpose.xlu0.b32.cont [7/16] 0.0, 128
          %611 = vxpose.xlu0.b32.cont [8/16] 0.0, 128
          %612 = vxpose.xlu0.b32.cont [9/16] 0.0, 128
          %613 = vxpose.xlu0.b32.cont [10/16] 0.0, 128
          %614 = vxpose.xlu0.b32.cont [11/16] 0.0, 128
          %615 = vxpose.xlu0.b32.cont [12/16] 0.0, 128
          %616 = vxpose.xlu0.b32.cont [13/16] 0.0, 128
          %617 = vxpose.xlu0.b32.cont [14/16] 0.0, 128
          %618 = vxpose.xlu0.b32.cont [15/16] 0.0, 128
          %619 = vxpose.xlu0.b32.end [16/16] 0.0, 128
          %v620 = vpop.trf.xlu0
          %v621 = vpop.trf.xlu0
          %v622 = vpop.trf.xlu0
          %v623 = vpop.trf.xlu0
          %v624 = vpop.trf.xlu0
          %v625 = vpop.trf.xlu0
          %v626 = vpop.trf.xlu0
          %v627 = vpop.trf.xlu0
          %v628 = vpop.trf.xlu0
          %v629 = vpop.trf.xlu0
          %v630 = vpop.trf.xlu0
          %v631 = vpop.trf.xlu0
          %v632 = vpop.trf.xlu0
          %v633 = vpop.trf.xlu0
          %v634 = vpop.trf.xlu0
          %v635 = vpop.trf.xlu0
          %s636 = scalar_lea.vmem [#allocation3], 24
          %637 = vst.msk [vmem:[%s636] sm:$0xff] %vm463, %v620
          %638 = vrot.lane.b32.xlu0 %v460, 104
          %v639 = vpop.permute.xlu0 %638
          %s641 = scalar_lea.vmem [#allocation4], 24
          %642 = vst.msk [vmem:[%s641] sm:$0xff] %vm463, %v639
        $region48: #{tpu_custom_call.1} parent=31 // pred_fallthru
          _
        %s643 = smul.u32 %s24, 8
        %s644 = scalar_lea.vmem [#allocation2], %s643
        %v645 = vld [vmem:[%s644] sm:$0xff]
        %v646 = vld [vmem:[#allocation3] sm:$0xff]
        %vm647 = vcmask 64512
        %v649 = vsel %vm647, %v645, 0
        %651 = vmatprep.subr.mxu0 0.0
        %652 = vmatpush1.msra.mxu0 0.0
        %653 = vmatprep.subr.mxu0 0.0
        %654 = vmatpush1.msra.mxu0 0.0
        %655 = vmatprep.subr.mxu0 0.0
        %656 = vmatpush1.msra.mxu0 0.0
        %657 = vmatprep.subr.mxu0 0.0
        %658 = vmatpush1.msra.mxu0 0.0
        %659 = vmatprep.subr.mxu0 0.0
        %660 = vmatpush1.msra.mxu0 0.0
        %661 = vmatprep.subr.mxu0 0.0
        %662 = vmatpush1.msra.mxu0 0.0
        %663 = vmatprep.subr.mxu0 0.0
        %664 = vmatpush1.msra.mxu0 0.0
        %665 = vmatprep.subr.mxu0 0.0
        %666 = vmatpush1.msra.mxu0 0.0
        %667 = vmatprep.subr.mxu0 0.0
        %668 = vmatpush1.msra.mxu0 0.0
        %669 = vmatprep.subr.mxu0 0.0
        %670 = vmatpush1.msra.mxu0 0.0
        %671 = vmatprep.subr.mxu0 0.0
        %672 = vmatpush1.msra.mxu0 0.0
        %673 = vmatprep.subr.mxu0 0.0
        %674 = vmatpush1.msra.mxu0 0.0
        %675 = vmatprep.subr.mxu0 0.0
        %676 = vmatpush1.msra.mxu0 0.0
        %677 = vmatprep.subr.mxu0 0.0
        %678 = vmatpush1.msra.mxu0 0.0
        %679 = vmatprep.subr.mxu0 0.0
        %680 = vmatpush1.msra.mxu0 0.0
        %681 = vmatprep.subr.mxu0 0.0
        %682 = vmatpush1.msra.mxu0 %v646
        %683 = vmatprep.subr.mxu0 0.0
        %684 = vmatpush2.msra.mxu0 0.0
        %685 = vmatprep.subr.mxu0 0.0
        %686 = vmatpush2.msra.mxu0 0.0
        %687 = vmatprep.subr.mxu0 0.0
        %688 = vmatpush2.msra.mxu0 0.0
        %689 = vmatprep.subr.mxu0 0.0
        %690 = vmatpush2.msra.mxu0 0.0
        %691 = vmatprep.subr.mxu0 0.0
        %692 = vmatpush2.msra.mxu0 0.0
        %693 = vmatprep.subr.mxu0 0.0
        %694 = vmatpush2.msra.mxu0 0.0
        %695 = vmatprep.subr.mxu0 0.0
        %696 = vmatpush2.msra.mxu0 0.0
        %697 = vmatprep.subr.mxu0 0.0
        %698 = vmatpush2.msra.mxu0 0.0
        %699 = vmatprep.subr.mxu0 0.0
        %700 = vmatpush2.msra.mxu0 0.0
        %701 = vmatprep.subr.mxu0 0.0
        %702 = vmatpush2.msra.mxu0 0.0
        %703 = vmatprep.subr.mxu0 0.0
        %704 = vmatpush2.msra.mxu0 0.0
        %705 = vmatprep.subr.mxu0 0.0
        %706 = vmatpush2.msra.mxu0 0.0
        %707 = vmatprep.subr.mxu0 0.0
        %708 = vmatpush2.msra.mxu0 0.0
        %709 = vmatprep.subr.mxu0 0.0
        %710 = vmatpush2.msra.mxu0 0.0
        %711 = vmatprep.subr.mxu0 0.0
        %712 = vmatpush2.msra.mxu0 0.0
        %713 = vmatprep.subr.mxu0 0.0
        %714 = vmatpush2.msra.mxu0 0.0
        %715 = vmatprep.mubr.f32.mxu0 0.0
        %716 = vmatmul.mubr.f32.gmra.mxu0 %v649
        %v717 = vpop.f32.mrf.mxu0
        %v718 = vadd.f32 0.0, %v717
        %v719 = vpop.f32.mrf.mxu0
        %720 = vdwg.mxu0
        %v721 = vsel %vm647, %v718, -inf
        %722 = vmax.xlane.f32.xlu0 %v721
        %v723 = vpop.xlane.xlu0 %722
        %v724 = vsub.f32 %v718, %v723
        %v725 = vmul.f32 %v724, 1.442695
        %v726 = vpow.pop %v725
        %v727 = vsel %vm647, %v726, 0.0
        %728 = vadd.xlane.f32.xlu0 %v727
        %v729 = vpop.xlane.xlu0 %728
        %v730 = vrcp.pop %v729
        %v731 = vld [vmem:[#allocation4] sm:$0xff]
        %v733 = vsel %vm647, %v726, 0
        %735 = vmatprep.subr.mxu0 0.0
        %736 = vmatpush1.msra.mxu0 0.0
        %737 = vmatprep.subr.mxu0 0.0
        %738 = vmatpush1.msra.mxu0 0.0
        %739 = vmatprep.subr.mxu0 0.0
        %740 = vmatpush1.msra.mxu0 0.0
        %741 = vmatprep.subr.mxu0 0.0
        %742 = vmatpush1.msra.mxu0 0.0
        %743 = vmatprep.subr.mxu0 0.0
        %744 = vmatpush1.msra.mxu0 0.0
        %745 = vmatprep.subr.mxu0 0.0
        %746 = vmatpush1.msra.mxu0 0.0
        %747 = vmatprep.subr.mxu0 0.0
        %748 = vmatpush1.msra.mxu0 0.0
        %749 = vmatprep.subr.mxu0 0.0
        %750 = vmatpush1.msra.mxu0 0.0
        %751 = vmatprep.subr.mxu0 0.0
        %752 = vmatpush1.msra.mxu0 0.0
        %753 = vmatprep.subr.mxu0 0.0
        %754 = vmatpush1.msra.mxu0 0.0
        %755 = vmatprep.subr.mxu0 0.0
        %756 = vmatpush1.msra.mxu0 0.0
        %757 = vmatprep.subr.mxu0 0.0
        %758 = vmatpush1.msra.mxu0 0.0
        %759 = vmatprep.subr.mxu0 0.0
        %760 = vmatpush1.msra.mxu0 0.0
        %761 = vmatprep.subr.mxu0 0.0
        %762 = vmatpush1.msra.mxu0 0.0
        %763 = vmatprep.subr.mxu0 0.0
        %764 = vmatpush1.msra.mxu0 0.0
        %765 = vmatprep.subr.mxu0 0.0
        %766 = vmatpush1.msra.mxu0 %v731
        %767 = vmatprep.subr.mxu0 0.0
        %768 = vmatpush2.msra.mxu0 0.0
        %769 = vmatprep.subr.mxu0 0.0
        %770 = vmatpush2.msra.mxu0 0.0
        %771 = vmatprep.subr.mxu0 0.0
        %772 = vmatpush2.msra.mxu0 0.0
        %773 = vmatprep.subr.mxu0 0.0
        %774 = vmatpush2.msra.mxu0 0.0
        %775 = vmatprep.subr.mxu0 0.0
        %776 = vmatpush2.msra.mxu0 0.0
        %777 = vmatprep.subr.mxu0 0.0
        %778 = vmatpush2.msra.mxu0 0.0
        %779 = vmatprep.subr.mxu0 0.0
        %780 = vmatpush2.msra.mxu0 0.0
        %781 = vmatprep.subr.mxu0 0.0
        %782 = vmatpush2.msra.mxu0 0.0
        %783 = vmatprep.subr.mxu0 0.0
        %784 = vmatpush2.msra.mxu0 0.0
        %785 = vmatprep.subr.mxu0 0.0
        %786 = vmatpush2.msra.mxu0 0.0
        %787 = vmatprep.subr.mxu0 0.0
        %788 = vmatpush2.msra.mxu0 0.0
        %789 = vmatprep.subr.mxu0 0.0
        %790 = vmatpush2.msra.mxu0 0.0
        %791 = vmatprep.subr.mxu0 0.0
        %792 = vmatpush2.msra.mxu0 0.0
        %793 = vmatprep.subr.mxu0 0.0
        %794 = vmatpush2.msra.mxu0 0.0
        %795 = vmatprep.subr.mxu0 0.0
        %796 = vmatpush2.msra.mxu0 0.0
        %797 = vmatprep.subr.mxu0 0.0
        %798 = vmatpush2.msra.mxu0 0.0
        %799 = vmatprep.mubr.f32.mxu0 0.0
        %800 = vmatmul.mubr.f32.gmra.mxu0 %v733
        %v801 = vpop.f32.mrf.mxu0
        %v802 = vadd.f32 0.0, %v801
        %v803 = vpop.f32.mrf.mxu0
        %804 = vdwg.mxu0
        %v805 = vmul.f32 %v802, %v730
        %806 = vst.msk [vmem:[#allocation5] sm:$0xff] %vm647, %v805
        %s807 = sadd.s32 %s643, 8
        %s808 = scalar_lea.vmem [#allocation2], %s807
        %v809 = vld [vmem:[%s808] sm:$0xff]
        %s810 = scalar_lea.vmem [#allocation3], 8
        %v811 = vld [vmem:[%s810] sm:$0xff]
        %v813 = vsel %vm647, %v809, 0
        %815 = vmatprep.subr.mxu0 0.0
        %816 = vmatpush1.msra.mxu0 0.0
        %817 = vmatprep.subr.mxu0 0.0
        %818 = vmatpush1.msra.mxu0 0.0
        %819 = vmatprep.subr.mxu0 0.0
        %820 = vmatpush1.msra.mxu0 0.0
        %821 = vmatprep.subr.mxu0 0.0
        %822 = vmatpush1.msra.mxu0 0.0
        %823 = vmatprep.subr.mxu0 0.0
        %824 = vmatpush1.msra.mxu0 0.0
        %825 = vmatprep.subr.mxu0 0.0
        %826 = vmatpush1.msra.mxu0 0.0
        %827 = vmatprep.subr.mxu0 0.0
        %828 = vmatpush1.msra.mxu0 0.0
        %829 = vmatprep.subr.mxu0 0.0
        %830 = vmatpush1.msra.mxu0 0.0
        %831 = vmatprep.subr.mxu0 0.0
        %832 = vmatpush1.msra.mxu0 0.0
        %833 = vmatprep.subr.mxu0 0.0
        %834 = vmatpush1.msra.mxu0 0.0
        %835 = vmatprep.subr.mxu0 0.0
        %836 = vmatpush1.msra.mxu0 0.0
        %837 = vmatprep.subr.mxu0 0.0
        %838 = vmatpush1.msra.mxu0 0.0
        %839 = vmatprep.subr.mxu0 0.0
        %840 = vmatpush1.msra.mxu0 0.0
        %841 = vmatprep.subr.mxu0 0.0
        %842 = vmatpush1.msra.mxu0 0.0
        %843 = vmatprep.subr.mxu0 0.0
        %844 = vmatpush1.msra.mxu0 0.0
        %845 = vmatprep.subr.mxu0 0.0
        %846 = vmatpush1.msra.mxu0 %v811
        %847 = vmatprep.subr.mxu0 0.0
        %848 = vmatpush2.msra.mxu0 0.0
        %849 = vmatprep.subr.mxu0 0.0
        %850 = vmatpush2.msra.mxu0 0.0
        %851 = vmatprep.subr.mxu0 0.0
        %852 = vmatpush2.msra.mxu0 0.0
        %853 = vmatprep.subr.mxu0 0.0
        %854 = vmatpush2.msra.mxu0 0.0
        %855 = vmatprep.subr.mxu0 0.0
        %856 = vmatpush2.msra.mxu0 0.0
        %857 = vmatprep.subr.mxu0 0.0
        %858 = vmatpush2.msra.mxu0 0.0
        %859 = vmatprep.subr.mxu0 0.0
        %860 = vmatpush2.msra.mxu0 0.0
        %861 = vmatprep.subr.mxu0 0.0
        %862 = vmatpush2.msra.mxu0 0.0
        %863 = vmatprep.subr.mxu0 0.0
        %864 = vmatpush2.msra.mxu0 0.0
        %865 = vmatprep.subr.mxu0 0.0
        %866 = vmatpush2.msra.mxu0 0.0
        %867 = vmatprep.subr.mxu0 0.0
        %868 = vmatpush2.msra.mxu0 0.0
        %869 = vmatprep.subr.mxu0 0.0
        %870 = vmatpush2.msra.mxu0 0.0
        %871 = vmatprep.subr.mxu0 0.0
        %872 = vmatpush2.msra.mxu0 0.0
        %873 = vmatprep.subr.mxu0 0.0
        %874 = vmatpush2.msra.mxu0 0.0
        %875 = vmatprep.subr.mxu0 0.0
        %876 = vmatpush2.msra.mxu0 0.0
        %877 = vmatprep.subr.mxu0 0.0
        %878 = vmatpush2.msra.mxu0 0.0
        %879 = vmatprep.mubr.f32.mxu0 0.0
        %880 = vmatmul.mubr.f32.gmra.mxu0 %v813
        %v881 = vpop.f32.mrf.mxu0
        %v882 = vadd.f32 0.0, %v881
        %v883 = vpop.f32.mrf.mxu0
        %884 = vdwg.mxu0
        %v885 = vsel %vm647, %v882, -inf
        %886 = vmax.xlane.f32.xlu0 %v885
        %v887 = vpop.xlane.xlu0 %886
        %v888 = vsub.f32 %v882, %v887
        %v889 = vmul.f32 %v888, 1.442695
        %v890 = vpow.pop %v889
        %v891 = vsel %vm647, %v890, 0.0
        %892 = vadd.xlane.f32.xlu0 %v891
        %v893 = vpop.xlane.xlu0 %892
        %v894 = vrcp.pop %v893
        %s895 = scalar_lea.vmem [#allocation4], 8
        %v896 = vld [vmem:[%s895] sm:$0xff]
        %v898 = vsel %vm647, %v890, 0
        %900 = vmatprep.subr.mxu0 0.0
        %901 = vmatpush1.msra.mxu0 0.0
        %902 = vmatprep.subr.mxu0 0.0
        %903 = vmatpush1.msra.mxu0 0.0
        %904 = vmatprep.subr.mxu0 0.0
        %905 = vmatpush1.msra.mxu0 0.0
        %906 = vmatprep.subr.mxu0 0.0
        %907 = vmatpush1.msra.mxu0 0.0
        %908 = vmatprep.subr.mxu0 0.0
        %909 = vmatpush1.msra.mxu0 0.0
        %910 = vmatprep.subr.mxu0 0.0
        %911 = vmatpush1.msra.mxu0 0.0
        %912 = vmatprep.subr.mxu0 0.0
        %913 = vmatpush1.msra.mxu0 0.0
        %914 = vmatprep.subr.mxu0 0.0
        %915 = vmatpush1.msra.mxu0 0.0
        %916 = vmatprep.subr.mxu0 0.0
        %917 = vmatpush1.msra.mxu0 0.0
        %918 = vmatprep.subr.mxu0 0.0
        %919 = vmatpush1.msra.mxu0 0.0
        %920 = vmatprep.subr.mxu0 0.0
        %921 = vmatpush1.msra.mxu0 0.0
        %922 = vmatprep.subr.mxu0 0.0
        %923 = vmatpush1.msra.mxu0 0.0
        %924 = vmatprep.subr.mxu0 0.0
        %925 = vmatpush1.msra.mxu0 0.0
        %926 = vmatprep.subr.mxu0 0.0
        %927 = vmatpush1.msra.mxu0 0.0
        %928 = vmatprep.subr.mxu0 0.0
        %929 = vmatpush1.msra.mxu0 0.0
        %930 = vmatprep.subr.mxu0 0.0
        %931 = vmatpush1.msra.mxu0 %v896
        %932 = vmatprep.subr.mxu0 0.0
        %933 = vmatpush2.msra.mxu0 0.0
        %934 = vmatprep.subr.mxu0 0.0
        %935 = vmatpush2.msra.mxu0 0.0
        %936 = vmatprep.subr.mxu0 0.0
        %937 = vmatpush2.msra.mxu0 0.0
        %938 = vmatprep.subr.mxu0 0.0
        %939 = vmatpush2.msra.mxu0 0.0
        %940 = vmatprep.subr.mxu0 0.0
        %941 = vmatpush2.msra.mxu0 0.0
        %942 = vmatprep.subr.mxu0 0.0
        %943 = vmatpush2.msra.mxu0 0.0
        %944 = vmatprep.subr.mxu0 0.0
        %945 = vmatpush2.msra.mxu0 0.0
        %946 = vmatprep.subr.mxu0 0.0
        %947 = vmatpush2.msra.mxu0 0.0
        %948 = vmatprep.subr.mxu0 0.0
        %949 = vmatpush2.msra.mxu0 0.0
        %950 = vmatprep.subr.mxu0 0.0
        %951 = vmatpush2.msra.mxu0 0.0
        %952 = vmatprep.subr.mxu0 0.0
        %953 = vmatpush2.msra.mxu0 0.0
        %954 = vmatprep.subr.mxu0 0.0
        %955 = vmatpush2.msra.mxu0 0.0
        %956 = vmatprep.subr.mxu0 0.0
        %957 = vmatpush2.msra.mxu0 0.0
        %958 = vmatprep.subr.mxu0 0.0
        %959 = vmatpush2.msra.mxu0 0.0
        %960 = vmatprep.subr.mxu0 0.0
        %961 = vmatpush2.msra.mxu0 0.0
        %962 = vmatprep.subr.mxu0 0.0
        %963 = vmatpush2.msra.mxu0 0.0
        %964 = vmatprep.mubr.f32.mxu0 0.0
        %965 = vmatmul.mubr.f32.gmra.mxu0 %v898
        %v966 = vpop.f32.mrf.mxu0
        %v967 = vadd.f32 0.0, %v966
        %v968 = vpop.f32.mrf.mxu0
        %969 = vdwg.mxu0
        %v970 = vmul.f32 %v967, %v894
        %972 = vrot.lane.b32.xlu0 %v970, 8
        %v973 = vpop.permute.xlu0 %972
        %vm975 = vcmask 130112
        %976 = vst.msk [vmem:[#allocation5] sm:$0xff] %vm975, %v973
        %s977 = sadd.s32 %s643, 16
        %s978 = scalar_lea.vmem [#allocation2], %s977
        %v979 = vld [vmem:[%s978] sm:$0xff]
        %s980 = scalar_lea.vmem [#allocation3], 16
        %v981 = vld [vmem:[%s980] sm:$0xff]
        %v983 = vsel %vm647, %v979, 0
        %985 = vmatprep.subr.mxu0 0.0
        %986 = vmatpush1.msra.mxu0 0.0
        %987 = vmatprep.subr.mxu0 0.0
        %988 = vmatpush1.msra.mxu0 0.0
        %989 = vmatprep.subr.mxu0 0.0
        %990 = vmatpush1.msra.mxu0 0.0
        %991 = vmatprep.subr.mxu0 0.0
        %992 = vmatpush1.msra.mxu0 0.0
        %993 = vmatprep.subr.mxu0 0.0
        %994 = vmatpush1.msra.mxu0 0.0
        %995 = vmatprep.subr.mxu0 0.0
        %996 = vmatpush1.msra.mxu0 0.0
        %997 = vmatprep.subr.mxu0 0.0
        %998 = vmatpush1.msra.mxu0 0.0
        %999 = vmatprep.subr.mxu0 0.0
        %1000 = vmatpush1.msra.mxu0 0.0
        %1001 = vmatprep.subr.mxu0 0.0
        %1002 = vmatpush1.msra.mxu0 0.0
        %1003 = vmatprep.subr.mxu0 0.0
        %1004 = vmatpush1.msra.mxu0 0.0
        %1005 = vmatprep.subr.mxu0 0.0
        %1006 = vmatpush1.msra.mxu0 0.0
        %1007 = vmatprep.subr.mxu0 0.0
        %1008 = vmatpush1.msra.mxu0 0.0
        %1009 = vmatprep.subr.mxu0 0.0
        %1010 = vmatpush1.msra.mxu0 0.0
        %1011 = vmatprep.subr.mxu0 0.0
        %1012 = vmatpush1.msra.mxu0 0.0
        %1013 = vmatprep.subr.mxu0 0.0
        %1014 = vmatpush1.msra.mxu0 0.0
        %1015 = vmatprep.subr.mxu0 0.0
        %1016 = vmatpush1.msra.mxu0 %v981
        %1017 = vmatprep.subr.mxu0 0.0
        %1018 = vmatpush2.msra.mxu0 0.0
        %1019 = vmatprep.subr.mxu0 0.0
        %1020 = vmatpush2.msra.mxu0 0.0
        %1021 = vmatprep.subr.mxu0 0.0
        %1022 = vmatpush2.msra.mxu0 0.0
        %1023 = vmatprep.subr.mxu0 0.0
        %1024 = vmatpush2.msra.mxu0 0.0
        %1025 = vmatprep.subr.mxu0 0.0
        %1026 = vmatpush2.msra.mxu0 0.0
        %1027 = vmatprep.subr.mxu0 0.0
        %1028 = vmatpush2.msra.mxu0 0.0
        %1029 = vmatprep.subr.mxu0 0.0
        %1030 = vmatpush2.msra.mxu0 0.0
        %1031 = vmatprep.subr.mxu0 0.0
        %1032 = vmatpush2.msra.mxu0 0.0
        %1033 = vmatprep.subr.mxu0 0.0
        %1034 = vmatpush2.msra.mxu0 0.0
        %1035 = vmatprep.subr.mxu0 0.0
        %1036 = vmatpush2.msra.mxu0 0.0
        %1037 = vmatprep.subr.mxu0 0.0
        %1038 = vmatpush2.msra.mxu0 0.0
        %1039 = vmatprep.subr.mxu0 0.0
        %1040 = vmatpush2.msra.mxu0 0.0
        %1041 = vmatprep.subr.mxu0 0.0
        %1042 = vmatpush2.msra.mxu0 0.0
        %1043 = vmatprep.subr.mxu0 0.0
        %1044 = vmatpush2.msra.mxu0 0.0
        %1045 = vmatprep.subr.mxu0 0.0
        %1046 = vmatpush2.msra.mxu0 0.0
        %1047 = vmatprep.subr.mxu0 0.0
        %1048 = vmatpush2.msra.mxu0 0.0
        %1049 = vmatprep.mubr.f32.mxu0 0.0
        %1050 = vmatmul.mubr.f32.gmra.mxu0 %v983
        %v1051 = vpop.f32.mrf.mxu0
        %v1052 = vadd.f32 0.0, %v1051
        %v1053 = vpop.f32.mrf.mxu0
        %1054 = vdwg.mxu0
        %v1055 = vsel %vm647, %v1052, -inf
        %1056 = vmax.xlane.f32.xlu0 %v1055
        %v1057 = vpop.xlane.xlu0 %1056
        %v1058 = vsub.f32 %v1052, %v1057
        %v1059 = vmul.f32 %v1058, 1.442695
        %v1060 = vpow.pop %v1059
        %v1061 = vsel %vm647, %v1060, 0.0
        %1062 = vadd.xlane.f32.xlu0 %v1061
        %v1063 = vpop.xlane.xlu0 %1062
        %v1064 = vrcp.pop %v1063
        %s1065 = scalar_lea.vmem [#allocation4], 16
        %v1066 = vld [vmem:[%s1065] sm:$0xff]
        %v1068 = vsel %vm647, %v1060, 0
        %1070 = vmatprep.subr.mxu0 0.0
        %1071 = vmatpush1.msra.mxu0 0.0
        %1072 = vmatprep.subr.mxu0 0.0
        %1073 = vmatpush1.msra.mxu0 0.0
        %1074 = vmatprep.subr.mxu0 0.0
        %1075 = vmatpush1.msra.mxu0 0.0
        %1076 = vmatprep.subr.mxu0 0.0
        %1077 = vmatpush1.msra.mxu0 0.0
        %1078 = vmatprep.subr.mxu0 0.0
        %1079 = vmatpush1.msra.mxu0 0.0
        %1080 = vmatprep.subr.mxu0 0.0
        %1081 = vmatpush1.msra.mxu0 0.0
        %1082 = vmatprep.subr.mxu0 0.0
        %1083 = vmatpush1.msra.mxu0 0.0
        %1084 = vmatprep.subr.mxu0 0.0
        %1085 = vmatpush1.msra.mxu0 0.0
        %1086 = vmatprep.subr.mxu0 0.0
        %1087 = vmatpush1.msra.mxu0 0.0
        %1088 = vmatprep.subr.mxu0 0.0
        %1089 = vmatpush1.msra.mxu0 0.0
        %1090 = vmatprep.subr.mxu0 0.0
        %1091 = vmatpush1.msra.mxu0 0.0
        %1092 = vmatprep.subr.mxu0 0.0
        %1093 = vmatpush1.msra.mxu0 0.0
        %1094 = vmatprep.subr.mxu0 0.0
        %1095 = vmatpush1.msra.mxu0 0.0
        %1096 = vmatprep.subr.mxu0 0.0
        %1097 = vmatpush1.msra.mxu0 0.0
        %1098 = vmatprep.subr.mxu0 0.0
        %1099 = vmatpush1.msra.mxu0 0.0
        %1100 = vmatprep.subr.mxu0 0.0
        %1101 = vmatpush1.msra.mxu0 %v1066
        %1102 = vmatprep.subr.mxu0 0.0
        %1103 = vmatpush2.msra.mxu0 0.0
        %1104 = vmatprep.subr.mxu0 0.0
        %1105 = vmatpush2.msra.mxu0 0.0
        %1106 = vmatprep.subr.mxu0 0.0
        %1107 = vmatpush2.msra.mxu0 0.0
        %1108 = vmatprep.subr.mxu0 0.0
        %1109 = vmatpush2.msra.mxu0 0.0
        %1110 = vmatprep.subr.mxu0 0.0
        %1111 = vmatpush2.msra.mxu0 0.0
        %1112 = vmatprep.subr.mxu0 0.0
        %1113 = vmatpush2.msra.mxu0 0.0
        %1114 = vmatprep.subr.mxu0 0.0
        %1115 = vmatpush2.msra.mxu0 0.0
        %1116 = vmatprep.subr.mxu0 0.0
        %1117 = vmatpush2.msra.mxu0 0.0
        %1118 = vmatprep.subr.mxu0 0.0
        %1119 = vmatpush2.msra.mxu0 0.0
        %1120 = vmatprep.subr.mxu0 0.0
        %1121 = vmatpush2.msra.mxu0 0.0
        %1122 = vmatprep.subr.mxu0 0.0
        %1123 = vmatpush2.msra.mxu0 0.0
        %1124 = vmatprep.subr.mxu0 0.0
        %1125 = vmatpush2.msra.mxu0 0.0
        %1126 = vmatprep.subr.mxu0 0.0
        %1127 = vmatpush2.msra.mxu0 0.0
        %1128 = vmatprep.subr.mxu0 0.0
        %1129 = vmatpush2.msra.mxu0 0.0
        %1130 = vmatprep.subr.mxu0 0.0
        %1131 = vmatpush2.msra.mxu0 0.0
        %1132 = vmatprep.subr.mxu0 0.0
        %1133 = vmatpush2.msra.mxu0 0.0
        %1134 = vmatprep.mubr.f32.mxu0 0.0
        %1135 = vmatmul.mubr.f32.gmra.mxu0 %v1068
        %v1136 = vpop.f32.mrf.mxu0
        %v1137 = vadd.f32 0.0, %v1136
        %v1138 = vpop.f32.mrf.mxu0
        %1139 = vdwg.mxu0
        %v1140 = vmul.f32 %v1137, %v1064
        %1142 = vrot.lane.b32.xlu0 %v1140, 16
        %v1143 = vpop.permute.xlu0 %1142
        %vm1145 = vcmask 195712
        %1146 = vst.msk [vmem:[#allocation5] sm:$0xff] %vm1145, %v1143
        %s1147 = sadd.s32 %s643, 24
        %s1148 = scalar_lea.vmem [#allocation2], %s1147
        %v1149 = vld [vmem:[%s1148] sm:$0xff]
        %s1150 = scalar_lea.vmem [#allocation3], 24
        %v1151 = vld [vmem:[%s1150] sm:$0xff]
        %v1153 = vsel %vm647, %v1149, 0
        %1155 = vmatprep.subr.mxu0 0.0
        %1156 = vmatpush1.msra.mxu0 0.0
        %1157 = vmatprep.subr.mxu0 0.0
        %1158 = vmatpush1.msra.mxu0 0.0
        %1159 = vmatprep.subr.mxu0 0.0
        %1160 = vmatpush1.msra.mxu0 0.0
        %1161 = vmatprep.subr.mxu0 0.0
        %1162 = vmatpush1.msra.mxu0 0.0
        %1163 = vmatprep.subr.mxu0 0.0
        %1164 = vmatpush1.msra.mxu0 0.0
        %1165 = vmatprep.subr.mxu0 0.0
        %1166 = vmatpush1.msra.mxu0 0.0
        %1167 = vmatprep.subr.mxu0 0.0
        %1168 = vmatpush1.msra.mxu0 0.0
        %1169 = vmatprep.subr.mxu0 0.0
        %1170 = vmatpush1.msra.mxu0 0.0
        %1171 = vmatprep.subr.mxu0 0.0
        %1172 = vmatpush1.msra.mxu0 0.0
        %1173 = vmatprep.subr.mxu0 0.0
        %1174 = vmatpush1.msra.mxu0 0.0
        %1175 = vmatprep.subr.mxu0 0.0
        %1176 = vmatpush1.msra.mxu0 0.0
        %1177 = vmatprep.subr.mxu0 0.0
        %1178 = vmatpush1.msra.mxu0 0.0
        %1179 = vmatprep.subr.mxu0 0.0
        %1180 = vmatpush1.msra.mxu0 0.0
        %1181 = vmatprep.subr.mxu0 0.0
        %1182 = vmatpush1.msra.mxu0 0.0
        %1183 = vmatprep.subr.mxu0 0.0
        %1184 = vmatpush1.msra.mxu0 0.0
        %1185 = vmatprep.subr.mxu0 0.0
        %1186 = vmatpush1.msra.mxu0 %v1151
        %1187 = vmatprep.subr.mxu0 0.0
        %1188 = vmatpush2.msra.mxu0 0.0
        %1189 = vmatprep.subr.mxu0 0.0
        %1190 = vmatpush2.msra.mxu0 0.0
        %1191 = vmatprep.subr.mxu0 0.0
        %1192 = vmatpush2.msra.mxu0 0.0
        %1193 = vmatprep.subr.mxu0 0.0
        %1194 = vmatpush2.msra.mxu0 0.0
        %1195 = vmatprep.subr.mxu0 0.0
        %1196 = vmatpush2.msra.mxu0 0.0
        %1197 = vmatprep.subr.mxu0 0.0
        %1198 = vmatpush2.msra.mxu0 0.0
        %1199 = vmatprep.subr.mxu0 0.0
        %1200 = vmatpush2.msra.mxu0 0.0
        %1201 = vmatprep.subr.mxu0 0.0
        %1202 = vmatpush2.msra.mxu0 0.0
        %1203 = vmatprep.subr.mxu0 0.0
        %1204 = vmatpush2.msra.mxu0 0.0
        %1205 = vmatprep.subr.mxu0 0.0
        %1206 = vmatpush2.msra.mxu0 0.0
        %1207 = vmatprep.subr.mxu0 0.0
        %1208 = vmatpush2.msra.mxu0 0.0
        %1209 = vmatprep.subr.mxu0 0.0
        %1210 = vmatpush2.msra.mxu0 0.0
        %1211 = vmatprep.subr.mxu0 0.0
        %1212 = vmatpush2.msra.mxu0 0.0
        %1213 = vmatprep.subr.mxu0 0.0
        %1214 = vmatpush2.msra.mxu0 0.0
        %1215 = vmatprep.subr.mxu0 0.0
        %1216 = vmatpush2.msra.mxu0 0.0
        %1217 = vmatprep.subr.mxu0 0.0
        %1218 = vmatpush2.msra.mxu0 0.0
        %1219 = vmatprep.mubr.f32.mxu0 0.0
        %1220 = vmatmul.mubr.f32.gmra.mxu0 %v1153
        %v1221 = vpop.f32.mrf.mxu0
        %v1222 = vadd.f32 0.0, %v1221
        %v1223 = vpop.f32.mrf.mxu0
        %1224 = vdwg.mxu0
        %v1225 = vsel %vm647, %v1222, -inf
        %1226 = vmax.xlane.f32.xlu0 %v1225
        %v1227 = vpop.xlane.xlu0 %1226
        %v1228 = vsub.f32 %v1222, %v1227
        %v1229 = vmul.f32 %v1228, 1.442695
        %v1230 = vpow.pop %v1229
        %v1231 = vsel %vm647, %v1230, 0.0
        %1232 = vadd.xlane.f32.xlu0 %v1231
        %v1233 = vpop.xlane.xlu0 %1232
        %v1234 = vrcp.pop %v1233
        %s1235 = scalar_lea.vmem [#allocation4], 24
        %v1236 = vld [vmem:[%s1235] sm:$0xff]
        %v1238 = vsel %vm647, %v1230, 0
        %1240 = vmatprep.subr.mxu0 0.0
        %1241 = vmatpush1.msra.mxu0 0.0
        %1242 = vmatprep.subr.mxu0 0.0
        %1243 = vmatpush1.msra.mxu0 0.0
        %1244 = vmatprep.subr.mxu0 0.0
        %1245 = vmatpush1.msra.mxu0 0.0
        %1246 = vmatprep.subr.mxu0 0.0
        %1247 = vmatpush1.msra.mxu0 0.0
        %1248 = vmatprep.subr.mxu0 0.0
        %1249 = vmatpush1.msra.mxu0 0.0
        %1250 = vmatprep.subr.mxu0 0.0
        %1251 = vmatpush1.msra.mxu0 0.0
        %1252 = vmatprep.subr.mxu0 0.0
        %1253 = vmatpush1.msra.mxu0 0.0
        %1254 = vmatprep.subr.mxu0 0.0
        %1255 = vmatpush1.msra.mxu0 0.0
        %1256 = vmatprep.subr.mxu0 0.0
        %1257 = vmatpush1.msra.mxu0 0.0
        %1258 = vmatprep.subr.mxu0 0.0
        %1259 = vmatpush1.msra.mxu0 0.0
        %1260 = vmatprep.subr.mxu0 0.0
        %1261 = vmatpush1.msra.mxu0 0.0
        %1262 = vmatprep.subr.mxu0 0.0
        %1263 = vmatpush1.msra.mxu0 0.0
        %1264 = vmatprep.subr.mxu0 0.0
        %1265 = vmatpush1.msra.mxu0 0.0
        %1266 = vmatprep.subr.mxu0 0.0
        %1267 = vmatpush1.msra.mxu0 0.0
        %1268 = vmatprep.subr.mxu0 0.0
        %1269 = vmatpush1.msra.mxu0 0.0
        %1270 = vmatprep.subr.mxu0 0.0
        %1271 = vmatpush1.msra.mxu0 %v1236
        %1272 = vmatprep.subr.mxu0 0.0
        %1273 = vmatpush2.msra.mxu0 0.0
        %1274 = vmatprep.subr.mxu0 0.0
        %1275 = vmatpush2.msra.mxu0 0.0
        %1276 = vmatprep.subr.mxu0 0.0
        %1277 = vmatpush2.msra.mxu0 0.0
        %1278 = vmatprep.subr.mxu0 0.0
        %1279 = vmatpush2.msra.mxu0 0.0
        %1280 = vmatprep.subr.mxu0 0.0
        %1281 = vmatpush2.msra.mxu0 0.0
        %1282 = vmatprep.subr.mxu0 0.0
        %1283 = vmatpush2.msra.mxu0 0.0
        %1284 = vmatprep.subr.mxu0 0.0
        %1285 = vmatpush2.msra.mxu0 0.0
        %1286 = vmatprep.subr.mxu0 0.0
        %1287 = vmatpush2.msra.mxu0 0.0
        %1288 = vmatprep.subr.mxu0 0.0
        %1289 = vmatpush2.msra.mxu0 0.0
        %1290 = vmatprep.subr.mxu0 0.0
        %1291 = vmatpush2.msra.mxu0 0.0
        %1292 = vmatprep.subr.mxu0 0.0
        %1293 = vmatpush2.msra.mxu0 0.0
        %1294 = vmatprep.subr.mxu0 0.0
        %1295 = vmatpush2.msra.mxu0 0.0
        %1296 = vmatprep.subr.mxu0 0.0
        %1297 = vmatpush2.msra.mxu0 0.0
        %1298 = vmatprep.subr.mxu0 0.0
        %1299 = vmatpush2.msra.mxu0 0.0
        %1300 = vmatprep.subr.mxu0 0.0
        %1301 = vmatpush2.msra.mxu0 0.0
        %1302 = vmatprep.subr.mxu0 0.0
        %1303 = vmatpush2.msra.mxu0 0.0
        %1304 = vmatprep.mubr.f32.mxu0 0.0
        %1305 = vmatmul.mubr.f32.gmra.mxu0 %v1238
        %v1306 = vpop.f32.mrf.mxu0
        %v1307 = vadd.f32 0.0, %v1306
        %v1308 = vpop.f32.mrf.mxu0
        %1309 = vdwg.mxu0
        %v1310 = vmul.f32 %v1307, %v1234
        %1312 = vrot.lane.b32.xlu0 %v1310, 24
        %v1313 = vpop.permute.xlu0 %1312
        %vm1315 = vcmask 261312
        %1316 = vst.msk [vmem:[#allocation5] sm:$0xff] %vm1315, %v1313
        %v1317 = vld [vmem:[#allocation5] sm:$0xff]
        %v1318 = vld [vmem:[#allocation11] sm:$0xff]
        %v1319 = vld [vmem:[#allocation11 + $0x8] sm:$0xff]
        %v1320 = vld [vmem:[#allocation11 + $0x10] sm:$0xff]
        %v1321 = vld [vmem:[#allocation11 + $0x18] sm:$0xff]
        %vm1322 = vcmask 261120
        %v1324 = vsel %vm1322, %v1317, 0
        %1326 = vmatprep.subr.mxu0 0.0
        %1327 = vmatpush1.msra.mxu0 0.0
        %1328 = vmatprep.subr.mxu0 0.0
        %1329 = vmatpush1.msra.mxu0 0.0
        %1330 = vmatprep.subr.mxu0 0.0
        %1331 = vmatpush1.msra.mxu0 0.0
        %1332 = vmatprep.subr.mxu0 0.0
        %1333 = vmatpush1.msra.mxu0 0.0
        %1334 = vmatprep.subr.mxu0 0.0
        %1335 = vmatpush1.msra.mxu0 0.0
        %1336 = vmatprep.subr.mxu0 0.0
        %1337 = vmatpush1.msra.mxu0 0.0
        %1338 = vmatprep.subr.mxu0 0.0
        %1339 = vmatpush1.msra.mxu0 0.0
        %1340 = vmatprep.subr.mxu0 0.0
        %1341 = vmatpush1.msra.mxu0 0.0
        %1342 = vmatprep.subr.mxu0 0.0
        %1343 = vmatpush1.msra.mxu0 0.0
        %1344 = vmatprep.subr.mxu0 0.0
        %1345 = vmatpush1.msra.mxu0 0.0
        %1346 = vmatprep.subr.mxu0 0.0
        %1347 = vmatpush1.msra.mxu0 0.0
        %1348 = vmatprep.subr.mxu0 0.0
        %1349 = vmatpush1.msra.mxu0 0.0
        %1350 = vmatprep.subr.mxu0 0.0
        %1351 = vmatpush1.msra.mxu0 %v1321
        %1352 = vmatprep.subr.mxu0 0.0
        %1353 = vmatpush1.msra.mxu0 %v1320
        %1354 = vmatprep.subr.mxu0 0.0
        %1355 = vmatpush1.msra.mxu0 %v1319
        %1356 = vmatprep.subr.mxu0 0.0
        %1357 = vmatpush1.msra.mxu0 %v1318
        %1358 = vmatprep.subr.mxu0 0.0
        %1359 = vmatpush2.msra.mxu0 0.0
        %1360 = vmatprep.subr.mxu0 0.0
        %1361 = vmatpush2.msra.mxu0 0.0
        %1362 = vmatprep.subr.mxu0 0.0
        %1363 = vmatpush2.msra.mxu0 0.0
        %1364 = vmatprep.subr.mxu0 0.0
        %1365 = vmatpush2.msra.mxu0 0.0
        %1366 = vmatprep.subr.mxu0 0.0
        %1367 = vmatpush2.msra.mxu0 0.0
        %1368 = vmatprep.subr.mxu0 0.0
        %1369 = vmatpush2.msra.mxu0 0.0
        %1370 = vmatprep.subr.mxu0 0.0
        %1371 = vmatpush2.msra.mxu0 0.0
        %1372 = vmatprep.subr.mxu0 0.0
        %1373 = vmatpush2.msra.mxu0 0.0
        %1374 = vmatprep.subr.mxu0 0.0
        %1375 = vmatpush2.msra.mxu0 0.0
        %1376 = vmatprep.subr.mxu0 0.0
        %1377 = vmatpush2.msra.mxu0 0.0
        %1378 = vmatprep.subr.mxu0 0.0
        %1379 = vmatpush2.msra.mxu0 0.0
        %1380 = vmatprep.subr.mxu0 0.0
        %1381 = vmatpush2.msra.mxu0 0.0
        %1382 = vmatprep.subr.mxu0 0.0
        %1383 = vmatpush2.msra.mxu0 0.0
        %1384 = vmatprep.subr.mxu0 0.0
        %1385 = vmatpush2.msra.mxu0 0.0
        %1386 = vmatprep.subr.mxu0 0.0
        %1387 = vmatpush2.msra.mxu0 0.0
        %1388 = vmatprep.subr.mxu0 0.0
        %1389 = vmatpush2.msra.mxu0 0.0
        %1390 = vmatprep.mubr.f32.mxu0 0.0
        %1391 = vmatmul.mubr.f32.gmra.mxu0 %v1324
        %v1392 = vpop.f32.mrf.mxu0
        %v1393 = vadd.f32 0.0, %v1392
        %v1394 = vpop.f32.mrf.mxu0
        %1395 = vdwg.mxu0
        %1396 = vst.msk [vmem:[%s211] sm:$0xff] %vm1322, %v1393
        %s1397 = sand.u32 %s109, 1
        %s1398 = scalar_lea.sflag [#allocation8], %s1397
        %s1399 = sand.u32 %s109, 1
        %s1400 = smul.addr %s1399, 8
        %s1401 = scalar_lea.vmem [#allocation12], %s1400
        // Predicated region
        $region49: #{tpu_custom_call.1} parent=31 // pred_check
          %p1402 = pneg %p119
        $region50: #{tpu_custom_call.1} parent=31 // pred_check_branch
          %1404 = sbr.rel (%p1402) target = $region52
        $region51: #{tpu_custom_call.1} parent=31 // pred_region
          %s1406 = ssub.s32 128, 128
          %1407 = vsyncadd %s1398, %s1406
          %s1408 = sadd.s32 %s24, %s23
          %s1409 = smul.addr %s1408, 128
          %s1410 = scalar_lea.hbm %s3, %s1409
          %s1412 = sshll.u32 %s1401, 4
          %s1413 = int_to_ptr.vmem [resolvable:$true] %s1412
          %1415 = dma.vmem_to_hbm [thread:$0]  %s1413, 128, %s1410, %s1398
        $region52: #{tpu_custom_call.1} parent=31 // pred_fallthru
          _
      $region32: #{tpu_custom_call.1} parent=5 // pred_fallthru
        _
      %p1416 = scmp.le.s32.totalorder 2, %s14
      // Predicated region
      $region53: #{tpu_custom_call.1} parent=5 // pred_check
        %p1417 = pneg %p1416
      $region54: #{tpu_custom_call.1} parent=5 // pred_check_branch
        %1419 = sbr.rel (%p1417) target = $region56
      $region55: #{tpu_custom_call.1} parent=5 // pred_region
        %s1420 = ssub.s32 %s14, 2
        // Predicated region
        $region57: #{tpu_custom_call.1} parent=55 // pred_check
          %p1421 = pneg %p125
        $region58: #{tpu_custom_call.1} parent=55 // pred_check_branch
          %1423 = sbr.rel (%p1421) target = $region60
        $region59: #{tpu_custom_call.1} parent=55 // pred_region
          %s1424 = sand.u32 %s110, 1
          %s1425 = scalar_lea.sflag [#allocation8], %s1424
          %s1426 = sand.u32 %s110, 1
          %s1427 = smul.addr %s1426, 8
          %s1428 = scalar_lea.vmem [#allocation12], %s1427
          %1429 = dma.done %s1425, 128
        $region60: #{tpu_custom_call.1} parent=55 // pred_fallthru
          _
      $region56: #{tpu_custom_call.1} parent=5 // pred_fallthru
        _
    $region6: #{tpu_custom_call.1} parent=1 // loop_footer
      %s18 = sadd.s32 1, %s14
    $region7: #{tpu_custom_call.1} parent=1 // loop_footer_branch
      %13 = sbr.rel target = $region3
    $region8: #{tpu_custom_call.1} parent=1 // loop_exit
      _
    %1430 = vsyncpa [#allocation7], 1
    %s1431 = scalar_lea.sflag [#allocation7], 1
    %1432 = vsyncpa %s1431, 1
    %1433 = vsyncpa [#allocation10], 1
    %1434 = vsyncpa [#allocation8], 1
    %s1435 = scalar_lea.sflag [#allocation8], 1
    %1436 = vsyncpa %s1435, 1

// kernel: tpu_custom_call.1
$region0: #{tpu_custom_call.1}
  #allocation0 [shape = 'u32[]', space=smem, size = 0x4, offset = 0x4, fixed_abs, tag = 'smem constant byte address 0x4 - core index']
  #allocation1 [shape = 'u32[144,128]{1,0:T(1,128)}', space=vmem, size = 0x12000, scoped, tag = 'internal scratch']
  #allocation2 [shape = 'f32[4,8,8]{2,1,0:T(8,128)}', space=vmem, size = 0x4000, scoped, tag = 'scratch operand']
  #allocation3 [shape = 'f32[4,8,8]{2,1,0:T(8,128)}', space=vmem, size = 0x4000, scoped, tag = 'scratch operand']
  #allocation4 [shape = 'f32[4,8,8]{2,1,0:T(8,128)}', space=vmem, size = 0x4000, scoped, tag = 'scratch operand']
  #allocation5 [shape = 'f32[8,32]{1,0:T(8,128)}', space=vmem, size = 0x1000, scoped, tag = 'scratch operand']
  %s0 = inlined_call_operand.hbm [shape: f32[2,8,32], index: 0, kind: input, shape index: {}]
  %s1 = inlined_call_operand.hbm [shape: f32[32,96], index: 1, kind: input, shape index: {}]
  %s2 = inlined_call_operand.hbm [shape: f32[32,32], index: 2, kind: input, shape index: {}]
  %s3 = inlined_call_operand.hbm [shape: f32[2,8,32], index: 3, kind: output, shape index: {}]
  %s4 = sld [smem:[#allocation0]]
  $region61: #{tpu_custom_call.1} parent=0
    _
  %s6 = ssub.s32 1, %s4
  %s7 = scalar_select 0, %s6, %s4
  $region1: #{tpu_custom_call.1} parent=0
    #allocation6 [shape = 'u8[8192]{0}', space=vmem, size = 0x2000, scoped, tag = 'input window, operand 0']
    #allocation7 [shape = 's32[2]{0}', space=sflag, size = 0x8, scoped, tag = 'scoped memory for tpu_custom_call.1']
    #allocation8 [shape = 's32[2]{0}', space=sflag, size = 0x8, scoped, tag = 'scoped memory for tpu_custom_call.1']
    #allocation9 [shape = 'u8[16384]{0}', space=vmem, size = 0x4000, scoped, tag = 'input window, operand 1, single buffered']
    #allocation10 [shape = 's32[1]{0}', space=sflag, size = 0x4, scoped, tag = 'scoped memory for tpu_custom_call.1']
    #allocation11 [shape = 'u8[16384]{0}', space=vmem, size = 0x4000, scoped, tag = 'input window, operand 2, single buffered']
    #allocation12 [shape = 'u8[8192]{0}', space=vmem, size = 0x2000, scoped, tag = 'output window, operand 0']
    %8 = vsyncpa [#allocation7], 0
    %s9 = scalar_lea.sflag [#allocation7], 1
    %10 = vsyncpa %s9, 0
    %11 = vsyncpa [#allocation10], 0
    %12 = vsyncpa [#allocation8], 0
    %s13 = scalar_lea.sflag [#allocation8], 1
    %14 = vsyncpa %s13, 0
    loop: start=0, step=1, limit=4
    $region2: #{tpu_custom_call.1} parent=1 // loop_pre_header
      _
    $region3: #{tpu_custom_call.1} parent=1 // loop_header
      %s16 = sphi 0, %s20
      %p17 = scmp.ge.s32.totalorder %s16, 4
      %s23 = sphi 0, %s35
      %s24 = sphi 0, %s31
      %s25 = sphi 0, %s23
      %s26 = sphi 0, %s24
      %s27 = sphi 0, %s25
      %s28 = sphi 0, %s26
      %s38 = sphi 0, %s40
      %s41 = sphi 0, %s38
      %s42 = sphi 0, %s41
      %s58 = sphi 0, %s42
      %s62 = sphi 0, %s62
      %s64 = sphi 0, %s62
      %s65 = sphi 0, %s64
      %s79 = sphi 0, %s65
      %s83 = sphi 0, %s83
      %s85 = sphi 0, %s83
      %s86 = sphi 0, %s85
      %s100 = sphi 0, %s86
      %s108 = sphi 0, %s110
      %s111 = sphi 0, %s108
      %s112 = sphi 0, %s111
      %s128 = sphi 0, %s112
    $region4: #{tpu_custom_call.1} parent=1 // loop_header_branch
      %19 = sbr.rel (%p17) target = $region8
    $region5: #{tpu_custom_call.1} parent=1 // loop_body
      %s21 = ssub.s32 %s16, 1
      %s22 = ssub.s32 %s16, 2
      %s29 = sadd.s32 1, %s24
      %p30 = scmp.ge.s32.totalorder %s29, 1
      %s31 = scalar_select %p30, 0, %s29
      %s32 = sadd.s32 1, %s23
      %s33 = scalar_select %p30, %s32, %s23
      %p34 = scmp.ge.s32.totalorder %s33, 2
      %s35 = scalar_select %p34, 0, %s33
      %s36 = ssub.s32 %s23, %s35
      %p37 = scmp.eq.s32.totalorder %s36, 0
      %s39 = sadd.s32 %s38, 1
      %s40 = scalar_select %p37, %s38, %s39
      %p43 = pneg %p37
      %p44 = scmp.eq.s32.totalorder %s16, 1
      %p45 = por %p43, %p44
      %p46 = scmp.ne.s32.totalorder %s38, %s41
      %p47 = scmp.eq.s32.totalorder %s16, 0
      %p48 = por %p46, %p47
      %p49 = scmp.ne.s32.totalorder %s38, %s41
      %p50 = scmp.eq.s32.totalorder %s21, 1
      %p51 = por %p49, %p50
      %p52 = scmp.ne.s32.totalorder %s41, %s42
      %p53 = scmp.eq.s32.totalorder %s21, 0
      %p54 = por %p52, %p53
      %p55 = scmp.ne.s32.totalorder %s41, %s42
      %p56 = scmp.eq.s32.totalorder %s22, 1
      %p57 = por %p55, %p56
      %p59 = scmp.ne.s32.totalorder %s42, %s58
      %p60 = scmp.eq.s32.totalorder %s22, 0
      %p61 = por %p59, %p60
      %s63 = sadd.s32 %s62, 1
      %p66 = scmp.eq.s32.totalorder %s16, 1
      %p67 = scmp.ne.s32.totalorder %s62, %s64
      %p68 = scmp.eq.s32.totalorder %s16, 0
      %p69 = por %p67, %p68
      %p70 = scmp.ne.s32.totalorder %s62, %s64
      %p71 = scmp.eq.s32.totalorder %s21, 1
      %p72 = por %p70, %p71
      %p73 = scmp.ne.s32.totalorder %s64, %s65
      %p74 = scmp.eq.s32.totalorder %s21, 0
      %p75 = por %p73, %p74
      %p76 = scmp.ne.s32.totalorder %s64, %s65
      %p77 = scmp.eq.s32.totalorder %s22, 1
      %p78 = por %p76, %p77
      %p80 = scmp.ne.s32.totalorder %s65, %s79
      %p81 = scmp.eq.s32.totalorder %s22, 0
      %p82 = por %p80, %p81
      %s84 = sadd.s32 %s83, 1
      %p87 = scmp.eq.s32.totalorder %s16, 1
      %p88 = scmp.ne.s32.totalorder %s83, %s85
      %p89 = scmp.eq.s32.totalorder %s16, 0
      %p90 = por %p88, %p89
      %p91 = scmp.ne.s32.totalorder %s83, %s85
      %p92 = scmp.eq.s32.totalorder %s21, 1
      %p93 = por %p91, %p92
      %p94 = scmp.ne.s32.totalorder %s85, %s86
      %p95 = scmp.eq.s32.totalorder %s21, 0
      %p96 = por %p94, %p95
      %p97 = scmp.ne.s32.totalorder %s85, %s86
      %p98 = scmp.eq.s32.totalorder %s22, 1
      %p99 = por %p97, %p98
      %p101 = scmp.ne.s32.totalorder %s86, %s100
      %p102 = scmp.eq.s32.totalorder %s22, 0
      %p103 = por %p101, %p102
      %s104 = ssub.s32 %s23, %s35
      %s105 = ssub.s32 %s24, %s31
      %s106 = sor.u32 %s104, %s105
      %p107 = scmp.eq.s32.totalorder %s106, 0
      %s109 = sadd.s32 %s108, 1
      %s110 = scalar_select %p107, %s108, %s109
      %p113 = pneg %p107
      %p114 = scmp.eq.s32.totalorder %s16, 1
      %p115 = por %p113, %p114
      %p116 = scmp.ne.s32.totalorder %s108, %s111
      %p117 = scmp.eq.s32.totalorder %s16, 0
      %p118 = por %p116, %p117
      %p119 = scmp.ne.s32.totalorder %s108, %s111
      %p120 = scmp.eq.s32.totalorder %s21, 1
      %p121 = por %p119, %p120
      %p122 = scmp.ne.s32.totalorder %s111, %s112
      %p123 = scmp.eq.s32.totalorder %s21, 0
      %p124 = por %p122, %p123
      %p125 = scmp.ne.s32.totalorder %s111, %s112
      %p126 = scmp.eq.s32.totalorder %s22, 1
      %p127 = por %p125, %p126
      %p129 = scmp.ne.s32.totalorder %s112, %s128
      %p130 = scmp.eq.s32.totalorder %s22, 0
      %p131 = por %p129, %p130
      %p132 = scmp.le.s32.totalorder 1, %s16
      %p133 = scmp.lt.s32.totalorder %s16, 3
      %p134 = pnand %p132, %p133
      %p135 = pneg %p134
      // Predicated region
      $region9: #{tpu_custom_call.1} parent=5 // pred_check
        _
      $region10: #{tpu_custom_call.1} parent=5 // pred_check_branch
        %137 = sbr.rel (%p134) target = $region12
      $region11: #{tpu_custom_call.1} parent=5 // pred_region
        %s138 = ssub.s32 %s16, 1
        // Predicated region
        $region13: #{tpu_custom_call.1} parent=11 // pred_check
          %p139 = pneg %p75
        $region14: #{tpu_custom_call.1} parent=11 // pred_check_branch
          %141 = sbr.rel (%p139) target = $region16
        $region15: #{tpu_custom_call.1} parent=11 // pred_region
          %s143 = ssub.s32 512, 512
          %144 = vsyncadd [#allocation10], %s143
          %s145 = sshll.u32 [#allocation9], 4
          %s146 = int_to_ptr.vmem [resolvable:$true] %s145
          %151 = dma.hbm_to_vmem [thread:$0]  %s1, 512, %s146, [#allocation10], 128, 128, 8
        $region16: #{tpu_custom_call.1} parent=11 // pred_fallthru
          _
        // Predicated region
        $region17: #{tpu_custom_call.1} parent=11 // pred_check
          %p152 = pneg %p96
        $region18: #{tpu_custom_call.1} parent=11 // pred_check_branch
          %154 = sbr.rel (%p152) target = $region20
        $region19: #{tpu_custom_call.1} parent=11 // pred_region
          %s156 = ssub.s32 512, 512
          %157 = vsyncadd [#allocation10], %s156
          %s158 = sshll.u32 [#allocation11], 4
          %s159 = int_to_ptr.vmem [resolvable:$true] %s158
          %164 = dma.hbm_to_vmem [thread:$0]  %s2, 512, %s159, [#allocation10], 128, 128, 8
        $region20: #{tpu_custom_call.1} parent=11 // pred_fallthru
          _
      $region12: #{tpu_custom_call.1} parent=5 // pred_fallthru
        _
      %p165 = scmp.lt.s32.totalorder %s16, 2
      // Predicated region
      $region21: #{tpu_custom_call.1} parent=5 // pred_check
        %p166 = pneg %p165
      $region22: #{tpu_custom_call.1} parent=5 // pred_check_branch
        %168 = sbr.rel (%p166) target = $region24
      $region23: #{tpu_custom_call.1} parent=5 // pred_region
        // Predicated region
        $region25: #{tpu_custom_call.1} parent=23 // pred_check
          %p169 = pneg %p48
        $region26: #{tpu_custom_call.1} parent=23 // pred_check_branch
          %171 = sbr.rel (%p169) target = $region28
        $region27: #{tpu_custom_call.1} parent=23 // pred_region
          %s172 = sand.u32 %s38, 1
          %s173 = scalar_lea.sflag [#allocation7], %s172
          %s174 = sand.u32 %s38, 1
          %s175 = smul.addr %s174, 8
          %s176 = scalar_lea.vmem [#allocation6], %s175
          %s178 = ssub.s32 128, 128
          %179 = vsyncadd %s173, %s178
          %s180 = smul.addr %s23, 128
          %s181 = scalar_lea.hbm %s0, %s180
          %s183 = sshll.u32 %s176, 4
          %s184 = int_to_ptr.vmem [resolvable:$true] %s183
          %186 = dma.hbm_to_vmem [thread:$0]  %s181, 128, %s184, %s173
        $region28: #{tpu_custom_call.1} parent=23 // pred_fallthru
          _
      $region24: #{tpu_custom_call.1} parent=5 // pred_fallthru
        _
      %p187 = scmp.le.s32.totalorder 1, %s16
      %p188 = scmp.lt.s32.totalorder %s16, 3
      %p189 = pnand %p187, %p188
      %p190 = pneg %p189
      // Predicated region
      $region29: #{tpu_custom_call.1} parent=5 // pred_check
        _
      $region30: #{tpu_custom_call.1} parent=5 // pred_check_branch
        %192 = sbr.rel (%p189) target = $region32
      $region31: #{tpu_custom_call.1} parent=5 // pred_region
        %s193 = ssub.s32 %s16, 1
        %s194 = sand.u32 %s41, 1
        %s195 = scalar_lea.sflag [#allocation7], %s194
        %s196 = sand.u32 %s41, 1
        %s197 = smul.addr %s196, 8
        %s198 = scalar_lea.vmem [#allocation6], %s197
        // Predicated region
        $region33: #{tpu_custom_call.1} parent=31 // pred_check
          %p199 = pneg %p54
        $region34: #{tpu_custom_call.1} parent=31 // pred_check_branch
          %201 = sbr.rel (%p199) target = $region36
        $region35: #{tpu_custom_call.1} parent=31 // pred_region
          %202 = dma.done %s195, 128
        $region36: #{tpu_custom_call.1} parent=31 // pred_fallthru
          _
        // Predicated region
        $region37: #{tpu_custom_call.1} parent=31 // pred_check
          %p203 = pneg %p75
        $region38: #{tpu_custom_call.1} parent=31 // pred_check_branch
          %205 = sbr.rel (%p203) target = $region40
        $region39: #{tpu_custom_call.1} parent=31 // pred_region
          %206 = dma.done [#allocation10], 512
        $region40: #{tpu_custom_call.1} parent=31 // pred_fallthru
          _
        // Predicated region
        $region41: #{tpu_custom_call.1} parent=31 // pred_check
          %p207 = pneg %p96
        $region42: #{tpu_custom_call.1} parent=31 // pred_check_branch
          %209 = sbr.rel (%p207) target = $region44
        $region43: #{tpu_custom_call.1} parent=31 // pred_region
          %210 = dma.done [#allocation10], 512
        $region44: #{tpu_custom_call.1} parent=31 // pred_fallthru
          _
        %s211 = sand.u32 %s41, 1
        %s212 = scalar_lea.sflag [#allocation7], %s211
        %s213 = sand.u32 %s41, 1
        %s214 = smul.addr %s213, 8
        %s215 = scalar_lea.vmem [#allocation6], %s214
        %p216 = pneg %p54
        %p217 = pneg %p51
        %p218 = pneg %p75
        %p219 = pneg %p72
        %p220 = pneg %p96
        %p221 = pneg %p93
        %p222 = pneg %p124
        %p223 = pneg %p121
        %s224 = sand.u32 %s111, 1
        %s225 = scalar_lea.sflag [#allocation8], %s224
        %s226 = sand.u32 %s111, 1
        %s227 = smul.addr %s226, 8
        %s228 = scalar_lea.vmem [#allocation12], %s227
        %p229 = scmp.eq.s32.totalorder %s26, 0
        // Predicated region
        $region45: #{tpu_custom_call.1} parent=31 // pred_check
          %p230 = pneg %p229
        $region46: #{tpu_custom_call.1} parent=31 // pred_check_branch
          %232 = sbr.rel (%p230) target = $region48
        $region47: #{tpu_custom_call.1} parent=31 // pred_region
          %v233 = vld [vmem:[%s198] sm:$0xff]
          %v234 = vld [vmem:[#allocation9] sm:$0xff]
          %v235 = vld [vmem:[#allocation9 + $0x8] sm:$0xff]
          %v236 = vld [vmem:[#allocation9 + $0x10] sm:$0xff]
          %v237 = vld [vmem:[#allocation9 + $0x18] sm:$0xff]
          %vm238 = vcmask 261120
          %v240 = vsel %vm238, %v233, 0
          %242 = vmatprep.subr.mxu0 0.0
          %243 = vmatpush1.msra.mxu0 0.0
          %244 = vmatprep.subr.mxu0 0.0
          %245 = vmatpush1.msra.mxu0 0.0
          %246 = vmatprep.subr.mxu0 0.0
          %247 = vmatpush1.msra.mxu0 0.0
          %248 = vmatprep.subr.mxu0 0.0
          %249 = vmatpush1.msra.mxu0 0.0
          %250 = vmatprep.subr.mxu0 0.0
          %251 = vmatpush1.msra.mxu0 0.0
          %252 = vmatprep.subr.mxu0 0.0
          %253 = vmatpush1.msra.mxu0 0.0
          %254 = vmatprep.subr.mxu0 0.0
          %255 = vmatpush1.msra.mxu0 0.0
          %256 = vmatprep.subr.mxu0 0.0
          %257 = vmatpush1.msra.mxu0 0.0
          %258 = vmatprep.subr.mxu0 0.0
          %259 = vmatpush1.msra.mxu0 0.0
          %260 = vmatprep.subr.mxu0 0.0
          %261 = vmatpush1.msra.mxu0 0.0
          %262 = vmatprep.subr.mxu0 0.0
          %263 = vmatpush1.msra.mxu0 0.0
          %264 = vmatprep.subr.mxu0 0.0
          %265 = vmatpush1.msra.mxu0 0.0
          %266 = vmatprep.subr.mxu0 0.0
          %267 = vmatpush1.msra.mxu0 %v237
          %268 = vmatprep.subr.mxu0 0.0
          %269 = vmatpush1.msra.mxu0 %v236
          %270 = vmatprep.subr.mxu0 0.0
          %271 = vmatpush1.msra.mxu0 %v235
          %272 = vmatprep.subr.mxu0 0.0
          %273 = vmatpush1.msra.mxu0 %v234
          %274 = vmatprep.subr.mxu0 0.0
          %275 = vmatpush2.msra.mxu0 0.0
          %276 = vmatprep.subr.mxu0 0.0
          %277 = vmatpush2.msra.mxu0 0.0
          %278 = vmatprep.subr.mxu0 0.0
          %279 = vmatpush2.msra.mxu0 0.0
          %280 = vmatprep.subr.mxu0 0.0
          %281 = vmatpush2.msra.mxu0 0.0
          %282 = vmatprep.subr.mxu0 0.0
          %283 = vmatpush2.msra.mxu0 0.0
          %284 = vmatprep.subr.mxu0 0.0
          %285 = vmatpush2.msra.mxu0 0.0
          %286 = vmatprep.subr.mxu0 0.0
          %287 = vmatpush2.msra.mxu0 0.0
          %288 = vmatprep.subr.mxu0 0.0
          %289 = vmatpush2.msra.mxu0 0.0
          %290 = vmatprep.subr.mxu0 0.0
          %291 = vmatpush2.msra.mxu0 0.0
          %292 = vmatprep.subr.mxu0 0.0
          %293 = vmatpush2.msra.mxu0 0.0
          %294 = vmatprep.subr.mxu0 0.0
          %295 = vmatpush2.msra.mxu0 0.0
          %296 = vmatprep.subr.mxu0 0.0
          %297 = vmatpush2.msra.mxu0 0.0
          %298 = vmatprep.subr.mxu0 0.0
          %299 = vmatpush2.msra.mxu0 0.0
          %300 = vmatprep.subr.mxu0 0.0
          %301 = vmatpush2.msra.mxu0 0.0
          %302 = vmatprep.subr.mxu0 0.0
          %303 = vmatpush2.msra.mxu0 0.0
          %304 = vmatprep.subr.mxu0 0.0
          %305 = vmatpush2.msra.mxu0 0.0
          %306 = vmatprep.mubr.f32.mxu0 0.0
          %307 = vmatmul.mubr.f32.gmra.mxu0 %v240
          %v308 = vpop.f32.mrf.mxu0
          %v309 = vadd.f32 0.0, %v308
          %v310 = vpop.f32.mrf.mxu0
          %311 = vdwg.mxu0
          %316 = vrot.lane.b32.xlu0 %v234, 96
          %v317 = vpop.permute.xlu0 %316
          %318 = vrot.lane.b32.xlu0 %v235, 96
          %v319 = vpop.permute.xlu0 %318
          %320 = vrot.lane.b32.xlu0 %v236, 96
          %v321 = vpop.permute.xlu0 %320
          %322 = vrot.lane.b32.xlu0 %v237, 96
          %v323 = vpop.permute.xlu0 %322
          %328 = vmatprep.subr.mxu0 0.0
          %329 = vmatpush1.msra.mxu0 0.0
          %330 = vmatprep.subr.mxu0 0.0
          %331 = vmatpush1.msra.mxu0 0.0
          %332 = vmatprep.subr.mxu0 0.0
          %333 = vmatpush1.msra.mxu0 0.0
          %334 = vmatprep.subr.mxu0 0.0
          %335 = vmatpush1.msra.mxu0 0.0
          %336 = vmatprep.subr.mxu0 0.0
          %337 = vmatpush1.msra.mxu0 0.0
          %338 = vmatprep.subr.mxu0 0.0
          %339 = vmatpush1.msra.mxu0 0.0
          %340 = vmatprep.subr.mxu0 0.0
          %341 = vmatpush1.msra.mxu0 0.0
          %342 = vmatprep.subr.mxu0 0.0
          %343 = vmatpush1.msra.mxu0 0.0
          %344 = vmatprep.subr.mxu0 0.0
          %345 = vmatpush1.msra.mxu0 0.0
          %346 = vmatprep.subr.mxu0 0.0
          %347 = vmatpush1.msra.mxu0 0.0
          %348 = vmatprep.subr.mxu0 0.0
          %349 = vmatpush1.msra.mxu0 0.0
          %350 = vmatprep.subr.mxu0 0.0
          %351 = vmatpush1.msra.mxu0 0.0
          %352 = vmatprep.subr.mxu0 0.0
          %353 = vmatpush1.msra.mxu0 %v323
          %354 = vmatprep.subr.mxu0 0.0
          %355 = vmatpush1.msra.mxu0 %v321
          %356 = vmatprep.subr.mxu0 0.0
          %357 = vmatpush1.msra.mxu0 %v319
          %358 = vmatprep.subr.mxu0 0.0
          %359 = vmatpush1.msra.mxu0 %v317
          %360 = vmatprep.subr.mxu0 0.0
          %361 = vmatpush2.msra.mxu0 0.0
          %362 = vmatprep.subr.mxu0 0.0
          %363 = vmatpush2.msra.mxu0 0.0
          %364 = vmatprep.subr.mxu0 0.0
          %365 = vmatpush2.msra.mxu0 0.0
          %366 = vmatprep.subr.mxu0 0.0
          %367 = vmatpush2.msra.mxu0 0.0
          %368 = vmatprep.subr.mxu0 0.0
          %369 = vmatpush2.msra.mxu0 0.0
          %370 = vmatprep.subr.mxu0 0.0
          %371 = vmatpush2.msra.mxu0 0.0
          %372 = vmatprep.subr.mxu0 0.0
          %373 = vmatpush2.msra.mxu0 0.0
          %374 = vmatprep.subr.mxu0 0.0
          %375 = vmatpush2.msra.mxu0 0.0
          %376 = vmatprep.subr.mxu0 0.0
          %377 = vmatpush2.msra.mxu0 0.0
          %378 = vmatprep.subr.mxu0 0.0
          %379 = vmatpush2.msra.mxu0 0.0
          %380 = vmatprep.subr.mxu0 0.0
          %381 = vmatpush2.msra.mxu0 0.0
          %382 = vmatprep.subr.mxu0 0.0
          %383 = vmatpush2.msra.mxu0 0.0
          %384 = vmatprep.subr.mxu0 0.0
          %385 = vmatpush2.msra.mxu0 0.0
          %386 = vmatprep.subr.mxu0 0.0
          %387 = vmatpush2.msra.mxu0 0.0
          %388 = vmatprep.subr.mxu0 0.0
          %389 = vmatpush2.msra.mxu0 0.0
          %390 = vmatprep.subr.mxu0 0.0
          %391 = vmatpush2.msra.mxu0 0.0
          %392 = vmatprep.mubr.f32.mxu0 0.0
          %393 = vmatmul.mubr.f32.gmra.mxu0 %v240
          %v394 = vpop.f32.mrf.mxu0
          %v395 = vadd.f32 0.0, %v394
          %v396 = vpop.f32.mrf.mxu0
          %397 = vdwg.mxu0
          %398 = vrot.lane.b32.xlu0 %v234, 64
          %v399 = vpop.permute.xlu0 %398
          %400 = vrot.lane.b32.xlu0 %v235, 64
          %v401 = vpop.permute.xlu0 %400
          %402 = vrot.lane.b32.xlu0 %v236, 64
          %v403 = vpop.permute.xlu0 %402
          %404 = vrot.lane.b32.xlu0 %v237, 64
          %v405 = vpop.permute.xlu0 %404
          %410 = vmatprep.subr.mxu0 0.0
          %411 = vmatpush1.msra.mxu0 0.0
          %412 = vmatprep.subr.mxu0 0.0
          %413 = vmatpush1.msra.mxu0 0.0
          %414 = vmatprep.subr.mxu0 0.0
          %415 = vmatpush1.msra.mxu0 0.0
          %416 = vmatprep.subr.mxu0 0.0
          %417 = vmatpush1.msra.mxu0 0.0
          %418 = vmatprep.subr.mxu0 0.0
          %419 = vmatpush1.msra.mxu0 0.0
          %420 = vmatprep.subr.mxu0 0.0
          %421 = vmatpush1.msra.mxu0 0.0
          %422 = vmatprep.subr.mxu0 0.0
          %423 = vmatpush1.msra.mxu0 0.0
          %424 = vmatprep.subr.mxu0 0.0
          %425 = vmatpush1.msra.mxu0 0.0
          %426 = vmatprep.subr.mxu0 0.0
          %427 = vmatpush1.msra.mxu0 0.0
          %428 = vmatprep.subr.mxu0 0.0
          %429 = vmatpush1.msra.mxu0 0.0
          %430 = vmatprep.subr.mxu0 0.0
          %431 = vmatpush1.msra.mxu0 0.0
          %432 = vmatprep.subr.mxu0 0.0
          %433 = vmatpush1.msra.mxu0 0.0
          %434 = vmatprep.subr.mxu0 0.0
          %435 = vmatpush1.msra.mxu0 %v405
          %436 = vmatprep.subr.mxu0 0.0
          %437 = vmatpush1.msra.mxu0 %v403
          %438 = vmatprep.subr.mxu0 0.0
          %439 = vmatpush1.msra.mxu0 %v401
          %440 = vmatprep.subr.mxu0 0.0
          %441 = vmatpush1.msra.mxu0 %v399
          %442 = vmatprep.subr.mxu0 0.0
          %443 = vmatpush2.msra.mxu0 0.0
          %444 = vmatprep.subr.mxu0 0.0
          %445 = vmatpush2.msra.mxu0 0.0
          %446 = vmatprep.subr.mxu0 0.0
          %447 = vmatpush2.msra.mxu0 0.0
          %448 = vmatprep.subr.mxu0 0.0
          %449 = vmatpush2.msra.mxu0 0.0
          %450 = vmatprep.subr.mxu0 0.0
          %451 = vmatpush2.msra.mxu0 0.0
          %452 = vmatprep.subr.mxu0 0.0
          %453 = vmatpush2.msra.mxu0 0.0
          %454 = vmatprep.subr.mxu0 0.0
          %455 = vmatpush2.msra.mxu0 0.0
          %456 = vmatprep.subr.mxu0 0.0
          %457 = vmatpush2.msra.mxu0 0.0
          %458 = vmatprep.subr.mxu0 0.0
          %459 = vmatpush2.msra.mxu0 0.0
          %460 = vmatprep.subr.mxu0 0.0
          %461 = vmatpush2.msra.mxu0 0.0
          %462 = vmatprep.subr.mxu0 0.0
          %463 = vmatpush2.msra.mxu0 0.0
          %464 = vmatprep.subr.mxu0 0.0
          %465 = vmatpush2.msra.mxu0 0.0
          %466 = vmatprep.subr.mxu0 0.0
          %467 = vmatpush2.msra.mxu0 0.0
          %468 = vmatprep.subr.mxu0 0.0
          %469 = vmatpush2.msra.mxu0 0.0
          %470 = vmatprep.subr.mxu0 0.0
          %471 = vmatpush2.msra.mxu0 0.0
          %472 = vmatprep.subr.mxu0 0.0
          %473 = vmatpush2.msra.mxu0 0.0
          %474 = vmatprep.mubr.f32.mxu0 0.0
          %475 = vmatmul.mubr.f32.gmra.mxu0 %v240
          %v476 = vpop.f32.mrf.mxu0
          %v477 = vadd.f32 0.0, %v476
          %v478 = vpop.f32.mrf.mxu0
          %479 = vdwg.mxu0
          %vm480 = vcmask 64512
          %481 = vst.msk [vmem:[#allocation2] sm:$0xff] %vm480, %v309
          %482 = vxpose.xlu0.b32.start [1/16] %v395, 128
          %483 = vxpose.xlu0.b32.cont [2/16] 0.0, 128
          %484 = vxpose.xlu0.b32.cont [3/16] 0.0, 128
          %485 = vxpose.xlu0.b32.cont [4/16] 0.0, 128
          %486 = vxpose.xlu0.b32.cont [5/16] 0.0, 128
          %487 = vxpose.xlu0.b32.cont [6/16] 0.0, 128
          %488 = vxpose.xlu0.b32.cont [7/16] 0.0, 128
          %489 = vxpose.xlu0.b32.cont [8/16] 0.0, 128
          %490 = vxpose.xlu0.b32.cont [9/16] 0.0, 128
          %491 = vxpose.xlu0.b32.cont [10/16] 0.0, 128
          %492 = vxpose.xlu0.b32.cont [11/16] 0.0, 128
          %493 = vxpose.xlu0.b32.cont [12/16] 0.0, 128
          %494 = vxpose.xlu0.b32.cont [13/16] 0.0, 128
          %495 = vxpose.xlu0.b32.cont [14/16] 0.0, 128
          %496 = vxpose.xlu0.b32.cont [15/16] 0.0, 128
          %497 = vxpose.xlu0.b32.end [16/16] 0.0, 128
          %v498 = vpop.trf.xlu0
          %v499 = vpop.trf.xlu0
          %v500 = vpop.trf.xlu0
          %v501 = vpop.trf.xlu0
          %v502 = vpop.trf.xlu0
          %v503 = vpop.trf.xlu0
          %v504 = vpop.trf.xlu0
          %v505 = vpop.trf.xlu0
          %v506 = vpop.trf.xlu0
          %v507 = vpop.trf.xlu0
          %v508 = vpop.trf.xlu0
          %v509 = vpop.trf.xlu0
          %v510 = vpop.trf.xlu0
          %v511 = vpop.trf.xlu0
          %v512 = vpop.trf.xlu0
          %v513 = vpop.trf.xlu0
          %514 = vst.msk [vmem:[#allocation3] sm:$0xff] %vm480, %v498
          %515 = vst.msk [vmem:[#allocation4] sm:$0xff] %vm480, %v477
          %517 = vrot.lane.b32.xlu0 %v309, 120
          %v518 = vpop.permute.xlu0 %517
          %s520 = scalar_lea.vmem [#allocation2], 8
          %521 = vst.msk [vmem:[%s520] sm:$0xff] %vm480, %v518
          %523 = vrot.lane.b32.xlu0 %v395, 120
          %v524 = vpop.permute.xlu0 %523
          %526 = vxpose.xlu0.b32.start [1/16] %v524, 128
          %527 = vxpose.xlu0.b32.cont [2/16] 0.0, 128
          %528 = vxpose.xlu0.b32.cont [3/16] 0.0, 128
          %529 = vxpose.xlu0.b32.cont [4/16] 0.0, 128
          %530 = vxpose.xlu0.b32.cont [5/16] 0.0, 128
          %531 = vxpose.xlu0.b32.cont [6/16] 0.0, 128
          %532 = vxpose.xlu0.b32.cont [7/16] 0.0, 128
          %533 = vxpose.xlu0.b32.cont [8/16] 0.0, 128
          %534 = vxpose.xlu0.b32.cont [9/16] 0.0, 128
          %535 = vxpose.xlu0.b32.cont [10/16] 0.0, 128
          %536 = vxpose.xlu0.b32.cont [11/16] 0.0, 128
          %537 = vxpose.xlu0.b32.cont [12/16] 0.0, 128
          %538 = vxpose.xlu0.b32.cont [13/16] 0.0, 128
          %539 = vxpose.xlu0.b32.cont [14/16] 0.0, 128
          %540 = vxpose.xlu0.b32.cont [15/16] 0.0, 128
          %541 = vxpose.xlu0.b32.end [16/16] 0.0, 128
          %v542 = vpop.trf.xlu0
          %v543 = vpop.trf.xlu0
          %v544 = vpop.trf.xlu0
          %v545 = vpop.trf.xlu0
          %v546 = vpop.trf.xlu0
          %v547 = vpop.trf.xlu0
          %v548 = vpop.trf.xlu0
          %v549 = vpop.trf.xlu0
          %v550 = vpop.trf.xlu0
          %v551 = vpop.trf.xlu0
          %v552 = vpop.trf.xlu0
          %v553 = vpop.trf.xlu0
          %v554 = vpop.trf.xlu0
          %v555 = vpop.trf.xlu0
          %v556 = vpop.trf.xlu0
          %v557 = vpop.trf.xlu0
          %s558 = scalar_lea.vmem [#allocation3], 8
          %559 = vst.msk [vmem:[%s558] sm:$0xff] %vm480, %v542
          %561 = vrot.lane.b32.xlu0 %v477, 120
          %v562 = vpop.permute.xlu0 %561
          %s564 = scalar_lea.vmem [#allocation4], 8
          %565 = vst.msk [vmem:[%s564] sm:$0xff] %vm480, %v562
          %566 = vrot.lane.b32.xlu0 %v309, 112
          %v567 = vpop.permute.xlu0 %566
          %s569 = scalar_lea.vmem [#allocation2], 16
          %570 = vst.msk [vmem:[%s569] sm:$0xff] %vm480, %v567
          %571 = vrot.lane.b32.xlu0 %v395, 112
          %v572 = vpop.permute.xlu0 %571
          %574 = vxpose.xlu0.b32.start [1/16] %v572, 128
          %575 = vxpose.xlu0.b32.cont [2/16] 0.0, 128
          %576 = vxpose.xlu0.b32.cont [3/16] 0.0, 128
          %577 = vxpose.xlu0.b32.cont [4/16] 0.0, 128
          %578 = vxpose.xlu0.b32.cont [5/16] 0.0, 128
          %579 = vxpose.xlu0.b32.cont [6/16] 0.0, 128
          %580 = vxpose.xlu0.b32.cont [7/16] 0.0, 128
          %581 = vxpose.xlu0.b32.cont [8/16] 0.0, 128
          %582 = vxpose.xlu0.b32.cont [9/16] 0.0, 128
          %583 = vxpose.xlu0.b32.cont [10/16] 0.0, 128
          %584 = vxpose.xlu0.b32.cont [11/16] 0.0, 128
          %585 = vxpose.xlu0.b32.cont [12/16] 0.0, 128
          %586 = vxpose.xlu0.b32.cont [13/16] 0.0, 128
          %587 = vxpose.xlu0.b32.cont [14/16] 0.0, 128
          %588 = vxpose.xlu0.b32.cont [15/16] 0.0, 128
          %589 = vxpose.xlu0.b32.end [16/16] 0.0, 128
          %v590 = vpop.trf.xlu0
          %v591 = vpop.trf.xlu0
          %v592 = vpop.trf.xlu0
          %v593 = vpop.trf.xlu0
          %v594 = vpop.trf.xlu0
          %v595 = vpop.trf.xlu0
          %v596 = vpop.trf.xlu0
          %v597 = vpop.trf.xlu0
          %v598 = vpop.trf.xlu0
          %v599 = vpop.trf.xlu0
          %v600 = vpop.trf.xlu0
          %v601 = vpop.trf.xlu0
          %v602 = vpop.trf.xlu0
          %v603 = vpop.trf.xlu0
          %v604 = vpop.trf.xlu0
          %v605 = vpop.trf.xlu0
          %s606 = scalar_lea.vmem [#allocation3], 16
          %607 = vst.msk [vmem:[%s606] sm:$0xff] %vm480, %v590
          %608 = vrot.lane.b32.xlu0 %v477, 112
          %v609 = vpop.permute.xlu0 %608
          %s611 = scalar_lea.vmem [#allocation4], 16
          %612 = vst.msk [vmem:[%s611] sm:$0xff] %vm480, %v609
          %613 = vrot.lane.b32.xlu0 %v309, 104
          %v614 = vpop.permute.xlu0 %613
          %s616 = scalar_lea.vmem [#allocation2], 24
          %617 = vst.msk [vmem:[%s616] sm:$0xff] %vm480, %v614
          %618 = vrot.lane.b32.xlu0 %v395, 104
          %v619 = vpop.permute.xlu0 %618
          %621 = vxpose.xlu0.b32.start [1/16] %v619, 128
          %622 = vxpose.xlu0.b32.cont [2/16] 0.0, 128
          %623 = vxpose.xlu0.b32.cont [3/16] 0.0, 128
          %624 = vxpose.xlu0.b32.cont [4/16] 0.0, 128
          %625 = vxpose.xlu0.b32.cont [5/16] 0.0, 128
          %626 = vxpose.xlu0.b32.cont [6/16] 0.0, 128
          %627 = vxpose.xlu0.b32.cont [7/16] 0.0, 128
          %628 = vxpose.xlu0.b32.cont [8/16] 0.0, 128
          %629 = vxpose.xlu0.b32.cont [9/16] 0.0, 128
          %630 = vxpose.xlu0.b32.cont [10/16] 0.0, 128
          %631 = vxpose.xlu0.b32.cont [11/16] 0.0, 128
          %632 = vxpose.xlu0.b32.cont [12/16] 0.0, 128
          %633 = vxpose.xlu0.b32.cont [13/16] 0.0, 128
          %634 = vxpose.xlu0.b32.cont [14/16] 0.0, 128
          %635 = vxpose.xlu0.b32.cont [15/16] 0.0, 128
          %636 = vxpose.xlu0.b32.end [16/16] 0.0, 128
          %v637 = vpop.trf.xlu0
          %v638 = vpop.trf.xlu0
          %v639 = vpop.trf.xlu0
          %v640 = vpop.trf.xlu0
          %v641 = vpop.trf.xlu0
          %v642 = vpop.trf.xlu0
          %v643 = vpop.trf.xlu0
          %v644 = vpop.trf.xlu0
          %v645 = vpop.trf.xlu0
          %v646 = vpop.trf.xlu0
          %v647 = vpop.trf.xlu0
          %v648 = vpop.trf.xlu0
          %v649 = vpop.trf.xlu0
          %v650 = vpop.trf.xlu0
          %v651 = vpop.trf.xlu0
          %v652 = vpop.trf.xlu0
          %s653 = scalar_lea.vmem [#allocation3], 24
          %654 = vst.msk [vmem:[%s653] sm:$0xff] %vm480, %v637
          %655 = vrot.lane.b32.xlu0 %v477, 104
          %v656 = vpop.permute.xlu0 %655
          %s658 = scalar_lea.vmem [#allocation4], 24
          %659 = vst.msk [vmem:[%s658] sm:$0xff] %vm480, %v656
        $region48: #{tpu_custom_call.1} parent=31 // pred_fallthru
          _
        %s660 = smul.u32 %s26, 8
        %s661 = scalar_lea.vmem [#allocation2], %s660
        %v662 = vld [vmem:[%s661] sm:$0xff]
        %v663 = vld [vmem:[#allocation3] sm:$0xff]
        %vm664 = vcmask 64512
        %v666 = vsel %vm664, %v662, 0
        %668 = vmatprep.subr.mxu0 0.0
        %669 = vmatpush1.msra.mxu0 0.0
        %670 = vmatprep.subr.mxu0 0.0
        %671 = vmatpush1.msra.mxu0 0.0
        %672 = vmatprep.subr.mxu0 0.0
        %673 = vmatpush1.msra.mxu0 0.0
        %674 = vmatprep.subr.mxu0 0.0
        %675 = vmatpush1.msra.mxu0 0.0
        %676 = vmatprep.subr.mxu0 0.0
        %677 = vmatpush1.msra.mxu0 0.0
        %678 = vmatprep.subr.mxu0 0.0
        %679 = vmatpush1.msra.mxu0 0.0
        %680 = vmatprep.subr.mxu0 0.0
        %681 = vmatpush1.msra.mxu0 0.0
        %682 = vmatprep.subr.mxu0 0.0
        %683 = vmatpush1.msra.mxu0 0.0
        %684 = vmatprep.subr.mxu0 0.0
        %685 = vmatpush1.msra.mxu0 0.0
        %686 = vmatprep.subr.mxu0 0.0
        %687 = vmatpush1.msra.mxu0 0.0
        %688 = vmatprep.subr.mxu0 0.0
        %689 = vmatpush1.msra.mxu0 0.0
        %690 = vmatprep.subr.mxu0 0.0
        %691 = vmatpush1.msra.mxu0 0.0
        %692 = vmatprep.subr.mxu0 0.0
        %693 = vmatpush1.msra.mxu0 0.0
        %694 = vmatprep.subr.mxu0 0.0
        %695 = vmatpush1.msra.mxu0 0.0
        %696 = vmatprep.subr.mxu0 0.0
        %697 = vmatpush1.msra.mxu0 0.0
        %698 = vmatprep.subr.mxu0 0.0
        %699 = vmatpush1.msra.mxu0 %v663
        %700 = vmatprep.subr.mxu0 0.0
        %701 = vmatpush2.msra.mxu0 0.0
        %702 = vmatprep.subr.mxu0 0.0
        %703 = vmatpush2.msra.mxu0 0.0
        %704 = vmatprep.subr.mxu0 0.0
        %705 = vmatpush2.msra.mxu0 0.0
        %706 = vmatprep.subr.mxu0 0.0
        %707 = vmatpush2.msra.mxu0 0.0
        %708 = vmatprep.subr.mxu0 0.0
        %709 = vmatpush2.msra.mxu0 0.0
        %710 = vmatprep.subr.mxu0 0.0
        %711 = vmatpush2.msra.mxu0 0.0
        %712 = vmatprep.subr.mxu0 0.0
        %713 = vmatpush2.msra.mxu0 0.0
        %714 = vmatprep.subr.mxu0 0.0
        %715 = vmatpush2.msra.mxu0 0.0
        %716 = vmatprep.subr.mxu0 0.0
        %717 = vmatpush2.msra.mxu0 0.0
        %718 = vmatprep.subr.mxu0 0.0
        %719 = vmatpush2.msra.mxu0 0.0
        %720 = vmatprep.subr.mxu0 0.0
        %721 = vmatpush2.msra.mxu0 0.0
        %722 = vmatprep.subr.mxu0 0.0
        %723 = vmatpush2.msra.mxu0 0.0
        %724 = vmatprep.subr.mxu0 0.0
        %725 = vmatpush2.msra.mxu0 0.0
        %726 = vmatprep.subr.mxu0 0.0
        %727 = vmatpush2.msra.mxu0 0.0
        %728 = vmatprep.subr.mxu0 0.0
        %729 = vmatpush2.msra.mxu0 0.0
        %730 = vmatprep.subr.mxu0 0.0
        %731 = vmatpush2.msra.mxu0 0.0
        %732 = vmatprep.mubr.f32.mxu0 0.0
        %733 = vmatmul.mubr.f32.gmra.mxu0 %v666
        %v734 = vpop.f32.mrf.mxu0
        %v735 = vadd.f32 0.0, %v734
        %v736 = vpop.f32.mrf.mxu0
        %737 = vdwg.mxu0
        %v738 = vsel %vm664, %v735, -inf
        %739 = vmax.xlane.f32.xlu0 %v738
        %v740 = vpop.xlane.xlu0 %739
        %v741 = vsub.f32 %v735, %v740
        %v742 = vmul.f32 %v741, 1.442695
        %v743 = vpow.pop %v742
        %v744 = vsel %vm664, %v743, 0.0
        %745 = vadd.xlane.f32.xlu0 %v744
        %v746 = vpop.xlane.xlu0 %745
        %v747 = vrcp.pop %v746
        %v748 = vld [vmem:[#allocation4] sm:$0xff]
        %v750 = vsel %vm664, %v743, 0
        %752 = vmatprep.subr.mxu0 0.0
        %753 = vmatpush1.msra.mxu0 0.0
        %754 = vmatprep.subr.mxu0 0.0
        %755 = vmatpush1.msra.mxu0 0.0
        %756 = vmatprep.subr.mxu0 0.0
        %757 = vmatpush1.msra.mxu0 0.0
        %758 = vmatprep.subr.mxu0 0.0
        %759 = vmatpush1.msra.mxu0 0.0
        %760 = vmatprep.subr.mxu0 0.0
        %761 = vmatpush1.msra.mxu0 0.0
        %762 = vmatprep.subr.mxu0 0.0
        %763 = vmatpush1.msra.mxu0 0.0
        %764 = vmatprep.subr.mxu0 0.0
        %765 = vmatpush1.msra.mxu0 0.0
        %766 = vmatprep.subr.mxu0 0.0
        %767 = vmatpush1.msra.mxu0 0.0
        %768 = vmatprep.subr.mxu0 0.0
        %769 = vmatpush1.msra.mxu0 0.0
        %770 = vmatprep.subr.mxu0 0.0
        %771 = vmatpush1.msra.mxu0 0.0
        %772 = vmatprep.subr.mxu0 0.0
        %773 = vmatpush1.msra.mxu0 0.0
        %774 = vmatprep.subr.mxu0 0.0
        %775 = vmatpush1.msra.mxu0 0.0
        %776 = vmatprep.subr.mxu0 0.0
        %777 = vmatpush1.msra.mxu0 0.0
        %778 = vmatprep.subr.mxu0 0.0
        %779 = vmatpush1.msra.mxu0 0.0
        %780 = vmatprep.subr.mxu0 0.0
        %781 = vmatpush1.msra.mxu0 0.0
        %782 = vmatprep.subr.mxu0 0.0
        %783 = vmatpush1.msra.mxu0 %v748
        %784 = vmatprep.subr.mxu0 0.0
        %785 = vmatpush2.msra.mxu0 0.0
        %786 = vmatprep.subr.mxu0 0.0
        %787 = vmatpush2.msra.mxu0 0.0
        %788 = vmatprep.subr.mxu0 0.0
        %789 = vmatpush2.msra.mxu0 0.0
        %790 = vmatprep.subr.mxu0 0.0
        %791 = vmatpush2.msra.mxu0 0.0
        %792 = vmatprep.subr.mxu0 0.0
        %793 = vmatpush2.msra.mxu0 0.0
        %794 = vmatprep.subr.mxu0 0.0
        %795 = vmatpush2.msra.mxu0 0.0
        %796 = vmatprep.subr.mxu0 0.0
        %797 = vmatpush2.msra.mxu0 0.0
        %798 = vmatprep.subr.mxu0 0.0
        %799 = vmatpush2.msra.mxu0 0.0
        %800 = vmatprep.subr.mxu0 0.0
        %801 = vmatpush2.msra.mxu0 0.0
        %802 = vmatprep.subr.mxu0 0.0
        %803 = vmatpush2.msra.mxu0 0.0
        %804 = vmatprep.subr.mxu0 0.0
        %805 = vmatpush2.msra.mxu0 0.0
        %806 = vmatprep.subr.mxu0 0.0
        %807 = vmatpush2.msra.mxu0 0.0
        %808 = vmatprep.subr.mxu0 0.0
        %809 = vmatpush2.msra.mxu0 0.0
        %810 = vmatprep.subr.mxu0 0.0
        %811 = vmatpush2.msra.mxu0 0.0
        %812 = vmatprep.subr.mxu0 0.0
        %813 = vmatpush2.msra.mxu0 0.0
        %814 = vmatprep.subr.mxu0 0.0
        %815 = vmatpush2.msra.mxu0 0.0
        %816 = vmatprep.mubr.f32.mxu0 0.0
        %817 = vmatmul.mubr.f32.gmra.mxu0 %v750
        %v818 = vpop.f32.mrf.mxu0
        %v819 = vadd.f32 0.0, %v818
        %v820 = vpop.f32.mrf.mxu0
        %821 = vdwg.mxu0
        %v822 = vmul.f32 %v819, %v747
        %823 = vst.msk [vmem:[#allocation5] sm:$0xff] %vm664, %v822
        %s824 = sadd.s32 %s660, 8
        %s825 = scalar_lea.vmem [#allocation2], %s824
        %v826 = vld [vmem:[%s825] sm:$0xff]
        %s827 = scalar_lea.vmem [#allocation3], 8
        %v828 = vld [vmem:[%s827] sm:$0xff]
        %v830 = vsel %vm664, %v826, 0
        %832 = vmatprep.subr.mxu0 0.0
        %833 = vmatpush1.msra.mxu0 0.0
        %834 = vmatprep.subr.mxu0 0.0
        %835 = vmatpush1.msra.mxu0 0.0
        %836 = vmatprep.subr.mxu0 0.0
        %837 = vmatpush1.msra.mxu0 0.0
        %838 = vmatprep.subr.mxu0 0.0
        %839 = vmatpush1.msra.mxu0 0.0
        %840 = vmatprep.subr.mxu0 0.0
        %841 = vmatpush1.msra.mxu0 0.0
        %842 = vmatprep.subr.mxu0 0.0
        %843 = vmatpush1.msra.mxu0 0.0
        %844 = vmatprep.subr.mxu0 0.0
        %845 = vmatpush1.msra.mxu0 0.0
        %846 = vmatprep.subr.mxu0 0.0
        %847 = vmatpush1.msra.mxu0 0.0
        %848 = vmatprep.subr.mxu0 0.0
        %849 = vmatpush1.msra.mxu0 0.0
        %850 = vmatprep.subr.mxu0 0.0
        %851 = vmatpush1.msra.mxu0 0.0
        %852 = vmatprep.subr.mxu0 0.0
        %853 = vmatpush1.msra.mxu0 0.0
        %854 = vmatprep.subr.mxu0 0.0
        %855 = vmatpush1.msra.mxu0 0.0
        %856 = vmatprep.subr.mxu0 0.0
        %857 = vmatpush1.msra.mxu0 0.0
        %858 = vmatprep.subr.mxu0 0.0
        %859 = vmatpush1.msra.mxu0 0.0
        %860 = vmatprep.subr.mxu0 0.0
        %861 = vmatpush1.msra.mxu0 0.0
        %862 = vmatprep.subr.mxu0 0.0
        %863 = vmatpush1.msra.mxu0 %v828
        %864 = vmatprep.subr.mxu0 0.0
        %865 = vmatpush2.msra.mxu0 0.0
        %866 = vmatprep.subr.mxu0 0.0
        %867 = vmatpush2.msra.mxu0 0.0
        %868 = vmatprep.subr.mxu0 0.0
        %869 = vmatpush2.msra.mxu0 0.0
        %870 = vmatprep.subr.mxu0 0.0
        %871 = vmatpush2.msra.mxu0 0.0
        %872 = vmatprep.subr.mxu0 0.0
        %873 = vmatpush2.msra.mxu0 0.0
        %874 = vmatprep.subr.mxu0 0.0
        %875 = vmatpush2.msra.mxu0 0.0
        %876 = vmatprep.subr.mxu0 0.0
        %877 = vmatpush2.msra.mxu0 0.0
        %878 = vmatprep.subr.mxu0 0.0
        %879 = vmatpush2.msra.mxu0 0.0
        %880 = vmatprep.subr.mxu0 0.0
        %881 = vmatpush2.msra.mxu0 0.0
        %882 = vmatprep.subr.mxu0 0.0
        %883 = vmatpush2.msra.mxu0 0.0
        %884 = vmatprep.subr.mxu0 0.0
        %885 = vmatpush2.msra.mxu0 0.0
        %886 = vmatprep.subr.mxu0 0.0
        %887 = vmatpush2.msra.mxu0 0.0
        %888 = vmatprep.subr.mxu0 0.0
        %889 = vmatpush2.msra.mxu0 0.0
        %890 = vmatprep.subr.mxu0 0.0
        %891 = vmatpush2.msra.mxu0 0.0
        %892 = vmatprep.subr.mxu0 0.0
        %893 = vmatpush2.msra.mxu0 0.0
        %894 = vmatprep.subr.mxu0 0.0
        %895 = vmatpush2.msra.mxu0 0.0
        %896 = vmatprep.mubr.f32.mxu0 0.0
        %897 = vmatmul.mubr.f32.gmra.mxu0 %v830
        %v898 = vpop.f32.mrf.mxu0
        %v899 = vadd.f32 0.0, %v898
        %v900 = vpop.f32.mrf.mxu0
        %901 = vdwg.mxu0
        %v902 = vsel %vm664, %v899, -inf
        %903 = vmax.xlane.f32.xlu0 %v902
        %v904 = vpop.xlane.xlu0 %903
        %v905 = vsub.f32 %v899, %v904
        %v906 = vmul.f32 %v905, 1.442695
        %v907 = vpow.pop %v906
        %v908 = vsel %vm664, %v907, 0.0
        %909 = vadd.xlane.f32.xlu0 %v908
        %v910 = vpop.xlane.xlu0 %909
        %v911 = vrcp.pop %v910
        %s912 = scalar_lea.vmem [#allocation4], 8
        %v913 = vld [vmem:[%s912] sm:$0xff]
        %v915 = vsel %vm664, %v907, 0
        %917 = vmatprep.subr.mxu0 0.0
        %918 = vmatpush1.msra.mxu0 0.0
        %919 = vmatprep.subr.mxu0 0.0
        %920 = vmatpush1.msra.mxu0 0.0
        %921 = vmatprep.subr.mxu0 0.0
        %922 = vmatpush1.msra.mxu0 0.0
        %923 = vmatprep.subr.mxu0 0.0
        %924 = vmatpush1.msra.mxu0 0.0
        %925 = vmatprep.subr.mxu0 0.0
        %926 = vmatpush1.msra.mxu0 0.0
        %927 = vmatprep.subr.mxu0 0.0
        %928 = vmatpush1.msra.mxu0 0.0
        %929 = vmatprep.subr.mxu0 0.0
        %930 = vmatpush1.msra.mxu0 0.0
        %931 = vmatprep.subr.mxu0 0.0
        %932 = vmatpush1.msra.mxu0 0.0
        %933 = vmatprep.subr.mxu0 0.0
        %934 = vmatpush1.msra.mxu0 0.0
        %935 = vmatprep.subr.mxu0 0.0
        %936 = vmatpush1.msra.mxu0 0.0
        %937 = vmatprep.subr.mxu0 0.0
        %938 = vmatpush1.msra.mxu0 0.0
        %939 = vmatprep.subr.mxu0 0.0
        %940 = vmatpush1.msra.mxu0 0.0
        %941 = vmatprep.subr.mxu0 0.0
        %942 = vmatpush1.msra.mxu0 0.0
        %943 = vmatprep.subr.mxu0 0.0
        %944 = vmatpush1.msra.mxu0 0.0
        %945 = vmatprep.subr.mxu0 0.0
        %946 = vmatpush1.msra.mxu0 0.0
        %947 = vmatprep.subr.mxu0 0.0
        %948 = vmatpush1.msra.mxu0 %v913
        %949 = vmatprep.subr.mxu0 0.0
        %950 = vmatpush2.msra.mxu0 0.0
        %951 = vmatprep.subr.mxu0 0.0
        %952 = vmatpush2.msra.mxu0 0.0
        %953 = vmatprep.subr.mxu0 0.0
        %954 = vmatpush2.msra.mxu0 0.0
        %955 = vmatprep.subr.mxu0 0.0
        %956 = vmatpush2.msra.mxu0 0.0
        %957 = vmatprep.subr.mxu0 0.0
        %958 = vmatpush2.msra.mxu0 0.0
        %959 = vmatprep.subr.mxu0 0.0
        %960 = vmatpush2.msra.mxu0 0.0
        %961 = vmatprep.subr.mxu0 0.0
        %962 = vmatpush2.msra.mxu0 0.0
        %963 = vmatprep.subr.mxu0 0.0
        %964 = vmatpush2.msra.mxu0 0.0
        %965 = vmatprep.subr.mxu0 0.0
        %966 = vmatpush2.msra.mxu0 0.0
        %967 = vmatprep.subr.mxu0 0.0
        %968 = vmatpush2.msra.mxu0 0.0
        %969 = vmatprep.subr.mxu0 0.0
        %970 = vmatpush2.msra.mxu0 0.0
        %971 = vmatprep.subr.mxu0 0.0
        %972 = vmatpush2.msra.mxu0 0.0
        %973 = vmatprep.subr.mxu0 0.0
        %974 = vmatpush2.msra.mxu0 0.0
        %975 = vmatprep.subr.mxu0 0.0
        %976 = vmatpush2.msra.mxu0 0.0
        %977 = vmatprep.subr.mxu0 0.0
        %978 = vmatpush2.msra.mxu0 0.0
        %979 = vmatprep.subr.mxu0 0.0
        %980 = vmatpush2.msra.mxu0 0.0
        %981 = vmatprep.mubr.f32.mxu0 0.0
        %982 = vmatmul.mubr.f32.gmra.mxu0 %v915
        %v983 = vpop.f32.mrf.mxu0
        %v984 = vadd.f32 0.0, %v983
        %v985 = vpop.f32.mrf.mxu0
        %986 = vdwg.mxu0
        %v987 = vmul.f32 %v984, %v911
        %989 = vrot.lane.b32.xlu0 %v987, 8
        %v990 = vpop.permute.xlu0 %989
        %vm992 = vcmask 130112
        %993 = vst.msk [vmem:[#allocation5] sm:$0xff] %vm992, %v990
        %s994 = sadd.s32 %s660, 16
        %s995 = scalar_lea.vmem [#allocation2], %s994
        %v996 = vld [vmem:[%s995] sm:$0xff]
        %s997 = scalar_lea.vmem [#allocation3], 16
        %v998 = vld [vmem:[%s997] sm:$0xff]
        %v1000 = vsel %vm664, %v996, 0
        %1002 = vmatprep.subr.mxu0 0.0
        %1003 = vmatpush1.msra.mxu0 0.0
        %1004 = vmatprep.subr.mxu0 0.0
        %1005 = vmatpush1.msra.mxu0 0.0
        %1006 = vmatprep.subr.mxu0 0.0
        %1007 = vmatpush1.msra.mxu0 0.0
        %1008 = vmatprep.subr.mxu0 0.0
        %1009 = vmatpush1.msra.mxu0 0.0
        %1010 = vmatprep.subr.mxu0 0.0
        %1011 = vmatpush1.msra.mxu0 0.0
        %1012 = vmatprep.subr.mxu0 0.0
        %1013 = vmatpush1.msra.mxu0 0.0
        %1014 = vmatprep.subr.mxu0 0.0
        %1015 = vmatpush1.msra.mxu0 0.0
        %1016 = vmatprep.subr.mxu0 0.0
        %1017 = vmatpush1.msra.mxu0 0.0
        %1018 = vmatprep.subr.mxu0 0.0
        %1019 = vmatpush1.msra.mxu0 0.0
        %1020 = vmatprep.subr.mxu0 0.0
        %1021 = vmatpush1.msra.mxu0 0.0
        %1022 = vmatprep.subr.mxu0 0.0
        %1023 = vmatpush1.msra.mxu0 0.0
        %1024 = vmatprep.subr.mxu0 0.0
        %1025 = vmatpush1.msra.mxu0 0.0
        %1026 = vmatprep.subr.mxu0 0.0
        %1027 = vmatpush1.msra.mxu0 0.0
        %1028 = vmatprep.subr.mxu0 0.0
        %1029 = vmatpush1.msra.mxu0 0.0
        %1030 = vmatprep.subr.mxu0 0.0
        %1031 = vmatpush1.msra.mxu0 0.0
        %1032 = vmatprep.subr.mxu0 0.0
        %1033 = vmatpush1.msra.mxu0 %v998
        %1034 = vmatprep.subr.mxu0 0.0
        %1035 = vmatpush2.msra.mxu0 0.0
        %1036 = vmatprep.subr.mxu0 0.0
        %1037 = vmatpush2.msra.mxu0 0.0
        %1038 = vmatprep.subr.mxu0 0.0
        %1039 = vmatpush2.msra.mxu0 0.0
        %1040 = vmatprep.subr.mxu0 0.0
        %1041 = vmatpush2.msra.mxu0 0.0
        %1042 = vmatprep.subr.mxu0 0.0
        %1043 = vmatpush2.msra.mxu0 0.0
        %1044 = vmatprep.subr.mxu0 0.0
        %1045 = vmatpush2.msra.mxu0 0.0
        %1046 = vmatprep.subr.mxu0 0.0
        %1047 = vmatpush2.msra.mxu0 0.0
        %1048 = vmatprep.subr.mxu0 0.0
        %1049 = vmatpush2.msra.mxu0 0.0
        %1050 = vmatprep.subr.mxu0 0.0
        %1051 = vmatpush2.msra.mxu0 0.0
        %1052 = vmatprep.subr.mxu0 0.0
        %1053 = vmatpush2.msra.mxu0 0.0
        %1054 = vmatprep.subr.mxu0 0.0
        %1055 = vmatpush2.msra.mxu0 0.0
        %1056 = vmatprep.subr.mxu0 0.0
        %1057 = vmatpush2.msra.mxu0 0.0
        %1058 = vmatprep.subr.mxu0 0.0
        %1059 = vmatpush2.msra.mxu0 0.0
        %1060 = vmatprep.subr.mxu0 0.0
        %1061 = vmatpush2.msra.mxu0 0.0
        %1062 = vmatprep.subr.mxu0 0.0
        %1063 = vmatpush2.msra.mxu0 0.0
        %1064 = vmatprep.subr.mxu0 0.0
        %1065 = vmatpush2.msra.mxu0 0.0
        %1066 = vmatprep.mubr.f32.mxu0 0.0
        %1067 = vmatmul.mubr.f32.gmra.mxu0 %v1000
        %v1068 = vpop.f32.mrf.mxu0
        %v1069 = vadd.f32 0.0, %v1068
        %v1070 = vpop.f32.mrf.mxu0
        %1071 = vdwg.mxu0
        %v1072 = vsel %vm664, %v1069, -inf
        %1073 = vmax.xlane.f32.xlu0 %v1072
        %v1074 = vpop.xlane.xlu0 %1073
        %v1075 = vsub.f32 %v1069, %v1074
        %v1076 = vmul.f32 %v1075, 1.442695
        %v1077 = vpow.pop %v1076
        %v1078 = vsel %vm664, %v1077, 0.0
        %1079 = vadd.xlane.f32.xlu0 %v1078
        %v1080 = vpop.xlane.xlu0 %1079
        %v1081 = vrcp.pop %v1080
        %s1082 = scalar_lea.vmem [#allocation4], 16
        %v1083 = vld [vmem:[%s1082] sm:$0xff]
        %v1085 = vsel %vm664, %v1077, 0
        %1087 = vmatprep.subr.mxu0 0.0
        %1088 = vmatpush1.msra.mxu0 0.0
        %1089 = vmatprep.subr.mxu0 0.0
        %1090 = vmatpush1.msra.mxu0 0.0
        %1091 = vmatprep.subr.mxu0 0.0
        %1092 = vmatpush1.msra.mxu0 0.0
        %1093 = vmatprep.subr.mxu0 0.0
        %1094 = vmatpush1.msra.mxu0 0.0
        %1095 = vmatprep.subr.mxu0 0.0
        %1096 = vmatpush1.msra.mxu0 0.0
        %1097 = vmatprep.subr.mxu0 0.0
        %1098 = vmatpush1.msra.mxu0 0.0
        %1099 = vmatprep.subr.mxu0 0.0
        %1100 = vmatpush1.msra.mxu0 0.0
        %1101 = vmatprep.subr.mxu0 0.0
        %1102 = vmatpush1.msra.mxu0 0.0
        %1103 = vmatprep.subr.mxu0 0.0
        %1104 = vmatpush1.msra.mxu0 0.0
        %1105 = vmatprep.subr.mxu0 0.0
        %1106 = vmatpush1.msra.mxu0 0.0
        %1107 = vmatprep.subr.mxu0 0.0
        %1108 = vmatpush1.msra.mxu0 0.0
        %1109 = vmatprep.subr.mxu0 0.0
        %1110 = vmatpush1.msra.mxu0 0.0
        %1111 = vmatprep.subr.mxu0 0.0
        %1112 = vmatpush1.msra.mxu0 0.0
        %1113 = vmatprep.subr.mxu0 0.0
        %1114 = vmatpush1.msra.mxu0 0.0
        %1115 = vmatprep.subr.mxu0 0.0
        %1116 = vmatpush1.msra.mxu0 0.0
        %1117 = vmatprep.subr.mxu0 0.0
        %1118 = vmatpush1.msra.mxu0 %v1083
        %1119 = vmatprep.subr.mxu0 0.0
        %1120 = vmatpush2.msra.mxu0 0.0
        %1121 = vmatprep.subr.mxu0 0.0
        %1122 = vmatpush2.msra.mxu0 0.0
        %1123 = vmatprep.subr.mxu0 0.0
        %1124 = vmatpush2.msra.mxu0 0.0
        %1125 = vmatprep.subr.mxu0 0.0
        %1126 = vmatpush2.msra.mxu0 0.0
        %1127 = vmatprep.subr.mxu0 0.0
        %1128 = vmatpush2.msra.mxu0 0.0
        %1129 = vmatprep.subr.mxu0 0.0
        %1130 = vmatpush2.msra.mxu0 0.0
        %1131 = vmatprep.subr.mxu0 0.0
        %1132 = vmatpush2.msra.mxu0 0.0
        %1133 = vmatprep.subr.mxu0 0.0
        %1134 = vmatpush2.msra.mxu0 0.0
        %1135 = vmatprep.subr.mxu0 0.0
        %1136 = vmatpush2.msra.mxu0 0.0
        %1137 = vmatprep.subr.mxu0 0.0
        %1138 = vmatpush2.msra.mxu0 0.0
        %1139 = vmatprep.subr.mxu0 0.0
        %1140 = vmatpush2.msra.mxu0 0.0
        %1141 = vmatprep.subr.mxu0 0.0
        %1142 = vmatpush2.msra.mxu0 0.0
        %1143 = vmatprep.subr.mxu0 0.0
        %1144 = vmatpush2.msra.mxu0 0.0
        %1145 = vmatprep.subr.mxu0 0.0
        %1146 = vmatpush2.msra.mxu0 0.0
        %1147 = vmatprep.subr.mxu0 0.0
        %1148 = vmatpush2.msra.mxu0 0.0
        %1149 = vmatprep.subr.mxu0 0.0
        %1150 = vmatpush2.msra.mxu0 0.0
        %1151 = vmatprep.mubr.f32.mxu0 0.0
        %1152 = vmatmul.mubr.f32.gmra.mxu0 %v1085
        %v1153 = vpop.f32.mrf.mxu0
        %v1154 = vadd.f32 0.0, %v1153
        %v1155 = vpop.f32.mrf.mxu0
        %1156 = vdwg.mxu0
        %v1157 = vmul.f32 %v1154, %v1081
        %1159 = vrot.lane.b32.xlu0 %v1157, 16
        %v1160 = vpop.permute.xlu0 %1159
        %vm1162 = vcmask 195712
        %1163 = vst.msk [vmem:[#allocation5] sm:$0xff] %vm1162, %v1160
        %s1164 = sadd.s32 %s660, 24
        %s1165 = scalar_lea.vmem [#allocation2], %s1164
        %v1166 = vld [vmem:[%s1165] sm:$0xff]
        %s1167 = scalar_lea.vmem [#allocation3], 24
        %v1168 = vld [vmem:[%s1167] sm:$0xff]
        %v1170 = vsel %vm664, %v1166, 0
        %1172 = vmatprep.subr.mxu0 0.0
        %1173 = vmatpush1.msra.mxu0 0.0
        %1174 = vmatprep.subr.mxu0 0.0
        %1175 = vmatpush1.msra.mxu0 0.0
        %1176 = vmatprep.subr.mxu0 0.0
        %1177 = vmatpush1.msra.mxu0 0.0
        %1178 = vmatprep.subr.mxu0 0.0
        %1179 = vmatpush1.msra.mxu0 0.0
        %1180 = vmatprep.subr.mxu0 0.0
        %1181 = vmatpush1.msra.mxu0 0.0
        %1182 = vmatprep.subr.mxu0 0.0
        %1183 = vmatpush1.msra.mxu0 0.0
        %1184 = vmatprep.subr.mxu0 0.0
        %1185 = vmatpush1.msra.mxu0 0.0
        %1186 = vmatprep.subr.mxu0 0.0
        %1187 = vmatpush1.msra.mxu0 0.0
        %1188 = vmatprep.subr.mxu0 0.0
        %1189 = vmatpush1.msra.mxu0 0.0
        %1190 = vmatprep.subr.mxu0 0.0
        %1191 = vmatpush1.msra.mxu0 0.0
        %1192 = vmatprep.subr.mxu0 0.0
        %1193 = vmatpush1.msra.mxu0 0.0
        %1194 = vmatprep.subr.mxu0 0.0
        %1195 = vmatpush1.msra.mxu0 0.0
        %1196 = vmatprep.subr.mxu0 0.0
        %1197 = vmatpush1.msra.mxu0 0.0
        %1198 = vmatprep.subr.mxu0 0.0
        %1199 = vmatpush1.msra.mxu0 0.0
        %1200 = vmatprep.subr.mxu0 0.0
        %1201 = vmatpush1.msra.mxu0 0.0
        %1202 = vmatprep.subr.mxu0 0.0
        %1203 = vmatpush1.msra.mxu0 %v1168
        %1204 = vmatprep.subr.mxu0 0.0
        %1205 = vmatpush2.msra.mxu0 0.0
        %1206 = vmatprep.subr.mxu0 0.0
        %1207 = vmatpush2.msra.mxu0 0.0
        %1208 = vmatprep.subr.mxu0 0.0
        %1209 = vmatpush2.msra.mxu0 0.0
        %1210 = vmatprep.subr.mxu0 0.0
        %1211 = vmatpush2.msra.mxu0 0.0
        %1212 = vmatprep.subr.mxu0 0.0
        %1213 = vmatpush2.msra.mxu0 0.0
        %1214 = vmatprep.subr.mxu0 0.0
        %1215 = vmatpush2.msra.mxu0 0.0
        %1216 = vmatprep.subr.mxu0 0.0
        %1217 = vmatpush2.msra.mxu0 0.0
        %1218 = vmatprep.subr.mxu0 0.0
        %1219 = vmatpush2.msra.mxu0 0.0
        %1220 = vmatprep.subr.mxu0 0.0
        %1221 = vmatpush2.msra.mxu0 0.0
        %1222 = vmatprep.subr.mxu0 0.0
        %1223 = vmatpush2.msra.mxu0 0.0
        %1224 = vmatprep.subr.mxu0 0.0
        %1225 = vmatpush2.msra.mxu0 0.0
        %1226 = vmatprep.subr.mxu0 0.0
        %1227 = vmatpush2.msra.mxu0 0.0
        %1228 = vmatprep.subr.mxu0 0.0
        %1229 = vmatpush2.msra.mxu0 0.0
        %1230 = vmatprep.subr.mxu0 0.0
        %1231 = vmatpush2.msra.mxu0 0.0
        %1232 = vmatprep.subr.mxu0 0.0
        %1233 = vmatpush2.msra.mxu0 0.0
        %1234 = vmatprep.subr.mxu0 0.0
        %1235 = vmatpush2.msra.mxu0 0.0
        %1236 = vmatprep.mubr.f32.mxu0 0.0
        %1237 = vmatmul.mubr.f32.gmra.mxu0 %v1170
        %v1238 = vpop.f32.mrf.mxu0
        %v1239 = vadd.f32 0.0, %v1238
        %v1240 = vpop.f32.mrf.mxu0
        %1241 = vdwg.mxu0
        %v1242 = vsel %vm664, %v1239, -inf
        %1243 = vmax.xlane.f32.xlu0 %v1242
        %v1244 = vpop.xlane.xlu0 %1243
        %v1245 = vsub.f32 %v1239, %v1244
        %v1246 = vmul.f32 %v1245, 1.442695
        %v1247 = vpow.pop %v1246
        %v1248 = vsel %vm664, %v1247, 0.0
        %1249 = vadd.xlane.f32.xlu0 %v1248
        %v1250 = vpop.xlane.xlu0 %1249
        %v1251 = vrcp.pop %v1250
        %s1252 = scalar_lea.vmem [#allocation4], 24
        %v1253 = vld [vmem:[%s1252] sm:$0xff]
        %v1255 = vsel %vm664, %v1247, 0
        %1257 = vmatprep.subr.mxu0 0.0
        %1258 = vmatpush1.msra.mxu0 0.0
        %1259 = vmatprep.subr.mxu0 0.0
        %1260 = vmatpush1.msra.mxu0 0.0
        %1261 = vmatprep.subr.mxu0 0.0
        %1262 = vmatpush1.msra.mxu0 0.0
        %1263 = vmatprep.subr.mxu0 0.0
        %1264 = vmatpush1.msra.mxu0 0.0
        %1265 = vmatprep.subr.mxu0 0.0
        %1266 = vmatpush1.msra.mxu0 0.0
        %1267 = vmatprep.subr.mxu0 0.0
        %1268 = vmatpush1.msra.mxu0 0.0
        %1269 = vmatprep.subr.mxu0 0.0
        %1270 = vmatpush1.msra.mxu0 0.0
        %1271 = vmatprep.subr.mxu0 0.0
        %1272 = vmatpush1.msra.mxu0 0.0
        %1273 = vmatprep.subr.mxu0 0.0
        %1274 = vmatpush1.msra.mxu0 0.0
        %1275 = vmatprep.subr.mxu0 0.0
        %1276 = vmatpush1.msra.mxu0 0.0
        %1277 = vmatprep.subr.mxu0 0.0
        %1278 = vmatpush1.msra.mxu0 0.0
        %1279 = vmatprep.subr.mxu0 0.0
        %1280 = vmatpush1.msra.mxu0 0.0
        %1281 = vmatprep.subr.mxu0 0.0
        %1282 = vmatpush1.msra.mxu0 0.0
        %1283 = vmatprep.subr.mxu0 0.0
        %1284 = vmatpush1.msra.mxu0 0.0
        %1285 = vmatprep.subr.mxu0 0.0
        %1286 = vmatpush1.msra.mxu0 0.0
        %1287 = vmatprep.subr.mxu0 0.0
        %1288 = vmatpush1.msra.mxu0 %v1253
        %1289 = vmatprep.subr.mxu0 0.0
        %1290 = vmatpush2.msra.mxu0 0.0
        %1291 = vmatprep.subr.mxu0 0.0
        %1292 = vmatpush2.msra.mxu0 0.0
        %1293 = vmatprep.subr.mxu0 0.0
        %1294 = vmatpush2.msra.mxu0 0.0
        %1295 = vmatprep.subr.mxu0 0.0
        %1296 = vmatpush2.msra.mxu0 0.0
        %1297 = vmatprep.subr.mxu0 0.0
        %1298 = vmatpush2.msra.mxu0 0.0
        %1299 = vmatprep.subr.mxu0 0.0
        %1300 = vmatpush2.msra.mxu0 0.0
        %1301 = vmatprep.subr.mxu0 0.0
        %1302 = vmatpush2.msra.mxu0 0.0
        %1303 = vmatprep.subr.mxu0 0.0
        %1304 = vmatpush2.msra.mxu0 0.0
        %1305 = vmatprep.subr.mxu0 0.0
        %1306 = vmatpush2.msra.mxu0 0.0
        %1307 = vmatprep.subr.mxu0 0.0
        %1308 = vmatpush2.msra.mxu0 0.0
        %1309 = vmatprep.subr.mxu0 0.0
        %1310 = vmatpush2.msra.mxu0 0.0
        %1311 = vmatprep.subr.mxu0 0.0
        %1312 = vmatpush2.msra.mxu0 0.0
        %1313 = vmatprep.subr.mxu0 0.0
        %1314 = vmatpush2.msra.mxu0 0.0
        %1315 = vmatprep.subr.mxu0 0.0
        %1316 = vmatpush2.msra.mxu0 0.0
        %1317 = vmatprep.subr.mxu0 0.0
        %1318 = vmatpush2.msra.mxu0 0.0
        %1319 = vmatprep.subr.mxu0 0.0
        %1320 = vmatpush2.msra.mxu0 0.0
        %1321 = vmatprep.mubr.f32.mxu0 0.0
        %1322 = vmatmul.mubr.f32.gmra.mxu0 %v1255
        %v1323 = vpop.f32.mrf.mxu0
        %v1324 = vadd.f32 0.0, %v1323
        %v1325 = vpop.f32.mrf.mxu0
        %1326 = vdwg.mxu0
        %v1327 = vmul.f32 %v1324, %v1251
        %1329 = vrot.lane.b32.xlu0 %v1327, 24
        %v1330 = vpop.permute.xlu0 %1329
        %vm1332 = vcmask 261312
        %1333 = vst.msk [vmem:[#allocation5] sm:$0xff] %vm1332, %v1330
        %v1334 = vld [vmem:[#allocation5] sm:$0xff]
        %v1335 = vld [vmem:[#allocation11] sm:$0xff]
        %v1336 = vld [vmem:[#allocation11 + $0x8] sm:$0xff]
        %v1337 = vld [vmem:[#allocation11 + $0x10] sm:$0xff]
        %v1338 = vld [vmem:[#allocation11 + $0x18] sm:$0xff]
        %vm1339 = vcmask 261120
        %v1341 = vsel %vm1339, %v1334, 0
        %1343 = vmatprep.subr.mxu0 0.0
        %1344 = vmatpush1.msra.mxu0 0.0
        %1345 = vmatprep.subr.mxu0 0.0
        %1346 = vmatpush1.msra.mxu0 0.0
        %1347 = vmatprep.subr.mxu0 0.0
        %1348 = vmatpush1.msra.mxu0 0.0
        %1349 = vmatprep.subr.mxu0 0.0
        %1350 = vmatpush1.msra.mxu0 0.0
        %1351 = vmatprep.subr.mxu0 0.0
        %1352 = vmatpush1.msra.mxu0 0.0
        %1353 = vmatprep.subr.mxu0 0.0
        %1354 = vmatpush1.msra.mxu0 0.0
        %1355 = vmatprep.subr.mxu0 0.0
        %1356 = vmatpush1.msra.mxu0 0.0
        %1357 = vmatprep.subr.mxu0 0.0
        %1358 = vmatpush1.msra.mxu0 0.0
        %1359 = vmatprep.subr.mxu0 0.0
        %1360 = vmatpush1.msra.mxu0 0.0
        %1361 = vmatprep.subr.mxu0 0.0
        %1362 = vmatpush1.msra.mxu0 0.0
        %1363 = vmatprep.subr.mxu0 0.0
        %1364 = vmatpush1.msra.mxu0 0.0
        %1365 = vmatprep.subr.mxu0 0.0
        %1366 = vmatpush1.msra.mxu0 0.0
        %1367 = vmatprep.subr.mxu0 0.0
        %1368 = vmatpush1.msra.mxu0 %v1338
        %1369 = vmatprep.subr.mxu0 0.0
        %1370 = vmatpush1.msra.mxu0 %v1337
        %1371 = vmatprep.subr.mxu0 0.0
        %1372 = vmatpush1.msra.mxu0 %v1336
        %1373 = vmatprep.subr.mxu0 0.0
        %1374 = vmatpush1.msra.mxu0 %v1335
        %1375 = vmatprep.subr.mxu0 0.0
        %1376 = vmatpush2.msra.mxu0 0.0
        %1377 = vmatprep.subr.mxu0 0.0
        %1378 = vmatpush2.msra.mxu0 0.0
        %1379 = vmatprep.subr.mxu0 0.0
        %1380 = vmatpush2.msra.mxu0 0.0
        %1381 = vmatprep.subr.mxu0 0.0
        %1382 = vmatpush2.msra.mxu0 0.0
        %1383 = vmatprep.subr.mxu0 0.0
        %1384 = vmatpush2.msra.mxu0 0.0
        %1385 = vmatprep.subr.mxu0 0.0
        %1386 = vmatpush2.msra.mxu0 0.0
        %1387 = vmatprep.subr.mxu0 0.0
        %1388 = vmatpush2.msra.mxu0 0.0
        %1389 = vmatprep.subr.mxu0 0.0
        %1390 = vmatpush2.msra.mxu0 0.0
        %1391 = vmatprep.subr.mxu0 0.0
        %1392 = vmatpush2.msra.mxu0 0.0
        %1393 = vmatprep.subr.mxu0 0.0
        %1394 = vmatpush2.msra.mxu0 0.0
        %1395 = vmatprep.subr.mxu0 0.0
        %1396 = vmatpush2.msra.mxu0 0.0
        %1397 = vmatprep.subr.mxu0 0.0
        %1398 = vmatpush2.msra.mxu0 0.0
        %1399 = vmatprep.subr.mxu0 0.0
        %1400 = vmatpush2.msra.mxu0 0.0
        %1401 = vmatprep.subr.mxu0 0.0
        %1402 = vmatpush2.msra.mxu0 0.0
        %1403 = vmatprep.subr.mxu0 0.0
        %1404 = vmatpush2.msra.mxu0 0.0
        %1405 = vmatprep.subr.mxu0 0.0
        %1406 = vmatpush2.msra.mxu0 0.0
        %1407 = vmatprep.mubr.f32.mxu0 0.0
        %1408 = vmatmul.mubr.f32.gmra.mxu0 %v1341
        %v1409 = vpop.f32.mrf.mxu0
        %v1410 = vadd.f32 0.0, %v1409
        %v1411 = vpop.f32.mrf.mxu0
        %1412 = vdwg.mxu0
        %1413 = vst.msk [vmem:[%s228] sm:$0xff] %vm1339, %v1410
        %s1414 = sand.u32 %s111, 1
        %s1415 = scalar_lea.sflag [#allocation8], %s1414
        %s1416 = sand.u32 %s111, 1
        %s1417 = smul.addr %s1416, 8
        %s1418 = scalar_lea.vmem [#allocation12], %s1417
        // Predicated region
        $region49: #{tpu_custom_call.1} parent=31 // pred_check
          %p1419 = pneg %p121
        $region50: #{tpu_custom_call.1} parent=31 // pred_check_branch
          %1421 = sbr.rel (%p1419) target = $region52
        $region51: #{tpu_custom_call.1} parent=31 // pred_region
          %s1423 = ssub.s32 128, 128
          %1424 = vsyncadd %s1415, %s1423
          %s1425 = sadd.s32 %s26, %s25
          %s1426 = smul.addr %s1425, 128
          %s1427 = scalar_lea.hbm %s3, %s1426
          %s1429 = sshll.u32 %s1418, 4
          %s1430 = int_to_ptr.vmem [resolvable:$true] %s1429
          %1432 = dma.vmem_to_hbm [thread:$0]  %s1430, 128, %s1427, %s1415
        $region52: #{tpu_custom_call.1} parent=31 // pred_fallthru
          _
      $region32: #{tpu_custom_call.1} parent=5 // pred_fallthru
        _
      %p1433 = scmp.le.s32.totalorder 2, %s16
      // Predicated region
      $region53: #{tpu_custom_call.1} parent=5 // pred_check
        %p1434 = pneg %p1433
      $region54: #{tpu_custom_call.1} parent=5 // pred_check_branch
        %1436 = sbr.rel (%p1434) target = $region56
      $region55: #{tpu_custom_call.1} parent=5 // pred_region
        %s1437 = ssub.s32 %s16, 2
        // Predicated region
        $region57: #{tpu_custom_call.1} parent=55 // pred_check
          %p1438 = pneg %p127
        $region58: #{tpu_custom_call.1} parent=55 // pred_check_branch
          %1440 = sbr.rel (%p1438) target = $region60
        $region59: #{tpu_custom_call.1} parent=55 // pred_region
          %s1441 = sand.u32 %s112, 1
          %s1442 = scalar_lea.sflag [#allocation8], %s1441
          %s1443 = sand.u32 %s112, 1
          %s1444 = smul.addr %s1443, 8
          %s1445 = scalar_lea.vmem [#allocation12], %s1444
          %1446 = dma.done %s1442, 128
        $region60: #{tpu_custom_call.1} parent=55 // pred_fallthru
          _
      $region56: #{tpu_custom_call.1} parent=5 // pred_fallthru
        _
    $region6: #{tpu_custom_call.1} parent=1 // loop_footer
      %s20 = sadd.s32 1, %s16
    $region7: #{tpu_custom_call.1} parent=1 // loop_footer_branch
      %15 = sbr.rel target = $region3
    $region8: #{tpu_custom_call.1} parent=1 // loop_exit
      _
    %1447 = vsyncpa [#allocation7], 1
    %s1448 = scalar_lea.sflag [#allocation7], 1
    %1449 = vsyncpa %s1448, 1
    %1450 = vsyncpa [#allocation10], 1
    %1451 = vsyncpa [#allocation8], 1
    %s1452 = scalar_lea.sflag [#allocation8], 1
    %1453 = vsyncpa %s1452, 1

</llo_original>
